<compile_context>
chip_gen: v5e
topology: v5e:2x2
jax: 0.10.0
libtpu: 0.0.40
codegen_flags: <defaults>
</compile_context>

<pallas_src>
import functools

import numpy as np
import jax
import jax.numpy as jnp
from jax.experimental import pallas as pl
from jax.experimental.pallas import tpu as pltpu

EPS = 1e-5  # PyTorch BatchNorm2d default


# ----------------------------------------------------------------------------
# host-side static helpers
# ----------------------------------------------------------------------------
@functools.lru_cache(maxsize=1)
def _vmem_limit_bytes():
    """Per-generation scoped-VMEM limit (v5e/v6e: up to ~96 MiB, v7x: ~48 MiB)."""
    cap = 64 << 20
    try:
        info = pltpu.get_tpu_info()
        cap = int(getattr(info, "vmem_capacity_bytes", cap))
    except Exception:
        pass
    return max(32 << 20, min((cap * 3) // 4, 100 << 20))


def _pick_cout_tile(cout):
    """Lane-dense output tile. Prefer 256 (MXU width on v6e/v7x, fits v7x VMEM)."""
    for t in (256, 128):
        if cout % t == 0:
            return t
    return cout


def _pick_batch_tile(n, ho, wo, per_sample_bytes, m_target=256):
    """Smallest divisor of n giving matmul M = nt*Ho*Wo >= m_target within budget."""
    budget = _vmem_limit_bytes() // 2
    best = 1
    for cand in range(1, n + 1):
        if n % cand:
            continue
        if cand > 1 and cand * per_sample_bytes > budget:
            break
        best = cand
        if cand * ho * wo >= m_target:
            break
    return best


def _tap_table(stride):
    """For each 3x3 tap: (phase, row_off, col_off) into the per-phase padded
    scratch so a strided conv becomes 9 unit-stride, lane-aligned slices."""
    taps = []
    for kh in range(3):
        ar, pr = divmod(kh - 1, stride)
        for kw in range(3):
            ac, pc = divmod(kw - 1, stride)
            taps.append((pr * stride + pc, ar + 1, ac + 1))
    return taps


def _to_phase_layout(x, s):
    """NHWC -> (N, s*s, H/s, W/s, C), phase index = row_phase*s + col_phase."""
    n, h, w, c = x.shape
    if s == 1:
        return x.reshape(n, 1, h, w, c)
    x = x.reshape(n, h // s, s, w // s, s, c)
    x = jnp.transpose(x, (0, 2, 4, 1, 3, 5))
    return x.reshape(n, s * s, h // s, w // s, c)


def _fold_bn(bn):
    gamma, beta, mean, var = bn
    scale = gamma / jnp.sqrt(var + EPS)
    bias = beta - mean * scale
    return scale, bias


def prepare_block_params(params):
    """One-time (init-time) weight folding: OIHW->HWIO, fold eval-BN scale,
    cast to bf16.  Done once per block, never in the per-step hot path."""
    s1, b1 = _fold_bn(params["bn1"])
    s2, b2 = _fold_bn(params["bn2"])
    w1 = jnp.transpose(params["conv1_w"], (2, 3, 1, 0))  # (3,3,Cin,Cout)
    w2 = jnp.transpose(params["conv2_w"], (2, 3, 1, 0))
    prep = {
        "w1": (w1 * s1).astype(jnp.bfloat16),
        "b1": b1.reshape(1, -1).astype(jnp.float32),
        "w2": (w2 * s2).astype(jnp.bfloat16),
        "b2": b2.reshape(1, -1).astype(jnp.float32),
    }
    if "sc_w" in params:
        wsc = jnp.transpose(params["sc_w"][:, :, 0, 0], (1, 0))  # (Cin, Cout)
        ssc, bsc = _fold_bn(params["bn_sc"])
        prep["wsc"] = (wsc * ssc).astype(jnp.bfloat16)
        prep["bsc"] = bsc.reshape(1, -1).astype(jnp.float32)
    return prep


# ----------------------------------------------------------------------------
# kernel-side helpers
# ----------------------------------------------------------------------------
def _fill_halo(pad_ref, x_ref):
    """Clear only the 1-pixel border (interior is fully overwritten each step),
    then drop the input block at offset (1, 1).  Megacore-safe (done each step)."""
    nt, P, hp, wp, cin = x_ref.shape
    srows, scols = pad_ref.shape[2], pad_ref.shape[3]
    zdt = pad_ref.dtype
    pad_ref[:, :, pl.ds(0, 1), :, :] = jnp.zeros((nt, P, 1, scols, cin), zdt)
    if srows > hp + 1:
        pad_ref[:, :, pl.ds(hp + 1, srows - hp - 1), :, :] = jnp.zeros(
            (nt, P, srows - hp - 1, scols, cin), zdt)
    pad_ref[:, :, :, pl.ds(0, 1), :] = jnp.zeros((nt, P, srows, 1, cin), zdt)
    if scols > wp + 1:
        pad_ref[:, :, :, pl.ds(wp + 1, scols - wp - 1), :] = jnp.zeros(
            (nt, P, srows, scols - wp - 1, cin), zdt)
    pad_ref[:, :, pl.ds(1, hp), pl.ds(1, wp), :] = x_ref[...]


def _conv3x3_accum(x_ref, w_ref, pad_ref, taps, ho, wo):
    """3x3 conv as 9 accumulate-dots (K = Cin) out of the padded VMEM scratch.
    Returns the (Nt*Ho*Wo, Ct) f32 accumulator."""
    nt = x_ref.shape[0]
    cin = x_ref.shape[-1]
    _fill_halo(pad_ref, x_ref)
    w_all = w_ref[...]                       # (3, 3, Cin, Ct) bf16
    m = nt * ho * wo
    acc = None
    for idx, (p, r0, c0) in enumerate(taps):
        patch = pad_ref[:, pl.ds(p, 1), pl.ds(r0, ho), pl.ds(c0, wo), :]
        d = jnp.dot(patch.reshape(m, cin), w_all[idx // 3, idx % 3],
                    preferred_element_type=jnp.float32)
        acc = d if acc is None else acc + d
    return acc


# ----------------------------------------------------------------------------
# kernels
# ----------------------------------------------------------------------------
def _conv1_kernel(x_ref, w_ref, b_ref, o_ref, pad_ref, *, taps, ho, wo, relu):
    """3x3 conv (stride folded via the phase axis) + BN(bias) (+ ReLU)."""
    nt, ct = o_ref.shape[0], o_ref.shape[-1]
    acc = _conv3x3_accum(x_ref, w_ref, pad_ref, taps, ho, wo) + b_ref[...]
    if relu:
        acc = jnp.maximum(acc, 0.0)
    o_ref[...] = acc.reshape(nt, ho, wo, ct).astype(o_ref.dtype)


def _conv2_kernel(y_ref, w_ref, b_ref, *rest, taps, ho, wo, project):
    """3x3 conv + BN(bias) + (1x1-conv shortcut | identity) + add + ReLU."""
    if project:
        xs_ref, wsc_ref, bsc_ref, o_ref, pad_ref = rest
    else:
        r_ref, o_ref, pad_ref = rest
    nt, ct = o_ref.shape[0], o_ref.shape[-1]
    m = nt * ho * wo

    acc = _conv3x3_accum(y_ref, w_ref, pad_ref, taps, ho, wo) + b_ref[...]
    if project:
        cin_sc = xs_ref.shape[-1]
        xs = xs_ref[...].reshape(m, cin_sc)            # phase (0,0) = strided x
        acc = acc + jnp.dot(xs, wsc_ref[...],
                            preferred_element_type=jnp.float32) + bsc_ref[...]
    else:
        acc = acc + r_ref[...].reshape(m, ct).astype(jnp.float32)

    out = jnp.maximum(acc, 0.0)
    o_ref[...] = out.reshape(nt, ho, wo, ct).astype(o_ref.dtype)


# ----------------------------------------------------------------------------
# pallas_call wrappers (NHWC / phase-major activations)
# ----------------------------------------------------------------------------
def conv3x3_bn_act(xin, w_folded, bias, *, stride, relu=True,
                   out_dtype=jnp.bfloat16):
    """xin: (N, P, H/s, W/s, Cin) phase-major bf16. Returns (N, Ho, Wo, Cout)."""
    n, P, hp, wp, cin = xin.shape
    cout = w_folded.shape[-1]
    ho, wo = hp, wp

    taps = _tap_table(stride)
    srows = max(max(t[1] for t in taps) + ho, hp + 1)
    scols = max(max(t[2] for t in taps) + wo, wp + 1)
    ct = _pick_cout_tile(cout)

    per_sample = (4 * P * hp * wp * cin          # input bf16, double-buffered
                  + 2 * P * srows * scols * cin  # padded scratch bf16
                  + 4 * ho * wo * ct             # output bf16, double-buffered
                  + 4 * ho * wo * ct)            # f32 accumulator
    nt = _pick_batch_tile(n, ho, wo, per_sample)
    grid = (cout // ct, n // nt)                 # weights on outer axis -> resident

    kernel = functools.partial(_conv1_kernel, taps=taps, ho=ho, wo=wo, relu=relu)
    return pl.pallas_call(
        kernel,
        out_shape=jax.ShapeDtypeStruct((n, ho, wo, cout), out_dtype),
        grid=grid,
        in_specs=[
            pl.BlockSpec((nt, P, hp, wp, cin), lambda j, i: (i, 0, 0, 0, 0)),
            pl.BlockSpec((3, 3, cin, ct), lambda j, i: (0, 0, 0, j)),
            pl.BlockSpec((1, ct), lambda j, i: (0, j)),
        ],
        out_specs=pl.BlockSpec((nt, ho, wo, ct), lambda j, i: (i, 0, 0, j)),
        scratch_shapes=[pltpu.VMEM((nt, P, srows, scols, cin), jnp.bfloat16)],
        compiler_params=pltpu.CompilerParams(
            dimension_semantics=("parallel", "parallel"),
            vmem_limit_bytes=_vmem_limit_bytes()),
    )(xin, w_folded, bias)


def conv3x3_bn_add_relu(y, w_folded, bias, shortcut, *, out_dtype=jnp.bfloat16):
    """conv2 (3x3, stride 1) + BN2 + shortcut add + ReLU, fully fused.

    shortcut: ("identity", xin_5d) or ("project", xin_5d, wsc_(Cin,Cout), bsc)."""
    n, ho, wo, cmid = y.shape
    cout = w_folded.shape[-1]
    y5 = y.reshape(n, 1, ho, wo, cmid)           # free reshape, phase axis = 1

    taps = _tap_table(1)
    srows, scols = ho + 2, wo + 2
    ct = _pick_cout_tile(cout)

    project = shortcut[0] == "project"
    per_sample = (4 * ho * wo * cmid + 2 * srows * scols * cmid
                  + 4 * ho * wo * ct + 4 * ho * wo * ct
                  + 4 * ho * wo * (shortcut[1].shape[-1] if project else ct))
    nt = _pick_batch_tile(n, ho, wo, per_sample)
    grid = (cout // ct, n // nt)

    if project:
        _, xin, wsc, bsc = shortcut
        cin_sc = xin.shape[-1]
        extra_args = [xin, wsc, bsc]
        extra_specs = [
            # phase-axis block of size 1 at index 0 == x[:, ::s, ::s, :]
            pl.BlockSpec((nt, 1, ho, wo, cin_sc), lambda j, i: (i, 0, 0, 0, 0)),
            pl.BlockSpec((cin_sc, ct), lambda j, i: (0, j)),
            pl.BlockSpec((1, ct), lambda j, i: (0, j)),
        ]
    else:
        _, xin = shortcut                        # (N, 1, H, W, Cout)
        extra_args = [xin]
        extra_specs = [
            pl.BlockSpec((nt, 1, ho, wo, ct), lambda j, i: (i, 0, 0, 0, j)),
        ]

    kernel = functools.partial(_conv2_kernel, taps=taps, ho=ho, wo=wo,
                               project=project)
    return pl.pallas_call(
        kernel,
        out_shape=jax.ShapeDtypeStruct((n, ho, wo, cout), out_dtype),
        grid=grid,
        in_specs=[
            pl.BlockSpec((nt, 1, ho, wo, cmid), lambda j, i: (i, 0, 0, 0, 0)),
            pl.BlockSpec((3, 3, cmid, ct), lambda j, i: (0, 0, 0, j)),
            pl.BlockSpec((1, ct), lambda j, i: (0, j)),
        ] + extra_specs,
        out_specs=pl.BlockSpec((nt, ho, wo, ct), lambda j, i: (i, 0, 0, j)),
        scratch_shapes=[pltpu.VMEM((nt, 1, srows, scols, cmid), jnp.bfloat16)],
        compiler_params=pltpu.CompilerParams(
            dimension_semantics=("parallel", "parallel"),
            vmem_limit_bytes=_vmem_limit_bytes()),
    )(y5, w_folded, bias, *extra_args)


# ----------------------------------------------------------------------------
# WideBasicBlock forward (NHWC in -> NHWC out, bf16 inter-block activations)
# ----------------------------------------------------------------------------
def wide_basic_block_forward(x_nhwc, prep, stride, out_dtype=jnp.bfloat16):
    """Equivalent of WideBasicBlock.forward (eval-mode BatchNorm)."""
    xin = _to_phase_layout(x_nhwc.astype(jnp.bfloat16), stride)
    out1 = conv3x3_bn_act(xin, prep["w1"], prep["b1"], stride=stride, relu=True)
    if "wsc" in prep:
        shortcut = ("project", xin, prep["wsc"], prep["bsc"])
    else:
        shortcut = ("identity", xin)             # stride==1 & Cin==Cout here
    return conv3x3_bn_add_relu(out1, prep["w2"], prep["b2"], shortcut,
                               out_dtype=out_dtype)


# ----------------------------------------------------------------------------
# Pure-JAX reference (for verification, NHWC)
# ----------------------------------------------------------------------------
def reference_forward_nhwc(x, params, stride):
    def conv(x_, w_oihw, s_, p_):
        w_ = jnp.transpose(w_oihw, (2, 3, 1, 0))
        return jax.lax.conv_general_dilated(
            x_, w_, (s_, s_), [(p_, p_), (p_, p_)],
            dimension_numbers=("NHWC", "HWIO", "NHWC"))

    def bn(x_, bnp):
        gamma, beta, mean, var = bnp
        sc = gamma / jnp.sqrt(var + EPS)
        return x_ * sc + (beta - mean * sc)

    out = jax.nn.relu(bn(conv(x, params["conv1_w"], stride, 1), params["bn1"]))
    out = bn(conv(out, params["conv2_w"], 1, 1), params["bn2"])
    if "sc_w" in params:
        sc = bn(conv(x, params["sc_w"], stride, 0), params["bn_sc"])
    else:
        sc = x
    return jax.nn.relu(out + sc)


# ----------------------------------------------------------------------------
# Main
# ----------------------------------------------------------------------------
def _bf16_exact(a):
    return a.astype(jnp.bfloat16).astype(jnp.float32)


def _make_params(key, cin, cout, stride):
    keys = jax.random.split(key, 8)

    def bn_params(k):
        k1, k2, k3, k4 = jax.random.split(k, 4)
        gamma = jax.random.uniform(k1, (cout,), jnp.float32, 0.5, 1.5)
        beta = jax.random.normal(k2, (cout,), jnp.float32) * 0.1
        mean = jax.random.normal(k3, (cout,), jnp.float32) * 0.1
        var = jax.random.uniform(k4, (cout,), jnp.float32, 0.5, 1.5)
        return (gamma, beta, mean, var)

    params = {
        "conv1_w": _bf16_exact(jax.random.normal(keys[0], (cout, cin, 3, 3),
                                                 jnp.float32) * 0.1),
        "bn1": bn_params(keys[1]),
        "conv2_w": _bf16_exact(jax.random.normal(keys[2], (cout, cout, 3, 3),
                                                 jnp.float32) * 0.1),
        "bn2": bn_params(keys[3]),
    }
    if stride != 1 or cin != cout:
        params["sc_w"] = _bf16_exact(
            jax.random.normal(keys[4], (cout, cin, 1, 1), jnp.float32) * 0.1)
        params["bn_sc"] = bn_params(keys[5])
    return params


if __name__ == "__main__":
    key = jax.random.PRNGKey(0)
    configs = [
        # (N, Cin, H, W, Cout, stride)
        (2, 4, 16, 16, 8, 2),   # projection shortcut, strided conv1
        (2, 8, 8, 8, 8, 1),     # identity shortcut
        (1, 4, 8, 8, 8, 1),     # projection shortcut, stride 1
    ]
    for n, cin, h, w, cout, stride in configs:
        key, kx, kp = jax.random.split(key, 3)
        x_nchw = _bf16_exact(jax.random.normal(kx, (n, cin, h, w), jnp.float32))
        params = _make_params(kp, cin, cout, stride)

        # one-time layout conversion at the model boundary (not per-block)
        x = jnp.transpose(x_nchw, (0, 2, 3, 1))          # NCHW -> NHWC
        prep = prepare_block_params(params)              # one-time weight folding

        y = jax.block_until_ready(wide_basic_block_forward(x, prep, stride))
        y_ref = jax.block_until_ready(reference_forward_nhwc(x, params, stride))

        assert y.shape == y_ref.shape == (n, h // stride, w // stride, cout)
        np.testing.assert_allclose(np.asarray(jnp.asarray(y, jnp.float32)),
                                   np.asarray(y_ref), rtol=2e-2, atol=2e-2)
    print("KERNEL_OK")
</pallas_src>

<mosaic_0001>
module attributes {stable_mosaic.version = 11 : i64} {
  func.func @_conv1_kernel(%arg0: i32, %arg1: i32, %arg2: memref<2x4x8x8x4xbf16, #tpu.memory_space<vmem>>, %arg3: memref<3x3x4x8xbf16, #tpu.memory_space<vmem>>, %arg4: memref<1x8xf32, #tpu.memory_space<vmem>>, %arg5: memref<2x8x8x8xbf16, #tpu.memory_space<vmem>>, %arg6: memref<2x4x9x9x4xbf16, #tpu.memory_space<vmem>>) attributes {dimension_semantics = [#tpu.dimension_semantics<parallel>, #tpu.dimension_semantics<parallel>], iteration_bounds = array<i64: 1, 1>, scalar_prefetch = 0 : i64, scratch_operands = 1 : i64, tpu.core_type = #tpu.core_type<tc>, window_params = [{transform_indices = @transform_0, window_bounds = array<i64: 2, 4, 8, 8, 4>}, {transform_indices = @transform_1, window_bounds = array<i64: 3, 3, 4, 8>}, {transform_indices = @transform_2, window_bounds = array<i64: 1, 8>}, {transform_indices = @transform_3, window_bounds = array<i64: 2, 8, 8, 8>}]} {
    %cst = arith.constant 0.000000e+00 : bf16
    %0 = vector.broadcast %cst : bf16 to vector<2x4x1x9x4xbf16>
    %c0 = arith.constant 0 : index
    %c0_0 = arith.constant 0 : index
    %c0_1 = arith.constant 0 : index
    %c0_2 = arith.constant 0 : index
    %c0_3 = arith.constant 0 : index
    %1 = vector.load %arg6[%c0, %c0_0, %c0_1, %c0_2, %c0_3] : memref<2x4x9x9x4xbf16, #tpu.memory_space<vmem>>, vector<2x4x1x9x4xbf16>
    tpu.vector_store %arg6[%c0, %c0_0, %c0_1, %c0_2, %c0_3], %0 {strides = array<i32>} : memref<2x4x9x9x4xbf16, #tpu.memory_space<vmem>>, vector<2x4x1x9x4xbf16>,
    %cst_4 = arith.constant 0.000000e+00 : bf16
    %2 = vector.broadcast %cst_4 : bf16 to vector<2x4x9x1x4xbf16>
    %c0_5 = arith.constant 0 : index
    %c0_6 = arith.constant 0 : index
    %c0_7 = arith.constant 0 : index
    %c0_8 = arith.constant 0 : index
    %c0_9 = arith.constant 0 : index
    %3 = vector.load %arg6[%c0_5, %c0_6, %c0_7, %c0_8, %c0_9] : memref<2x4x9x9x4xbf16, #tpu.memory_space<vmem>>, vector<2x4x9x1x4xbf16>
    tpu.vector_store %arg6[%c0_5, %c0_6, %c0_7, %c0_8, %c0_9], %2 {strides = array<i32>} : memref<2x4x9x9x4xbf16, #tpu.memory_space<vmem>>, vector<2x4x9x1x4xbf16>,
    %c0_10 = arith.constant 0 : index
    %c0_11 = arith.constant 0 : index
    %c0_12 = arith.constant 0 : index
    %c0_13 = arith.constant 0 : index
    %c0_14 = arith.constant 0 : index
    %4 = vector.load %arg2[%c0_10, %c0_11, %c0_12, %c0_13, %c0_14] : memref<2x4x8x8x4xbf16, #tpu.memory_space<vmem>>, vector<2x4x8x8x4xbf16>
    %c0_15 = arith.constant 0 : index
    %c0_16 = arith.constant 0 : index
    %c1 = arith.constant 1 : index
    %c1_17 = arith.constant 1 : index
    %c0_18 = arith.constant 0 : index
    %5 = vector.load %arg6[%c0_15, %c0_16, %c1, %c1_17, %c0_18] : memref<2x4x9x9x4xbf16, #tpu.memory_space<vmem>>, vector<2x4x8x8x4xbf16>
    tpu.vector_store %arg6[%c0_15, %c0_16, %c1, %c1_17, %c0_18], %4 {strides = array<i32>} : memref<2x4x9x9x4xbf16, #tpu.memory_space<vmem>>, vector<2x4x8x8x4xbf16>,
    %c0_19 = arith.constant 0 : index
    %c0_20 = arith.constant 0 : index
    %c0_21 = arith.constant 0 : index
    %c0_22 = arith.constant 0 : index
    %6 = vector.load %arg3[%c0_19, %c0_20, %c0_21, %c0_22] : memref<3x3x4x8xbf16, #tpu.memory_space<vmem>>, vector<3x3x4x8xbf16>
    %c0_23 = arith.constant 0 : index
    %c3 = arith.constant 3 : index
    %c0_24 = arith.constant 0 : index
    %c0_25 = arith.constant 0 : index
    %c0_26 = arith.constant 0 : index
    %7 = vector.load %arg6[%c0_23, %c3, %c0_24, %c0_25, %c0_26] : memref<2x4x9x9x4xbf16, #tpu.memory_space<vmem>>, vector<2x1x8x8x4xbf16>
    %8 = vector.shape_cast %7 : vector<2x1x8x8x4xbf16> to vector<128x4xbf16>
    %9 = vector.extract_strided_slice %6 {offsets = [0, 0, 0, 0], sizes = [1, 1, 4, 8], strides = [1, 1, 1, 1]} : vector<3x3x4x8xbf16> to vector<1x1x4x8xbf16>
    %10 = vector.shape_cast %9 : vector<1x1x4x8xbf16> to vector<4x8xbf16>
    %cst_27 = arith.constant dense<0.000000e+00> : vector<128x8xf32>
    %11 = tpu.matmul %8, %10, %cst_27 {dimension_numbers = #tpu.dot_dimension_numbers<[1], [0], [0], [1], [0, 0, 1, 1], [], []>} : vector<128x4xbf16>, vector<4x8xbf16>, vector<128x8xf32> -> vector<128x8xf32>
    %c0_28 = arith.constant 0 : index
    %c2 = arith.constant 2 : index
    %c0_29 = arith.constant 0 : index
    %c1_30 = arith.constant 1 : index
    %c0_31 = arith.constant 0 : index
    %12 = vector.load %arg6[%c0_28, %c2, %c0_29, %c1_30, %c0_31] : memref<2x4x9x9x4xbf16, #tpu.memory_space<vmem>>, vector<2x1x8x8x4xbf16>
    %13 = vector.shape_cast %12 : vector<2x1x8x8x4xbf16> to vector<128x4xbf16>
    %14 = vector.extract_strided_slice %6 {offsets = [0, 1, 0, 0], sizes = [1, 1, 4, 8], strides = [1, 1, 1, 1]} : vector<3x3x4x8xbf16> to vector<1x1x4x8xbf16>
    %15 = vector.shape_cast %14 : vector<1x1x4x8xbf16> to vector<4x8xbf16>
    %cst_32 = arith.constant dense<0.000000e+00> : vector<128x8xf32>
    %16 = tpu.matmul %13, %15, %cst_32 {dimension_numbers = #tpu.dot_dimension_numbers<[1], [0], [0], [1], [0, 0, 1, 1], [], []>} : vector<128x4xbf16>, vector<4x8xbf16>, vector<128x8xf32> -> vector<128x8xf32>
    %17 = arith.addf %11, %16 : vector<128x8xf32>
    %c0_33 = arith.constant 0 : index
    %c3_34 = arith.constant 3 : index
    %c0_35 = arith.constant 0 : index
    %c1_36 = arith.constant 1 : index
    %c0_37 = arith.constant 0 : index
    %18 = vector.load %arg6[%c0_33, %c3_34, %c0_35, %c1_36, %c0_37] : memref<2x4x9x9x4xbf16, #tpu.memory_space<vmem>>, vector<2x1x8x8x4xbf16>
    %19 = vector.shape_cast %18 : vector<2x1x8x8x4xbf16> to vector<128x4xbf16>
    %20 = vector.extract_strided_slice %6 {offsets = [0, 2, 0, 0], sizes = [1, 1, 4, 8], strides = [1, 1, 1, 1]} : vector<3x3x4x8xbf16> to vector<1x1x4x8xbf16>
    %21 = vector.shape_cast %20 : vector<1x1x4x8xbf16> to vector<4x8xbf16>
    %cst_38 = arith.constant dense<0.000000e+00> : vector<128x8xf32>
    %22 = tpu.matmul %19, %21, %cst_38 {dimension_numbers = #tpu.dot_dimension_numbers<[1], [0], [0], [1], [0, 0, 1, 1], [], []>} : vector<128x4xbf16>, vector<4x8xbf16>, vector<128x8xf32> -> vector<128x8xf32>
    %23 = arith.addf %17, %22 : vector<128x8xf32>
    %c0_39 = arith.constant 0 : index
    %c1_40 = arith.constant 1 : index
    %c1_41 = arith.constant 1 : index
    %c0_42 = arith.constant 0 : index
    %c0_43 = arith.constant 0 : index
    %24 = vector.load %arg6[%c0_39, %c1_40, %c1_41, %c0_42, %c0_43] : memref<2x4x9x9x4xbf16, #tpu.memory_space<vmem>>, vector<2x1x8x8x4xbf16>
    %25 = vector.shape_cast %24 : vector<2x1x8x8x4xbf16> to vector<128x4xbf16>
    %26 = vector.extract_strided_slice %6 {offsets = [1, 0, 0, 0], sizes = [1, 1, 4, 8], strides = [1, 1, 1, 1]} : vector<3x3x4x8xbf16> to vector<1x1x4x8xbf16>
    %27 = vector.shape_cast %26 : vector<1x1x4x8xbf16> to vector<4x8xbf16>
    %cst_44 = arith.constant dense<0.000000e+00> : vector<128x8xf32>
    %28 = tpu.matmul %25, %27, %cst_44 {dimension_numbers = #tpu.dot_dimension_numbers<[1], [0], [0], [1], [0, 0, 1, 1], [], []>} : vector<128x4xbf16>, vector<4x8xbf16>, vector<128x8xf32> -> vector<128x8xf32>
    %29 = arith.addf %23, %28 : vector<128x8xf32>
    %c0_45 = arith.constant 0 : index
    %c0_46 = arith.constant 0 : index
    %c1_47 = arith.constant 1 : index
    %c1_48 = arith.constant 1 : index
    %c0_49 = arith.constant 0 : index
    %30 = vector.load %arg6[%c0_45, %c0_46, %c1_47, %c1_48, %c0_49] : memref<2x4x9x9x4xbf16, #tpu.memory_space<vmem>>, vector<2x1x8x8x4xbf16>
    %31 = vector.shape_cast %30 : vector<2x1x8x8x4xbf16> to vector<128x4xbf16>
    %32 = vector.extract_strided_slice %6 {offsets = [1, 1, 0, 0], sizes = [1, 1, 4, 8], strides = [1, 1, 1, 1]} : vector<3x3x4x8xbf16> to vector<1x1x4x8xbf16>
    %33 = vector.shape_cast %32 : vector<1x1x4x8xbf16> to vector<4x8xbf16>
    %cst_50 = arith.constant dense<0.000000e+00> : vector<128x8xf32>
    %34 = tpu.matmul %31, %33, %cst_50 {dimension_numbers = #tpu.dot_dimension_numbers<[1], [0], [0], [1], [0, 0, 1, 1], [], []>} : vector<128x4xbf16>, vector<4x8xbf16>, vector<128x8xf32> -> vector<128x8xf32>
    %35 = arith.addf %29, %34 : vector<128x8xf32>
    %c0_51 = arith.constant 0 : index
    %c1_52 = arith.constant 1 : index
    %c1_53 = arith.constant 1 : index
    %c1_54 = arith.constant 1 : index
    %c0_55 = arith.constant 0 : index
    %36 = vector.load %arg6[%c0_51, %c1_52, %c1_53, %c1_54, %c0_55] : memref<2x4x9x9x4xbf16, #tpu.memory_space<vmem>>, vector<2x1x8x8x4xbf16>
    %37 = vector.shape_cast %36 : vector<2x1x8x8x4xbf16> to vector<128x4xbf16>
    %38 = vector.extract_strided_slice %6 {offsets = [1, 2, 0, 0], sizes = [1, 1, 4, 8], strides = [1, 1, 1, 1]} : vector<3x3x4x8xbf16> to vector<1x1x4x8xbf16>
    %39 = vector.shape_cast %38 : vector<1x1x4x8xbf16> to vector<4x8xbf16>
    %cst_56 = arith.constant dense<0.000000e+00> : vector<128x8xf32>
    %40 = tpu.matmul %37, %39, %cst_56 {dimension_numbers = #tpu.dot_dimension_numbers<[1], [0], [0], [1], [0, 0, 1, 1], [], []>} : vector<128x4xbf16>, vector<4x8xbf16>, vector<128x8xf32> -> vector<128x8xf32>
    %41 = arith.addf %35, %40 : vector<128x8xf32>
    %c0_57 = arith.constant 0 : index
    %c3_58 = arith.constant 3 : index
    %c1_59 = arith.constant 1 : index
    %c0_60 = arith.constant 0 : index
    %c0_61 = arith.constant 0 : index
    %42 = vector.load %arg6[%c0_57, %c3_58, %c1_59, %c0_60, %c0_61] : memref<2x4x9x9x4xbf16, #tpu.memory_space<vmem>>, vector<2x1x8x8x4xbf16>
    %43 = vector.shape_cast %42 : vector<2x1x8x8x4xbf16> to vector<128x4xbf16>
    %44 = vector.extract_strided_slice %6 {offsets = [2, 0, 0, 0], sizes = [1, 1, 4, 8], strides = [1, 1, 1, 1]} : vector<3x3x4x8xbf16> to vector<1x1x4x8xbf16>
    %45 = vector.shape_cast %44 : vector<1x1x4x8xbf16> to vector<4x8xbf16>
    %cst_62 = arith.constant dense<0.000000e+00> : vector<128x8xf32>
    %46 = tpu.matmul %43, %45, %cst_62 {dimension_numbers = #tpu.dot_dimension_numbers<[1], [0], [0], [1], [0, 0, 1, 1], [], []>} : vector<128x4xbf16>, vector<4x8xbf16>, vector<128x8xf32> -> vector<128x8xf32>
    %47 = arith.addf %41, %46 : vector<128x8xf32>
    %c0_63 = arith.constant 0 : index
    %c2_64 = arith.constant 2 : index
    %c1_65 = arith.constant 1 : index
    %c1_66 = arith.constant 1 : index
    %c0_67 = arith.constant 0 : index
    %48 = vector.load %arg6[%c0_63, %c2_64, %c1_65, %c1_66, %c0_67] : memref<2x4x9x9x4xbf16, #tpu.memory_space<vmem>>, vector<2x1x8x8x4xbf16>
    %49 = vector.shape_cast %48 : vector<2x1x8x8x4xbf16> to vector<128x4xbf16>
    %50 = vector.extract_strided_slice %6 {offsets = [2, 1, 0, 0], sizes = [1, 1, 4, 8], strides = [1, 1, 1, 1]} : vector<3x3x4x8xbf16> to vector<1x1x4x8xbf16>
    %51 = vector.shape_cast %50 : vector<1x1x4x8xbf16> to vector<4x8xbf16>
    %cst_68 = arith.constant dense<0.000000e+00> : vector<128x8xf32>
    %52 = tpu.matmul %49, %51, %cst_68 {dimension_numbers = #tpu.dot_dimension_numbers<[1], [0], [0], [1], [0, 0, 1, 1], [], []>} : vector<128x4xbf16>, vector<4x8xbf16>, vector<128x8xf32> -> vector<128x8xf32>
    %53 = arith.addf %47, %52 : vector<128x8xf32>
    %c0_69 = arith.constant 0 : index
    %c3_70 = arith.constant 3 : index
    %c1_71 = arith.constant 1 : index
    %c1_72 = arith.constant 1 : index
    %c0_73 = arith.constant 0 : index
    %54 = vector.load %arg6[%c0_69, %c3_70, %c1_71, %c1_72, %c0_73] : memref<2x4x9x9x4xbf16, #tpu.memory_space<vmem>>, vector<2x1x8x8x4xbf16>
    %55 = vector.shape_cast %54 : vector<2x1x8x8x4xbf16> to vector<128x4xbf16>
    %56 = vector.extract_strided_slice %6 {offsets = [2, 2, 0, 0], sizes = [1, 1, 4, 8], strides = [1, 1, 1, 1]} : vector<3x3x4x8xbf16> to vector<1x1x4x8xbf16>
    %57 = vector.shape_cast %56 : vector<1x1x4x8xbf16> to vector<4x8xbf16>
    %cst_74 = arith.constant dense<0.000000e+00> : vector<128x8xf32>
    %58 = tpu.matmul %55, %57, %cst_74 {dimension_numbers = #tpu.dot_dimension_numbers<[1], [0], [0], [1], [0, 0, 1, 1], [], []>} : vector<128x4xbf16>, vector<4x8xbf16>, vector<128x8xf32> -> vector<128x8xf32>
    %59 = arith.addf %53, %58 : vector<128x8xf32>
    %c0_75 = arith.constant 0 : index
    %c0_76 = arith.constant 0 : index
    %60 = vector.load %arg4[%c0_75, %c0_76] : memref<1x8xf32, #tpu.memory_space<vmem>>, vector<1x8xf32>
    %61 = vector.broadcast %60 : vector<1x8xf32> to vector<128x8xf32>
    %62 = arith.addf %59, %61 : vector<128x8xf32>
    %cst_77 = arith.constant 0.000000e+00 : f32
    %63 = vector.broadcast %cst_77 : f32 to vector<128x8xf32>
    %64 = arith.maximumf %62, %63 : vector<128x8xf32>
    %65 = vector.shape_cast %64 : vector<128x8xf32> to vector<2x8x8x8xf32>
    %66 = arith.truncf %65 : vector<2x8x8x8xf32> to vector<2x8x8x8xbf16>
    %c0_78 = arith.constant 0 : index
    %c0_79 = arith.constant 0 : index
    %c0_80 = arith.constant 0 : index
    %c0_81 = arith.constant 0 : index
    %67 = vector.load %arg5[%c0_78, %c0_79, %c0_80, %c0_81] : memref<2x8x8x8xbf16, #tpu.memory_space<vmem>>, vector<2x8x8x8xbf16>
    tpu.vector_store %arg5[%c0_78, %c0_79, %c0_80, %c0_81], %66 {strides = array<i32>} : memref<2x8x8x8xbf16, #tpu.memory_space<vmem>>, vector<2x8x8x8xbf16>,
    return
  }
  func.func @transform_0(%arg0: i32, %arg1: i32) -> (i32, i32, i32, i32, i32) {
    %c0_i32 = arith.constant 0 : i32
    %c0_i32_0 = arith.constant 0 : i32
    %c0_i32_1 = arith.constant 0 : i32
    %c0_i32_2 = arith.constant 0 : i32
    %c0_i32_3 = arith.constant 0 : i32
    return %arg1, %c0_i32, %c0_i32_0, %c0_i32_1, %c0_i32_2 : i32, i32, i32, i32, i32
  }
  func.func @transform_1(%arg0: i32, %arg1: i32) -> (i32, i32, i32, i32) {
    %c0_i32 = arith.constant 0 : i32
    %c0_i32_0 = arith.constant 0 : i32
    %c0_i32_1 = arith.constant 0 : i32
    %c0_i32_2 = arith.constant 0 : i32
    return %c0_i32, %c0_i32_0, %c0_i32_1, %arg0 : i32, i32, i32, i32
  }
  func.func @transform_2(%arg0: i32, %arg1: i32) -> (i32, i32) {
    %c0_i32 = arith.constant 0 : i32
    %c0_i32_0 = arith.constant 0 : i32
    return %c0_i32, %arg0 : i32, i32
  }
  func.func @transform_3(%arg0: i32, %arg1: i32) -> (i32, i32, i32, i32) {
    %c0_i32 = arith.constant 0 : i32
    %c0_i32_0 = arith.constant 0 : i32
    %c0_i32_1 = arith.constant 0 : i32
    return %arg1, %c0_i32, %c0_i32_0, %arg0 : i32, i32, i32, i32
  }
}

</mosaic_0001>

<llo_original>
// kernel: tpu_custom_call.1
$region0: #{tpu_custom_call.1}
  #allocation0 [shape = 'u32[]', space=smem, size = 0x4, offset = 0x4, fixed_abs, tag = 'smem constant byte address 0x4 - core index']
  #allocation1 [shape = 'u32[72,128]{1,0:T(1,128)}', space=vmem, size = 0x9000, scoped, tag = 'internal scratch']
  #allocation2 [shape = 'bf16[2,4,9,9,4]{4,3,2,1,0:T(8,128)(2,1)}', space=vmem, size = 0x48000, scoped, tag = 'scratch operand']
  %s0 = inlined_call_operand.vmem [shape: bf16[2,4,8,8,4], index: 0, kind: input, shape index: {}]
  %s1 = inlined_call_operand.vmem [shape: bf16[3,3,4,8], index: 1, kind: input, shape index: {}]
  %s2 = inlined_call_operand.vmem [shape: f32[1,8], index: 2, kind: input, shape index: {}]
  %s3 = inlined_call_operand.hbm [shape: bf16[2,8,8,8], index: 3, kind: output, shape index: {}]
  %s4 = sld [smem:[#allocation0]]
  $region22: #{tpu_custom_call.1} parent=0
    _
  %s6 = ssub.s32 1, %s4
  %s7 = scalar_select 0, %s6, %s4
  $region1: #{tpu_custom_call.1} parent=0
    #allocation3 [shape = 'u8[32768]{0}', space=vmem, size = 0x8000, scoped, tag = 'output window, operand 0, single buffered']
    #allocation4 [shape = 's32[1]{0}', space=sflag, size = 0x4, scoped, tag = 'scoped memory for tpu_custom_call.1']
    %8 = vsyncpa [#allocation4], 0
    // Predicated region
    $region2: #{tpu_custom_call.1} parent=1 // pred_check
      _
    $region3: #{tpu_custom_call.1} parent=1 // pred_check_branch
      %10 = sbr.rel (0) target = $region5
    $region4: #{tpu_custom_call.1} parent=1 // pred_region
      _
    $region5: #{tpu_custom_call.1} parent=1 // pred_fallthru
      _
    // Predicated region
    $region6: #{tpu_custom_call.1} parent=1 // pred_check
      _
    $region7: #{tpu_custom_call.1} parent=1 // pred_check_branch
      %12 = sbr.rel (0) target = $region9
    $region8: #{tpu_custom_call.1} parent=1 // pred_region
      _
    $region9: #{tpu_custom_call.1} parent=1 // pred_fallthru
      _
    // Predicated region
    $region10: #{tpu_custom_call.1} parent=1 // pred_check
      _
    $region11: #{tpu_custom_call.1} parent=1 // pred_check_branch
      %14 = sbr.rel (0) target = $region13
    $region12: #{tpu_custom_call.1} parent=1 // pred_region
      _
    $region13: #{tpu_custom_call.1} parent=1 // pred_fallthru
      _
    %vm16 = vcmask 27648
    %17 = vst.msk [vmem:[#allocation2] sm:$0xf] %vm16, 0
    %vm18 = vcmask 24576
    %vm19 = vsmask.f32 256
    %vm20 = vmand %vm18, %vm19
    %v21 = vld [vmem:[#allocation2 + $0x4] sm:$0x1]
    %v22 = vsel %vm20, 0, %v21
    %23 = vst [vmem:[#allocation2 + $0x4] sm:$0x1] %v22
    %24 = vst.msk [vmem:[#allocation2 + $0x48] sm:$0xf] %vm16, 0
    %v25 = vld [vmem:[#allocation2 + $0x4c] sm:$0x1]
    %v26 = vsel %vm20, 0, %v25
    %27 = vst [vmem:[#allocation2 + $0x4c] sm:$0x1] %v26
    %28 = vst.msk [vmem:[#allocation2 + $0x90] sm:$0xf] %vm16, 0
    %v29 = vld [vmem:[#allocation2 + $0x94] sm:$0x1]
    %v30 = vsel %vm20, 0, %v29
    %31 = vst [vmem:[#allocation2 + $0x94] sm:$0x1] %v30
    %32 = vst.msk [vmem:[#allocation2 + $0xd8] sm:$0xf] %vm16, 0
    %v33 = vld [vmem:[#allocation2 + $0xdc] sm:$0x1]
    %v34 = vsel %vm20, 0, %v33
    %35 = vst [vmem:[#allocation2 + $0xdc] sm:$0x1] %v34
    %36 = vst.msk [vmem:[#allocation2 + $0x120] sm:$0xf] %vm16, 0
    %v37 = vld [vmem:[#allocation2 + $0x124] sm:$0x1]
    %v38 = vsel %vm20, 0, %v37
    %39 = vst [vmem:[#allocation2 + $0x124] sm:$0x1] %v38
    %40 = vst.msk [vmem:[#allocation2 + $0x168] sm:$0xf] %vm16, 0
    %v41 = vld [vmem:[#allocation2 + $0x16c] sm:$0x1]
    %v42 = vsel %vm20, 0, %v41
    %43 = vst [vmem:[#allocation2 + $0x16c] sm:$0x1] %v42
    %44 = vst.msk [vmem:[#allocation2 + $0x1b0] sm:$0xf] %vm16, 0
    %v45 = vld [vmem:[#allocation2 + $0x1b4] sm:$0x1]
    %v46 = vsel %vm20, 0, %v45
    %47 = vst [vmem:[#allocation2 + $0x1b4] sm:$0x1] %v46
    %48 = vst.msk [vmem:[#allocation2 + $0x1f8] sm:$0xf] %vm16, 0
    %v49 = vld [vmem:[#allocation2 + $0x1fc] sm:$0x1]
    %v50 = vsel %vm20, 0, %v49
    %51 = vst [vmem:[#allocation2 + $0x1fc] sm:$0x1] %v50
    %v52 = vld [vmem:[#allocation2] sm:$0x1]
    %v53 = vsel %vm20, 0, %v52
    %54 = vst [vmem:[#allocation2] sm:$0x1] %v53
    %v55 = vld [vmem:[#allocation2 + $0x8] sm:$0x1]
    %v56 = vsel %vm20, 0, %v55
    %57 = vst [vmem:[#allocation2 + $0x8] sm:$0x1] %v56
    %v58 = vld [vmem:[#allocation2 + $0x10] sm:$0x1]
    %v59 = vsel %vm20, 0, %v58
    %60 = vst [vmem:[#allocation2 + $0x10] sm:$0x1] %v59
    %v61 = vld [vmem:[#allocation2 + $0x18] sm:$0x1]
    %v62 = vsel %vm20, 0, %v61
    %63 = vst [vmem:[#allocation2 + $0x18] sm:$0x1] %v62
    %v64 = vld [vmem:[#allocation2 + $0x20] sm:$0x1]
    %v65 = vsel %vm20, 0, %v64
    %66 = vst [vmem:[#allocation2 + $0x20] sm:$0x1] %v65
    %v67 = vld [vmem:[#allocation2 + $0x28] sm:$0x1]
    %v68 = vsel %vm20, 0, %v67
    %69 = vst [vmem:[#allocation2 + $0x28] sm:$0x1] %v68
    %v70 = vld [vmem:[#allocation2 + $0x30] sm:$0x1]
    %v71 = vsel %vm20, 0, %v70
    %72 = vst [vmem:[#allocation2 + $0x30] sm:$0x1] %v71
    %v73 = vld [vmem:[#allocation2 + $0x38] sm:$0x1]
    %v74 = vsel %vm20, 0, %v73
    %75 = vst [vmem:[#allocation2 + $0x38] sm:$0x1] %v74
    %v76 = vld [vmem:[#allocation2 + $0x40] sm:$0x1]
    %v77 = vsel %vm20, 0, %v76
    %78 = vst [vmem:[#allocation2 + $0x40] sm:$0x1] %v77
    %v79 = vld [vmem:[#allocation2 + $0x48] sm:$0x1]
    %v80 = vsel %vm20, 0, %v79
    %81 = vst [vmem:[#allocation2 + $0x48] sm:$0x1] %v80
    %v82 = vld [vmem:[#allocation2 + $0x50] sm:$0x1]
    %v83 = vsel %vm20, 0, %v82
    %84 = vst [vmem:[#allocation2 + $0x50] sm:$0x1] %v83
    %v85 = vld [vmem:[#allocation2 + $0x58] sm:$0x1]
    %v86 = vsel %vm20, 0, %v85
    %87 = vst [vmem:[#allocation2 + $0x58] sm:$0x1] %v86
    %v88 = vld [vmem:[#allocation2 + $0x60] sm:$0x1]
    %v89 = vsel %vm20, 0, %v88
    %90 = vst [vmem:[#allocation2 + $0x60] sm:$0x1] %v89
    %v91 = vld [vmem:[#allocation2 + $0x68] sm:$0x1]
    %v92 = vsel %vm20, 0, %v91
    %93 = vst [vmem:[#allocation2 + $0x68] sm:$0x1] %v92
    %v94 = vld [vmem:[#allocation2 + $0x70] sm:$0x1]
    %v95 = vsel %vm20, 0, %v94
    %96 = vst [vmem:[#allocation2 + $0x70] sm:$0x1] %v95
    %v97 = vld [vmem:[#allocation2 + $0x78] sm:$0x1]
    %v98 = vsel %vm20, 0, %v97
    %99 = vst [vmem:[#allocation2 + $0x78] sm:$0x1] %v98
    %v100 = vld [vmem:[#allocation2 + $0x80] sm:$0x1]
    %v101 = vsel %vm20, 0, %v100
    %102 = vst [vmem:[#allocation2 + $0x80] sm:$0x1] %v101
    %v103 = vld [vmem:[#allocation2 + $0x88] sm:$0x1]
    %v104 = vsel %vm20, 0, %v103
    %105 = vst [vmem:[#allocation2 + $0x88] sm:$0x1] %v104
    %v106 = vld [vmem:[#allocation2 + $0x90] sm:$0x1]
    %v107 = vsel %vm20, 0, %v106
    %108 = vst [vmem:[#allocation2 + $0x90] sm:$0x1] %v107
    %v109 = vld [vmem:[#allocation2 + $0x98] sm:$0x1]
    %v110 = vsel %vm20, 0, %v109
    %111 = vst [vmem:[#allocation2 + $0x98] sm:$0x1] %v110
    %v112 = vld [vmem:[#allocation2 + $0xa0] sm:$0x1]
    %v113 = vsel %vm20, 0, %v112
    %114 = vst [vmem:[#allocation2 + $0xa0] sm:$0x1] %v113
    %v115 = vld [vmem:[#allocation2 + $0xa8] sm:$0x1]
    %v116 = vsel %vm20, 0, %v115
    %117 = vst [vmem:[#allocation2 + $0xa8] sm:$0x1] %v116
    %v118 = vld [vmem:[#allocation2 + $0xb0] sm:$0x1]
    %v119 = vsel %vm20, 0, %v118
    %120 = vst [vmem:[#allocation2 + $0xb0] sm:$0x1] %v119
    %v121 = vld [vmem:[#allocation2 + $0xb8] sm:$0x1]
    %v122 = vsel %vm20, 0, %v121
    %123 = vst [vmem:[#allocation2 + $0xb8] sm:$0x1] %v122
    %v124 = vld [vmem:[#allocation2 + $0xc0] sm:$0x1]
    %v125 = vsel %vm20, 0, %v124
    %126 = vst [vmem:[#allocation2 + $0xc0] sm:$0x1] %v125
    %v127 = vld [vmem:[#allocation2 + $0xc8] sm:$0x1]
    %v128 = vsel %vm20, 0, %v127
    %129 = vst [vmem:[#allocation2 + $0xc8] sm:$0x1] %v128
    %v130 = vld [vmem:[#allocation2 + $0xd0] sm:$0x1]
    %v131 = vsel %vm20, 0, %v130
    %132 = vst [vmem:[#allocation2 + $0xd0] sm:$0x1] %v131
    %v133 = vld [vmem:[#allocation2 + $0xd8] sm:$0x1]
    %v134 = vsel %vm20, 0, %v133
    %135 = vst [vmem:[#allocation2 + $0xd8] sm:$0x1] %v134
    %v136 = vld [vmem:[#allocation2 + $0xe0] sm:$0x1]
    %v137 = vsel %vm20, 0, %v136
    %138 = vst [vmem:[#allocation2 + $0xe0] sm:$0x1] %v137
    %v139 = vld [vmem:[#allocation2 + $0xe8] sm:$0x1]
    %v140 = vsel %vm20, 0, %v139
    %141 = vst [vmem:[#allocation2 + $0xe8] sm:$0x1] %v140
    %v142 = vld [vmem:[#allocation2 + $0xf0] sm:$0x1]
    %v143 = vsel %vm20, 0, %v142
    %144 = vst [vmem:[#allocation2 + $0xf0] sm:$0x1] %v143
    %v145 = vld [vmem:[#allocation2 + $0xf8] sm:$0x1]
    %v146 = vsel %vm20, 0, %v145
    %147 = vst [vmem:[#allocation2 + $0xf8] sm:$0x1] %v146
    %v148 = vld [vmem:[#allocation2 + $0x100] sm:$0x1]
    %v149 = vsel %vm20, 0, %v148
    %150 = vst [vmem:[#allocation2 + $0x100] sm:$0x1] %v149
    %v151 = vld [vmem:[#allocation2 + $0x108] sm:$0x1]
    %v152 = vsel %vm20, 0, %v151
    %153 = vst [vmem:[#allocation2 + $0x108] sm:$0x1] %v152
    %v154 = vld [vmem:[#allocation2 + $0x110] sm:$0x1]
    %v155 = vsel %vm20, 0, %v154
    %156 = vst [vmem:[#allocation2 + $0x110] sm:$0x1] %v155
    %v157 = vld [vmem:[#allocation2 + $0x118] sm:$0x1]
    %v158 = vsel %vm20, 0, %v157
    %159 = vst [vmem:[#allocation2 + $0x118] sm:$0x1] %v158
    %v160 = vld [vmem:[#allocation2 + $0x120] sm:$0x1]
    %v161 = vsel %vm20, 0, %v160
    %162 = vst [vmem:[#allocation2 + $0x120] sm:$0x1] %v161
    %v163 = vld [vmem:[#allocation2 + $0x128] sm:$0x1]
    %v164 = vsel %vm20, 0, %v163
    %165 = vst [vmem:[#allocation2 + $0x128] sm:$0x1] %v164
    %v166 = vld [vmem:[#allocation2 + $0x130] sm:$0x1]
    %v167 = vsel %vm20, 0, %v166
    %168 = vst [vmem:[#allocation2 + $0x130] sm:$0x1] %v167
    %v169 = vld [vmem:[#allocation2 + $0x138] sm:$0x1]
    %v170 = vsel %vm20, 0, %v169
    %171 = vst [vmem:[#allocation2 + $0x138] sm:$0x1] %v170
    %v172 = vld [vmem:[#allocation2 + $0x140] sm:$0x1]
    %v173 = vsel %vm20, 0, %v172
    %174 = vst [vmem:[#allocation2 + $0x140] sm:$0x1] %v173
    %v175 = vld [vmem:[#allocation2 + $0x148] sm:$0x1]
    %v176 = vsel %vm20, 0, %v175
    %177 = vst [vmem:[#allocation2 + $0x148] sm:$0x1] %v176
    %v178 = vld [vmem:[#allocation2 + $0x150] sm:$0x1]
    %v179 = vsel %vm20, 0, %v178
    %180 = vst [vmem:[#allocation2 + $0x150] sm:$0x1] %v179
    %v181 = vld [vmem:[#allocation2 + $0x158] sm:$0x1]
    %v182 = vsel %vm20, 0, %v181
    %183 = vst [vmem:[#allocation2 + $0x158] sm:$0x1] %v182
    %v184 = vld [vmem:[#allocation2 + $0x160] sm:$0x1]
    %v185 = vsel %vm20, 0, %v184
    %186 = vst [vmem:[#allocation2 + $0x160] sm:$0x1] %v185
    %v187 = vld [vmem:[#allocation2 + $0x168] sm:$0x1]
    %v188 = vsel %vm20, 0, %v187
    %189 = vst [vmem:[#allocation2 + $0x168] sm:$0x1] %v188
    %v190 = vld [vmem:[#allocation2 + $0x170] sm:$0x1]
    %v191 = vsel %vm20, 0, %v190
    %192 = vst [vmem:[#allocation2 + $0x170] sm:$0x1] %v191
    %v193 = vld [vmem:[#allocation2 + $0x178] sm:$0x1]
    %v194 = vsel %vm20, 0, %v193
    %195 = vst [vmem:[#allocation2 + $0x178] sm:$0x1] %v194
    %v196 = vld [vmem:[#allocation2 + $0x180] sm:$0x1]
    %v197 = vsel %vm20, 0, %v196
    %198 = vst [vmem:[#allocation2 + $0x180] sm:$0x1] %v197
    %v199 = vld [vmem:[#allocation2 + $0x188] sm:$0x1]
    %v200 = vsel %vm20, 0, %v199
    %201 = vst [vmem:[#allocation2 + $0x188] sm:$0x1] %v200
    %v202 = vld [vmem:[#allocation2 + $0x190] sm:$0x1]
    %v203 = vsel %vm20, 0, %v202
    %204 = vst [vmem:[#allocation2 + $0x190] sm:$0x1] %v203
    %v205 = vld [vmem:[#allocation2 + $0x198] sm:$0x1]
    %v206 = vsel %vm20, 0, %v205
    %207 = vst [vmem:[#allocation2 + $0x198] sm:$0x1] %v206
    %v208 = vld [vmem:[#allocation2 + $0x1a0] sm:$0x1]
    %v209 = vsel %vm20, 0, %v208
    %210 = vst [vmem:[#allocation2 + $0x1a0] sm:$0x1] %v209
    %v211 = vld [vmem:[#allocation2 + $0x1a8] sm:$0x1]
    %v212 = vsel %vm20, 0, %v211
    %213 = vst [vmem:[#allocation2 + $0x1a8] sm:$0x1] %v212
    %v214 = vld [vmem:[#allocation2 + $0x1b0] sm:$0x1]
    %v215 = vsel %vm20, 0, %v214
    %216 = vst [vmem:[#allocation2 + $0x1b0] sm:$0x1] %v215
    %v217 = vld [vmem:[#allocation2 + $0x1b8] sm:$0x1]
    %v218 = vsel %vm20, 0, %v217
    %219 = vst [vmem:[#allocation2 + $0x1b8] sm:$0x1] %v218
    %v220 = vld [vmem:[#allocation2 + $0x1c0] sm:$0x1]
    %v221 = vsel %vm20, 0, %v220
    %222 = vst [vmem:[#allocation2 + $0x1c0] sm:$0x1] %v221
    %v223 = vld [vmem:[#allocation2 + $0x1c8] sm:$0x1]
    %v224 = vsel %vm20, 0, %v223
    %225 = vst [vmem:[#allocation2 + $0x1c8] sm:$0x1] %v224
    %v226 = vld [vmem:[#allocation2 + $0x1d0] sm:$0x1]
    %v227 = vsel %vm20, 0, %v226
    %228 = vst [vmem:[#allocation2 + $0x1d0] sm:$0x1] %v227
    %v229 = vld [vmem:[#allocation2 + $0x1d8] sm:$0x1]
    %v230 = vsel %vm20, 0, %v229
    %231 = vst [vmem:[#allocation2 + $0x1d8] sm:$0x1] %v230
    %v232 = vld [vmem:[#allocation2 + $0x1e0] sm:$0x1]
    %v233 = vsel %vm20, 0, %v232
    %234 = vst [vmem:[#allocation2 + $0x1e0] sm:$0x1] %v233
    %v235 = vld [vmem:[#allocation2 + $0x1e8] sm:$0x1]
    %v236 = vsel %vm20, 0, %v235
    %237 = vst [vmem:[#allocation2 + $0x1e8] sm:$0x1] %v236
    %v238 = vld [vmem:[#allocation2 + $0x1f0] sm:$0x1]
    %v239 = vsel %vm20, 0, %v238
    %240 = vst [vmem:[#allocation2 + $0x1f0] sm:$0x1] %v239
    %v241 = vld [vmem:[#allocation2 + $0x1f8] sm:$0x1]
    %v242 = vsel %vm20, 0, %v241
    %243 = vst [vmem:[#allocation2 + $0x1f8] sm:$0x1] %v242
    %v244 = vld [vmem:[#allocation2 + $0x200] sm:$0x1]
    %v245 = vsel %vm20, 0, %v244
    %246 = vst [vmem:[#allocation2 + $0x200] sm:$0x1] %v245
    %v247 = vld [vmem:[#allocation2 + $0x208] sm:$0x1]
    %v248 = vsel %vm20, 0, %v247
    %249 = vst [vmem:[#allocation2 + $0x208] sm:$0x1] %v248
    %v250 = vld [vmem:[#allocation2 + $0x210] sm:$0x1]
    %v251 = vsel %vm20, 0, %v250
    %252 = vst [vmem:[#allocation2 + $0x210] sm:$0x1] %v251
    %v253 = vld [vmem:[#allocation2 + $0x218] sm:$0x1]
    %v254 = vsel %vm20, 0, %v253
    %255 = vst [vmem:[#allocation2 + $0x218] sm:$0x1] %v254
    %v256 = vld [vmem:[#allocation2 + $0x220] sm:$0x1]
    %v257 = vsel %vm20, 0, %v256
    %258 = vst [vmem:[#allocation2 + $0x220] sm:$0x1] %v257
    %v259 = vld [vmem:[#allocation2 + $0x228] sm:$0x1]
    %v260 = vsel %vm20, 0, %v259
    %261 = vst [vmem:[#allocation2 + $0x228] sm:$0x1] %v260
    %v262 = vld [vmem:[#allocation2 + $0x230] sm:$0x1]
    %v263 = vsel %vm20, 0, %v262
    %264 = vst [vmem:[#allocation2 + $0x230] sm:$0x1] %v263
    %v265 = vld [vmem:[#allocation2 + $0x238] sm:$0x1]
    %v266 = vsel %vm20, 0, %v265
    %267 = vst [vmem:[#allocation2 + $0x238] sm:$0x1] %v266
    %v268 = vld [vmem:[%s0] sm:$0xf]
    %v269 = vld [vmem:[%s0 + $0x4] sm:$0xf]
    %v270 = vld [vmem:[%s0 + $0x8] sm:$0xf]
    %v271 = vld [vmem:[%s0 + $0xc] sm:$0xf]
    %v272 = vld [vmem:[%s0 + $0x10] sm:$0xf]
    %v273 = vld [vmem:[%s0 + $0x14] sm:$0xf]
    %v274 = vld [vmem:[%s0 + $0x18] sm:$0xf]
    %v275 = vld [vmem:[%s0 + $0x1c] sm:$0xf]
    %v276 = vld [vmem:[%s0 + $0x20] sm:$0xf]
    %v277 = vld [vmem:[%s0 + $0x24] sm:$0xf]
    %v278 = vld [vmem:[%s0 + $0x28] sm:$0xf]
    %v279 = vld [vmem:[%s0 + $0x2c] sm:$0xf]
    %v280 = vld [vmem:[%s0 + $0x30] sm:$0xf]
    %v281 = vld [vmem:[%s0 + $0x34] sm:$0xf]
    %v282 = vld [vmem:[%s0 + $0x38] sm:$0xf]
    %v283 = vld [vmem:[%s0 + $0x3c] sm:$0xf]
    %v284 = vld [vmem:[%s0 + $0x40] sm:$0xf]
    %v285 = vld [vmem:[%s0 + $0x44] sm:$0xf]
    %v286 = vld [vmem:[%s0 + $0x48] sm:$0xf]
    %v287 = vld [vmem:[%s0 + $0x4c] sm:$0xf]
    %v288 = vld [vmem:[%s0 + $0x50] sm:$0xf]
    %v289 = vld [vmem:[%s0 + $0x54] sm:$0xf]
    %v290 = vld [vmem:[%s0 + $0x58] sm:$0xf]
    %v291 = vld [vmem:[%s0 + $0x5c] sm:$0xf]
    %v292 = vld [vmem:[%s0 + $0x60] sm:$0xf]
    %v293 = vld [vmem:[%s0 + $0x64] sm:$0xf]
    %v294 = vld [vmem:[%s0 + $0x68] sm:$0xf]
    %v295 = vld [vmem:[%s0 + $0x6c] sm:$0xf]
    %v296 = vld [vmem:[%s0 + $0x70] sm:$0xf]
    %v297 = vld [vmem:[%s0 + $0x74] sm:$0xf]
    %v298 = vld [vmem:[%s0 + $0x78] sm:$0xf]
    %v299 = vld [vmem:[%s0 + $0x7c] sm:$0xf]
    %v300 = vld [vmem:[%s0 + $0x80] sm:$0xf]
    %v301 = vld [vmem:[%s0 + $0x84] sm:$0xf]
    %v302 = vld [vmem:[%s0 + $0x88] sm:$0xf]
    %v303 = vld [vmem:[%s0 + $0x8c] sm:$0xf]
    %v304 = vld [vmem:[%s0 + $0x90] sm:$0xf]
    %v305 = vld [vmem:[%s0 + $0x94] sm:$0xf]
    %v306 = vld [vmem:[%s0 + $0x98] sm:$0xf]
    %v307 = vld [vmem:[%s0 + $0x9c] sm:$0xf]
    %v308 = vld [vmem:[%s0 + $0xa0] sm:$0xf]
    %v309 = vld [vmem:[%s0 + $0xa4] sm:$0xf]
    %v310 = vld [vmem:[%s0 + $0xa8] sm:$0xf]
    %v311 = vld [vmem:[%s0 + $0xac] sm:$0xf]
    %v312 = vld [vmem:[%s0 + $0xb0] sm:$0xf]
    %v313 = vld [vmem:[%s0 + $0xb4] sm:$0xf]
    %v314 = vld [vmem:[%s0 + $0xb8] sm:$0xf]
    %v315 = vld [vmem:[%s0 + $0xbc] sm:$0xf]
    %v316 = vld [vmem:[%s0 + $0xc0] sm:$0xf]
    %v317 = vld [vmem:[%s0 + $0xc4] sm:$0xf]
    %v318 = vld [vmem:[%s0 + $0xc8] sm:$0xf]
    %v319 = vld [vmem:[%s0 + $0xcc] sm:$0xf]
    %v320 = vld [vmem:[%s0 + $0xd0] sm:$0xf]
    %v321 = vld [vmem:[%s0 + $0xd4] sm:$0xf]
    %v322 = vld [vmem:[%s0 + $0xd8] sm:$0xf]
    %v323 = vld [vmem:[%s0 + $0xdc] sm:$0xf]
    %v324 = vld [vmem:[%s0 + $0xe0] sm:$0xf]
    %v325 = vld [vmem:[%s0 + $0xe4] sm:$0xf]
    %v326 = vld [vmem:[%s0 + $0xe8] sm:$0xf]
    %v327 = vld [vmem:[%s0 + $0xec] sm:$0xf]
    %v328 = vld [vmem:[%s0 + $0xf0] sm:$0xf]
    %v329 = vld [vmem:[%s0 + $0xf4] sm:$0xf]
    %v330 = vld [vmem:[%s0 + $0xf8] sm:$0xf]
    %v331 = vld [vmem:[%s0 + $0xfc] sm:$0xf]
    %v333 = vshrl.u32 %v268, 16
    %v335 = vrot.slane %v333, 7
    %v336 = vshll.u32 %v268, 16
    %v338 = vor.u32 %v335, %v336
    %v339 = vrot.slane %v335, 4
    %v341 = vshrl.u32 %v269, 16
    %v343 = vrot.slane %v341, 7
    %v344 = vshll.u32 %v269, 16
    %v346 = vor.u32 %v343, %v344
    %v347 = vrot.slane %v343, 4
    %v349 = vshrl.u32 %v270, 16
    %v351 = vrot.slane %v349, 7
    %v352 = vshll.u32 %v270, 16
    %v354 = vor.u32 %v351, %v352
    %v355 = vrot.slane %v351, 4
    %v357 = vshrl.u32 %v271, 16
    %v359 = vrot.slane %v357, 7
    %v360 = vshll.u32 %v271, 16
    %v362 = vor.u32 %v359, %v360
    %v363 = vrot.slane %v359, 4
    %v365 = vshrl.u32 %v272, 16
    %v367 = vrot.slane %v365, 7
    %v368 = vshll.u32 %v272, 16
    %v370 = vor.u32 %v367, %v368
    %v371 = vrot.slane %v367, 4
    %v373 = vshrl.u32 %v273, 16
    %v375 = vrot.slane %v373, 7
    %v376 = vshll.u32 %v273, 16
    %v378 = vor.u32 %v375, %v376
    %v379 = vrot.slane %v375, 4
    %v381 = vshrl.u32 %v274, 16
    %v383 = vrot.slane %v381, 7
    %v384 = vshll.u32 %v274, 16
    %v386 = vor.u32 %v383, %v384
    %v387 = vrot.slane %v383, 4
    %v389 = vshrl.u32 %v275, 16
    %v391 = vrot.slane %v389, 7
    %v392 = vshll.u32 %v275, 16
    %v394 = vor.u32 %v391, %v392
    %v395 = vrot.slane %v391, 4
    %v397 = vshrl.u32 %v276, 16
    %v399 = vrot.slane %v397, 7
    %v400 = vshll.u32 %v276, 16
    %v402 = vor.u32 %v399, %v400
    %v403 = vrot.slane %v399, 4
    %v405 = vshrl.u32 %v277, 16
    %v407 = vrot.slane %v405, 7
    %v408 = vshll.u32 %v277, 16
    %v410 = vor.u32 %v407, %v408
    %v411 = vrot.slane %v407, 4
    %v413 = vshrl.u32 %v278, 16
    %v415 = vrot.slane %v413, 7
    %v416 = vshll.u32 %v278, 16
    %v418 = vor.u32 %v415, %v416
    %v419 = vrot.slane %v415, 4
    %v421 = vshrl.u32 %v279, 16
    %v423 = vrot.slane %v421, 7
    %v424 = vshll.u32 %v279, 16
    %v426 = vor.u32 %v423, %v424
    %v427 = vrot.slane %v423, 4
    %v429 = vshrl.u32 %v280, 16
    %v431 = vrot.slane %v429, 7
    %v432 = vshll.u32 %v280, 16
    %v434 = vor.u32 %v431, %v432
    %v435 = vrot.slane %v431, 4
    %v437 = vshrl.u32 %v281, 16
    %v439 = vrot.slane %v437, 7
    %v440 = vshll.u32 %v281, 16
    %v442 = vor.u32 %v439, %v440
    %v443 = vrot.slane %v439, 4
    %v445 = vshrl.u32 %v282, 16
    %v447 = vrot.slane %v445, 7
    %v448 = vshll.u32 %v282, 16
    %v450 = vor.u32 %v447, %v448
    %v451 = vrot.slane %v447, 4
    %v453 = vshrl.u32 %v283, 16
    %v455 = vrot.slane %v453, 7
    %v456 = vshll.u32 %v283, 16
    %v458 = vor.u32 %v455, %v456
    %v459 = vrot.slane %v455, 4
    %v461 = vshrl.u32 %v284, 16
    %v463 = vrot.slane %v461, 7
    %v464 = vshll.u32 %v284, 16
    %v466 = vor.u32 %v463, %v464
    %v467 = vrot.slane %v463, 4
    %v469 = vshrl.u32 %v285, 16
    %v471 = vrot.slane %v469, 7
    %v472 = vshll.u32 %v285, 16
    %v474 = vor.u32 %v471, %v472
    %v475 = vrot.slane %v471, 4
    %v477 = vshrl.u32 %v286, 16
    %v479 = vrot.slane %v477, 7
    %v480 = vshll.u32 %v286, 16
    %v482 = vor.u32 %v479, %v480
    %v483 = vrot.slane %v479, 4
    %v485 = vshrl.u32 %v287, 16
    %v487 = vrot.slane %v485, 7
    %v488 = vshll.u32 %v287, 16
    %v490 = vor.u32 %v487, %v488
    %v491 = vrot.slane %v487, 4
    %v493 = vshrl.u32 %v288, 16
    %v495 = vrot.slane %v493, 7
    %v496 = vshll.u32 %v288, 16
    %v498 = vor.u32 %v495, %v496
    %v499 = vrot.slane %v495, 4
    %v501 = vshrl.u32 %v289, 16
    %v503 = vrot.slane %v501, 7
    %v504 = vshll.u32 %v289, 16
    %v506 = vor.u32 %v503, %v504
    %v507 = vrot.slane %v503, 4
    %v509 = vshrl.u32 %v290, 16
    %v511 = vrot.slane %v509, 7
    %v512 = vshll.u32 %v290, 16
    %v514 = vor.u32 %v511, %v512
    %v515 = vrot.slane %v511, 4
    %v517 = vshrl.u32 %v291, 16
    %v519 = vrot.slane %v517, 7
    %v520 = vshll.u32 %v291, 16
    %v522 = vor.u32 %v519, %v520
    %v523 = vrot.slane %v519, 4
    %v525 = vshrl.u32 %v292, 16
    %v527 = vrot.slane %v525, 7
    %v528 = vshll.u32 %v292, 16
    %v530 = vor.u32 %v527, %v528
    %v531 = vrot.slane %v527, 4
    %v533 = vshrl.u32 %v293, 16
    %v535 = vrot.slane %v533, 7
    %v536 = vshll.u32 %v293, 16
    %v538 = vor.u32 %v535, %v536
    %v539 = vrot.slane %v535, 4
    %v541 = vshrl.u32 %v294, 16
    %v543 = vrot.slane %v541, 7
    %v544 = vshll.u32 %v294, 16
    %v546 = vor.u32 %v543, %v544
    %v547 = vrot.slane %v543, 4
    %v549 = vshrl.u32 %v295, 16
    %v551 = vrot.slane %v549, 7
    %v552 = vshll.u32 %v295, 16
    %v554 = vor.u32 %v551, %v552
    %v555 = vrot.slane %v551, 4
    %v557 = vshrl.u32 %v296, 16
    %v559 = vrot.slane %v557, 7
    %v560 = vshll.u32 %v296, 16
    %v562 = vor.u32 %v559, %v560
    %v563 = vrot.slane %v559, 4
    %v565 = vshrl.u32 %v297, 16
    %v567 = vrot.slane %v565, 7
    %v568 = vshll.u32 %v297, 16
    %v570 = vor.u32 %v567, %v568
    %v571 = vrot.slane %v567, 4
    %v573 = vshrl.u32 %v298, 16
    %v575 = vrot.slane %v573, 7
    %v576 = vshll.u32 %v298, 16
    %v578 = vor.u32 %v575, %v576
    %v579 = vrot.slane %v575, 4
    %v581 = vshrl.u32 %v299, 16
    %v583 = vrot.slane %v581, 7
    %v584 = vshll.u32 %v299, 16
    %v586 = vor.u32 %v583, %v584
    %v587 = vrot.slane %v583, 4
    %v589 = vshrl.u32 %v300, 16
    %v591 = vrot.slane %v589, 7
    %v592 = vshll.u32 %v300, 16
    %v594 = vor.u32 %v591, %v592
    %v595 = vrot.slane %v591, 4
    %v597 = vshrl.u32 %v301, 16
    %v599 = vrot.slane %v597, 7
    %v600 = vshll.u32 %v301, 16
    %v602 = vor.u32 %v599, %v600
    %v603 = vrot.slane %v599, 4
    %v605 = vshrl.u32 %v302, 16
    %v607 = vrot.slane %v605, 7
    %v608 = vshll.u32 %v302, 16
    %v610 = vor.u32 %v607, %v608
    %v611 = vrot.slane %v607, 4
    %v613 = vshrl.u32 %v303, 16
    %v615 = vrot.slane %v613, 7
    %v616 = vshll.u32 %v303, 16
    %v618 = vor.u32 %v615, %v616
    %v619 = vrot.slane %v615, 4
    %v621 = vshrl.u32 %v304, 16
    %v623 = vrot.slane %v621, 7
    %v624 = vshll.u32 %v304, 16
    %v626 = vor.u32 %v623, %v624
    %v627 = vrot.slane %v623, 4
    %v629 = vshrl.u32 %v305, 16
    %v631 = vrot.slane %v629, 7
    %v632 = vshll.u32 %v305, 16
    %v634 = vor.u32 %v631, %v632
    %v635 = vrot.slane %v631, 4
    %v637 = vshrl.u32 %v306, 16
    %v639 = vrot.slane %v637, 7
    %v640 = vshll.u32 %v306, 16
    %v642 = vor.u32 %v639, %v640
    %v643 = vrot.slane %v639, 4
    %v645 = vshrl.u32 %v307, 16
    %v647 = vrot.slane %v645, 7
    %v648 = vshll.u32 %v307, 16
    %v650 = vor.u32 %v647, %v648
    %v651 = vrot.slane %v647, 4
    %v653 = vshrl.u32 %v308, 16
    %v655 = vrot.slane %v653, 7
    %v656 = vshll.u32 %v308, 16
    %v658 = vor.u32 %v655, %v656
    %v659 = vrot.slane %v655, 4
    %v661 = vshrl.u32 %v309, 16
    %v663 = vrot.slane %v661, 7
    %v664 = vshll.u32 %v309, 16
    %v666 = vor.u32 %v663, %v664
    %v667 = vrot.slane %v663, 4
    %v669 = vshrl.u32 %v310, 16
    %v671 = vrot.slane %v669, 7
    %v672 = vshll.u32 %v310, 16
    %v674 = vor.u32 %v671, %v672
    %v675 = vrot.slane %v671, 4
    %v677 = vshrl.u32 %v311, 16
    %v679 = vrot.slane %v677, 7
    %v680 = vshll.u32 %v311, 16
    %v682 = vor.u32 %v679, %v680
    %v683 = vrot.slane %v679, 4
    %v685 = vshrl.u32 %v312, 16
    %v687 = vrot.slane %v685, 7
    %v688 = vshll.u32 %v312, 16
    %v690 = vor.u32 %v687, %v688
    %v691 = vrot.slane %v687, 4
    %v693 = vshrl.u32 %v313, 16
    %v695 = vrot.slane %v693, 7
    %v696 = vshll.u32 %v313, 16
    %v698 = vor.u32 %v695, %v696
    %v699 = vrot.slane %v695, 4
    %v701 = vshrl.u32 %v314, 16
    %v703 = vrot.slane %v701, 7
    %v704 = vshll.u32 %v314, 16
    %v706 = vor.u32 %v703, %v704
    %v707 = vrot.slane %v703, 4
    %v709 = vshrl.u32 %v315, 16
    %v711 = vrot.slane %v709, 7
    %v712 = vshll.u32 %v315, 16
    %v714 = vor.u32 %v711, %v712
    %v715 = vrot.slane %v711, 4
    %v717 = vshrl.u32 %v316, 16
    %v719 = vrot.slane %v717, 7
    %v720 = vshll.u32 %v316, 16
    %v722 = vor.u32 %v719, %v720
    %v723 = vrot.slane %v719, 4
    %v725 = vshrl.u32 %v317, 16
    %v727 = vrot.slane %v725, 7
    %v728 = vshll.u32 %v317, 16
    %v730 = vor.u32 %v727, %v728
    %v731 = vrot.slane %v727, 4
    %v733 = vshrl.u32 %v318, 16
    %v735 = vrot.slane %v733, 7
    %v736 = vshll.u32 %v318, 16
    %v738 = vor.u32 %v735, %v736
    %v739 = vrot.slane %v735, 4
    %v741 = vshrl.u32 %v319, 16
    %v743 = vrot.slane %v741, 7
    %v744 = vshll.u32 %v319, 16
    %v746 = vor.u32 %v743, %v744
    %v747 = vrot.slane %v743, 4
    %v749 = vshrl.u32 %v320, 16
    %v751 = vrot.slane %v749, 7
    %v752 = vshll.u32 %v320, 16
    %v754 = vor.u32 %v751, %v752
    %v755 = vrot.slane %v751, 4
    %v757 = vshrl.u32 %v321, 16
    %v759 = vrot.slane %v757, 7
    %v760 = vshll.u32 %v321, 16
    %v762 = vor.u32 %v759, %v760
    %v763 = vrot.slane %v759, 4
    %v765 = vshrl.u32 %v322, 16
    %v767 = vrot.slane %v765, 7
    %v768 = vshll.u32 %v322, 16
    %v770 = vor.u32 %v767, %v768
    %v771 = vrot.slane %v767, 4
    %v773 = vshrl.u32 %v323, 16
    %v775 = vrot.slane %v773, 7
    %v776 = vshll.u32 %v323, 16
    %v778 = vor.u32 %v775, %v776
    %v779 = vrot.slane %v775, 4
    %v781 = vshrl.u32 %v324, 16
    %v783 = vrot.slane %v781, 7
    %v784 = vshll.u32 %v324, 16
    %v786 = vor.u32 %v783, %v784
    %v787 = vrot.slane %v783, 4
    %v789 = vshrl.u32 %v325, 16
    %v791 = vrot.slane %v789, 7
    %v792 = vshll.u32 %v325, 16
    %v794 = vor.u32 %v791, %v792
    %v795 = vrot.slane %v791, 4
    %v797 = vshrl.u32 %v326, 16
    %v799 = vrot.slane %v797, 7
    %v800 = vshll.u32 %v326, 16
    %v802 = vor.u32 %v799, %v800
    %v803 = vrot.slane %v799, 4
    %v805 = vshrl.u32 %v327, 16
    %v807 = vrot.slane %v805, 7
    %v808 = vshll.u32 %v327, 16
    %v810 = vor.u32 %v807, %v808
    %v811 = vrot.slane %v807, 4
    %v813 = vshrl.u32 %v328, 16
    %v815 = vrot.slane %v813, 7
    %v816 = vshll.u32 %v328, 16
    %v818 = vor.u32 %v815, %v816
    %v819 = vrot.slane %v815, 4
    %v821 = vshrl.u32 %v329, 16
    %v823 = vrot.slane %v821, 7
    %v824 = vshll.u32 %v329, 16
    %v826 = vor.u32 %v823, %v824
    %v827 = vrot.slane %v823, 4
    %v829 = vshrl.u32 %v330, 16
    %v831 = vrot.slane %v829, 7
    %v832 = vshll.u32 %v330, 16
    %v834 = vor.u32 %v831, %v832
    %v835 = vrot.slane %v831, 4
    %v837 = vshrl.u32 %v331, 16
    %v839 = vrot.slane %v837, 7
    %v840 = vshll.u32 %v331, 16
    %v842 = vor.u32 %v839, %v840
    %v843 = vrot.slane %v839, 4
    %s972 = scalar_lea.vmem [#allocation2], 8
    %vm973 = vcmask 27648
    %vm974 = vsmask.f32 7938
    %vm975 = vmand %vm973, %vm974
    %v976 = vld [vmem:[%s972] sm:$0xf]
    %v977 = vsel %vm975, %v338, %v976
    %978 = vst [vmem:[%s972] sm:$0xf] %v977
    %v979 = vld [vmem:[%s972 + $0x4] sm:$0x1]
    %v980 = vsel %vm20, %v339, %v979
    %981 = vst [vmem:[%s972 + $0x4] sm:$0x1] %v980
    %v982 = vld [vmem:[%s972 + $0x8] sm:$0xf]
    %v983 = vsel %vm975, %v346, %v982
    %984 = vst [vmem:[%s972 + $0x8] sm:$0xf] %v983
    %v985 = vld [vmem:[%s972 + $0xc] sm:$0x1]
    %v986 = vsel %vm20, %v347, %v985
    %987 = vst [vmem:[%s972 + $0xc] sm:$0x1] %v986
    %v988 = vld [vmem:[%s972 + $0x10] sm:$0xf]
    %v989 = vsel %vm975, %v354, %v988
    %990 = vst [vmem:[%s972 + $0x10] sm:$0xf] %v989
    %v991 = vld [vmem:[%s972 + $0x14] sm:$0x1]
    %v992 = vsel %vm20, %v355, %v991
    %993 = vst [vmem:[%s972 + $0x14] sm:$0x1] %v992
    %v994 = vld [vmem:[%s972 + $0x18] sm:$0xf]
    %v995 = vsel %vm975, %v362, %v994
    %996 = vst [vmem:[%s972 + $0x18] sm:$0xf] %v995
    %v997 = vld [vmem:[%s972 + $0x1c] sm:$0x1]
    %v998 = vsel %vm20, %v363, %v997
    %999 = vst [vmem:[%s972 + $0x1c] sm:$0x1] %v998
    %v1000 = vld [vmem:[%s972 + $0x20] sm:$0xf]
    %v1001 = vsel %vm975, %v370, %v1000
    %1002 = vst [vmem:[%s972 + $0x20] sm:$0xf] %v1001
    %v1003 = vld [vmem:[%s972 + $0x24] sm:$0x1]
    %v1004 = vsel %vm20, %v371, %v1003
    %1005 = vst [vmem:[%s972 + $0x24] sm:$0x1] %v1004
    %v1006 = vld [vmem:[%s972 + $0x28] sm:$0xf]
    %v1007 = vsel %vm975, %v378, %v1006
    %1008 = vst [vmem:[%s972 + $0x28] sm:$0xf] %v1007
    %v1009 = vld [vmem:[%s972 + $0x2c] sm:$0x1]
    %v1010 = vsel %vm20, %v379, %v1009
    %1011 = vst [vmem:[%s972 + $0x2c] sm:$0x1] %v1010
    %v1012 = vld [vmem:[%s972 + $0x30] sm:$0xf]
    %v1013 = vsel %vm975, %v386, %v1012
    %1014 = vst [vmem:[%s972 + $0x30] sm:$0xf] %v1013
    %v1015 = vld [vmem:[%s972 + $0x34] sm:$0x1]
    %v1016 = vsel %vm20, %v387, %v1015
    %1017 = vst [vmem:[%s972 + $0x34] sm:$0x1] %v1016
    %v1018 = vld [vmem:[%s972 + $0x38] sm:$0xf]
    %v1019 = vsel %vm975, %v394, %v1018
    %1020 = vst [vmem:[%s972 + $0x38] sm:$0xf] %v1019
    %v1021 = vld [vmem:[%s972 + $0x3c] sm:$0x1]
    %v1022 = vsel %vm20, %v395, %v1021
    %1023 = vst [vmem:[%s972 + $0x3c] sm:$0x1] %v1022
    %v1024 = vld [vmem:[%s972 + $0x48] sm:$0xf]
    %v1025 = vsel %vm975, %v402, %v1024
    %1026 = vst [vmem:[%s972 + $0x48] sm:$0xf] %v1025
    %v1027 = vld [vmem:[%s972 + $0x4c] sm:$0x1]
    %v1028 = vsel %vm20, %v403, %v1027
    %1029 = vst [vmem:[%s972 + $0x4c] sm:$0x1] %v1028
    %v1030 = vld [vmem:[%s972 + $0x50] sm:$0xf]
    %v1031 = vsel %vm975, %v410, %v1030
    %1032 = vst [vmem:[%s972 + $0x50] sm:$0xf] %v1031
    %v1033 = vld [vmem:[%s972 + $0x54] sm:$0x1]
    %v1034 = vsel %vm20, %v411, %v1033
    %1035 = vst [vmem:[%s972 + $0x54] sm:$0x1] %v1034
    %v1036 = vld [vmem:[%s972 + $0x58] sm:$0xf]
    %v1037 = vsel %vm975, %v418, %v1036
    %1038 = vst [vmem:[%s972 + $0x58] sm:$0xf] %v1037
    %v1039 = vld [vmem:[%s972 + $0x5c] sm:$0x1]
    %v1040 = vsel %vm20, %v419, %v1039
    %1041 = vst [vmem:[%s972 + $0x5c] sm:$0x1] %v1040
    %v1042 = vld [vmem:[%s972 + $0x60] sm:$0xf]
    %v1043 = vsel %vm975, %v426, %v1042
    %1044 = vst [vmem:[%s972 + $0x60] sm:$0xf] %v1043
    %v1045 = vld [vmem:[%s972 + $0x64] sm:$0x1]
    %v1046 = vsel %vm20, %v427, %v1045
    %1047 = vst [vmem:[%s972 + $0x64] sm:$0x1] %v1046
    %v1048 = vld [vmem:[%s972 + $0x68] sm:$0xf]
    %v1049 = vsel %vm975, %v434, %v1048
    %1050 = vst [vmem:[%s972 + $0x68] sm:$0xf] %v1049
    %v1051 = vld [vmem:[%s972 + $0x6c] sm:$0x1]
    %v1052 = vsel %vm20, %v435, %v1051
    %1053 = vst [vmem:[%s972 + $0x6c] sm:$0x1] %v1052
    %v1054 = vld [vmem:[%s972 + $0x70] sm:$0xf]
    %v1055 = vsel %vm975, %v442, %v1054
    %1056 = vst [vmem:[%s972 + $0x70] sm:$0xf] %v1055
    %v1057 = vld [vmem:[%s972 + $0x74] sm:$0x1]
    %v1058 = vsel %vm20, %v443, %v1057
    %1059 = vst [vmem:[%s972 + $0x74] sm:$0x1] %v1058
    %v1060 = vld [vmem:[%s972 + $0x78] sm:$0xf]
    %v1061 = vsel %vm975, %v450, %v1060
    %1062 = vst [vmem:[%s972 + $0x78] sm:$0xf] %v1061
    %v1063 = vld [vmem:[%s972 + $0x7c] sm:$0x1]
    %v1064 = vsel %vm20, %v451, %v1063
    %1065 = vst [vmem:[%s972 + $0x7c] sm:$0x1] %v1064
    %v1066 = vld [vmem:[%s972 + $0x80] sm:$0xf]
    %v1067 = vsel %vm975, %v458, %v1066
    %1068 = vst [vmem:[%s972 + $0x80] sm:$0xf] %v1067
    %v1069 = vld [vmem:[%s972 + $0x84] sm:$0x1]
    %v1070 = vsel %vm20, %v459, %v1069
    %1071 = vst [vmem:[%s972 + $0x84] sm:$0x1] %v1070
    %v1072 = vld [vmem:[%s972 + $0x90] sm:$0xf]
    %v1073 = vsel %vm975, %v466, %v1072
    %1074 = vst [vmem:[%s972 + $0x90] sm:$0xf] %v1073
    %v1075 = vld [vmem:[%s972 + $0x94] sm:$0x1]
    %v1076 = vsel %vm20, %v467, %v1075
    %1077 = vst [vmem:[%s972 + $0x94] sm:$0x1] %v1076
    %v1078 = vld [vmem:[%s972 + $0x98] sm:$0xf]
    %v1079 = vsel %vm975, %v474, %v1078
    %1080 = vst [vmem:[%s972 + $0x98] sm:$0xf] %v1079
    %v1081 = vld [vmem:[%s972 + $0x9c] sm:$0x1]
    %v1082 = vsel %vm20, %v475, %v1081
    %1083 = vst [vmem:[%s972 + $0x9c] sm:$0x1] %v1082
    %v1084 = vld [vmem:[%s972 + $0xa0] sm:$0xf]
    %v1085 = vsel %vm975, %v482, %v1084
    %1086 = vst [vmem:[%s972 + $0xa0] sm:$0xf] %v1085
    %v1087 = vld [vmem:[%s972 + $0xa4] sm:$0x1]
    %v1088 = vsel %vm20, %v483, %v1087
    %1089 = vst [vmem:[%s972 + $0xa4] sm:$0x1] %v1088
    %v1090 = vld [vmem:[%s972 + $0xa8] sm:$0xf]
    %v1091 = vsel %vm975, %v490, %v1090
    %1092 = vst [vmem:[%s972 + $0xa8] sm:$0xf] %v1091
    %v1093 = vld [vmem:[%s972 + $0xac] sm:$0x1]
    %v1094 = vsel %vm20, %v491, %v1093
    %1095 = vst [vmem:[%s972 + $0xac] sm:$0x1] %v1094
    %v1096 = vld [vmem:[%s972 + $0xb0] sm:$0xf]
    %v1097 = vsel %vm975, %v498, %v1096
    %1098 = vst [vmem:[%s972 + $0xb0] sm:$0xf] %v1097
    %v1099 = vld [vmem:[%s972 + $0xb4] sm:$0x1]
    %v1100 = vsel %vm20, %v499, %v1099
    %1101 = vst [vmem:[%s972 + $0xb4] sm:$0x1] %v1100
    %v1102 = vld [vmem:[%s972 + $0xb8] sm:$0xf]
    %v1103 = vsel %vm975, %v506, %v1102
    %1104 = vst [vmem:[%s972 + $0xb8] sm:$0xf] %v1103
    %v1105 = vld [vmem:[%s972 + $0xbc] sm:$0x1]
    %v1106 = vsel %vm20, %v507, %v1105
    %1107 = vst [vmem:[%s972 + $0xbc] sm:$0x1] %v1106
    %v1108 = vld [vmem:[%s972 + $0xc0] sm:$0xf]
    %v1109 = vsel %vm975, %v514, %v1108
    %1110 = vst [vmem:[%s972 + $0xc0] sm:$0xf] %v1109
    %v1111 = vld [vmem:[%s972 + $0xc4] sm:$0x1]
    %v1112 = vsel %vm20, %v515, %v1111
    %1113 = vst [vmem:[%s972 + $0xc4] sm:$0x1] %v1112
    %v1114 = vld [vmem:[%s972 + $0xc8] sm:$0xf]
    %v1115 = vsel %vm975, %v522, %v1114
    %1116 = vst [vmem:[%s972 + $0xc8] sm:$0xf] %v1115
    %v1117 = vld [vmem:[%s972 + $0xcc] sm:$0x1]
    %v1118 = vsel %vm20, %v523, %v1117
    %1119 = vst [vmem:[%s972 + $0xcc] sm:$0x1] %v1118
    %v1120 = vld [vmem:[%s972 + $0xd8] sm:$0xf]
    %v1121 = vsel %vm975, %v530, %v1120
    %1122 = vst [vmem:[%s972 + $0xd8] sm:$0xf] %v1121
    %v1123 = vld [vmem:[%s972 + $0xdc] sm:$0x1]
    %v1124 = vsel %vm20, %v531, %v1123
    %1125 = vst [vmem:[%s972 + $0xdc] sm:$0x1] %v1124
    %v1126 = vld [vmem:[%s972 + $0xe0] sm:$0xf]
    %v1127 = vsel %vm975, %v538, %v1126
    %1128 = vst [vmem:[%s972 + $0xe0] sm:$0xf] %v1127
    %v1129 = vld [vmem:[%s972 + $0xe4] sm:$0x1]
    %v1130 = vsel %vm20, %v539, %v1129
    %1131 = vst [vmem:[%s972 + $0xe4] sm:$0x1] %v1130
    %v1132 = vld [vmem:[%s972 + $0xe8] sm:$0xf]
    %v1133 = vsel %vm975, %v546, %v1132
    %1134 = vst [vmem:[%s972 + $0xe8] sm:$0xf] %v1133
    %v1135 = vld [vmem:[%s972 + $0xec] sm:$0x1]
    %v1136 = vsel %vm20, %v547, %v1135
    %1137 = vst [vmem:[%s972 + $0xec] sm:$0x1] %v1136
    %v1138 = vld [vmem:[%s972 + $0xf0] sm:$0xf]
    %v1139 = vsel %vm975, %v554, %v1138
    %1140 = vst [vmem:[%s972 + $0xf0] sm:$0xf] %v1139
    %v1141 = vld [vmem:[%s972 + $0xf4] sm:$0x1]
    %v1142 = vsel %vm20, %v555, %v1141
    %1143 = vst [vmem:[%s972 + $0xf4] sm:$0x1] %v1142
    %v1144 = vld [vmem:[%s972 + $0xf8] sm:$0xf]
    %v1145 = vsel %vm975, %v562, %v1144
    %1146 = vst [vmem:[%s972 + $0xf8] sm:$0xf] %v1145
    %v1147 = vld [vmem:[%s972 + $0xfc] sm:$0x1]
    %v1148 = vsel %vm20, %v563, %v1147
    %1149 = vst [vmem:[%s972 + $0xfc] sm:$0x1] %v1148
    %v1150 = vld [vmem:[%s972 + $0x100] sm:$0xf]
    %v1151 = vsel %vm975, %v570, %v1150
    %1152 = vst [vmem:[%s972 + $0x100] sm:$0xf] %v1151
    %v1153 = vld [vmem:[%s972 + $0x104] sm:$0x1]
    %v1154 = vsel %vm20, %v571, %v1153
    %1155 = vst [vmem:[%s972 + $0x104] sm:$0x1] %v1154
    %v1156 = vld [vmem:[%s972 + $0x108] sm:$0xf]
    %v1157 = vsel %vm975, %v578, %v1156
    %1158 = vst [vmem:[%s972 + $0x108] sm:$0xf] %v1157
    %v1159 = vld [vmem:[%s972 + $0x10c] sm:$0x1]
    %v1160 = vsel %vm20, %v579, %v1159
    %1161 = vst [vmem:[%s972 + $0x10c] sm:$0x1] %v1160
    %v1162 = vld [vmem:[%s972 + $0x110] sm:$0xf]
    %v1163 = vsel %vm975, %v586, %v1162
    %1164 = vst [vmem:[%s972 + $0x110] sm:$0xf] %v1163
    %v1165 = vld [vmem:[%s972 + $0x114] sm:$0x1]
    %v1166 = vsel %vm20, %v587, %v1165
    %1167 = vst [vmem:[%s972 + $0x114] sm:$0x1] %v1166
    %v1168 = vld [vmem:[%s972 + $0x120] sm:$0xf]
    %v1169 = vsel %vm975, %v594, %v1168
    %1170 = vst [vmem:[%s972 + $0x120] sm:$0xf] %v1169
    %v1171 = vld [vmem:[%s972 + $0x124] sm:$0x1]
    %v1172 = vsel %vm20, %v595, %v1171
    %1173 = vst [vmem:[%s972 + $0x124] sm:$0x1] %v1172
    %v1174 = vld [vmem:[%s972 + $0x128] sm:$0xf]
    %v1175 = vsel %vm975, %v602, %v1174
    %1176 = vst [vmem:[%s972 + $0x128] sm:$0xf] %v1175
    %v1177 = vld [vmem:[%s972 + $0x12c] sm:$0x1]
    %v1178 = vsel %vm20, %v603, %v1177
    %1179 = vst [vmem:[%s972 + $0x12c] sm:$0x1] %v1178
    %v1180 = vld [vmem:[%s972 + $0x130] sm:$0xf]
    %v1181 = vsel %vm975, %v610, %v1180
    %1182 = vst [vmem:[%s972 + $0x130] sm:$0xf] %v1181
    %v1183 = vld [vmem:[%s972 + $0x134] sm:$0x1]
    %v1184 = vsel %vm20, %v611, %v1183
    %1185 = vst [vmem:[%s972 + $0x134] sm:$0x1] %v1184
    %v1186 = vld [vmem:[%s972 + $0x138] sm:$0xf]
    %v1187 = vsel %vm975, %v618, %v1186
    %1188 = vst [vmem:[%s972 + $0x138] sm:$0xf] %v1187
    %v1189 = vld [vmem:[%s972 + $0x13c] sm:$0x1]
    %v1190 = vsel %vm20, %v619, %v1189
    %1191 = vst [vmem:[%s972 + $0x13c] sm:$0x1] %v1190
    %v1192 = vld [vmem:[%s972 + $0x140] sm:$0xf]
    %v1193 = vsel %vm975, %v626, %v1192
    %1194 = vst [vmem:[%s972 + $0x140] sm:$0xf] %v1193
    %v1195 = vld [vmem:[%s972 + $0x144] sm:$0x1]
    %v1196 = vsel %vm20, %v627, %v1195
    %1197 = vst [vmem:[%s972 + $0x144] sm:$0x1] %v1196
    %v1198 = vld [vmem:[%s972 + $0x148] sm:$0xf]
    %v1199 = vsel %vm975, %v634, %v1198
    %1200 = vst [vmem:[%s972 + $0x148] sm:$0xf] %v1199
    %v1201 = vld [vmem:[%s972 + $0x14c] sm:$0x1]
    %v1202 = vsel %vm20, %v635, %v1201
    %1203 = vst [vmem:[%s972 + $0x14c] sm:$0x1] %v1202
    %v1204 = vld [vmem:[%s972 + $0x150] sm:$0xf]
    %v1205 = vsel %vm975, %v642, %v1204
    %1206 = vst [vmem:[%s972 + $0x150] sm:$0xf] %v1205
    %v1207 = vld [vmem:[%s972 + $0x154] sm:$0x1]
    %v1208 = vsel %vm20, %v643, %v1207
    %1209 = vst [vmem:[%s972 + $0x154] sm:$0x1] %v1208
    %v1210 = vld [vmem:[%s972 + $0x158] sm:$0xf]
    %v1211 = vsel %vm975, %v650, %v1210
    %1212 = vst [vmem:[%s972 + $0x158] sm:$0xf] %v1211
    %v1213 = vld [vmem:[%s972 + $0x15c] sm:$0x1]
    %v1214 = vsel %vm20, %v651, %v1213
    %1215 = vst [vmem:[%s972 + $0x15c] sm:$0x1] %v1214
    %v1216 = vld [vmem:[%s972 + $0x168] sm:$0xf]
    %v1217 = vsel %vm975, %v658, %v1216
    %1218 = vst [vmem:[%s972 + $0x168] sm:$0xf] %v1217
    %v1219 = vld [vmem:[%s972 + $0x16c] sm:$0x1]
    %v1220 = vsel %vm20, %v659, %v1219
    %1221 = vst [vmem:[%s972 + $0x16c] sm:$0x1] %v1220
    %v1222 = vld [vmem:[%s972 + $0x170] sm:$0xf]
    %v1223 = vsel %vm975, %v666, %v1222
    %1224 = vst [vmem:[%s972 + $0x170] sm:$0xf] %v1223
    %v1225 = vld [vmem:[%s972 + $0x174] sm:$0x1]
    %v1226 = vsel %vm20, %v667, %v1225
    %1227 = vst [vmem:[%s972 + $0x174] sm:$0x1] %v1226
    %v1228 = vld [vmem:[%s972 + $0x178] sm:$0xf]
    %v1229 = vsel %vm975, %v674, %v1228
    %1230 = vst [vmem:[%s972 + $0x178] sm:$0xf] %v1229
    %v1231 = vld [vmem:[%s972 + $0x17c] sm:$0x1]
    %v1232 = vsel %vm20, %v675, %v1231
    %1233 = vst [vmem:[%s972 + $0x17c] sm:$0x1] %v1232
    %v1234 = vld [vmem:[%s972 + $0x180] sm:$0xf]
    %v1235 = vsel %vm975, %v682, %v1234
    %1236 = vst [vmem:[%s972 + $0x180] sm:$0xf] %v1235
    %v1237 = vld [vmem:[%s972 + $0x184] sm:$0x1]
    %v1238 = vsel %vm20, %v683, %v1237
    %1239 = vst [vmem:[%s972 + $0x184] sm:$0x1] %v1238
    %v1240 = vld [vmem:[%s972 + $0x188] sm:$0xf]
    %v1241 = vsel %vm975, %v690, %v1240
    %1242 = vst [vmem:[%s972 + $0x188] sm:$0xf] %v1241
    %v1243 = vld [vmem:[%s972 + $0x18c] sm:$0x1]
    %v1244 = vsel %vm20, %v691, %v1243
    %1245 = vst [vmem:[%s972 + $0x18c] sm:$0x1] %v1244
    %v1246 = vld [vmem:[%s972 + $0x190] sm:$0xf]
    %v1247 = vsel %vm975, %v698, %v1246
    %1248 = vst [vmem:[%s972 + $0x190] sm:$0xf] %v1247
    %v1249 = vld [vmem:[%s972 + $0x194] sm:$0x1]
    %v1250 = vsel %vm20, %v699, %v1249
    %1251 = vst [vmem:[%s972 + $0x194] sm:$0x1] %v1250
    %v1252 = vld [vmem:[%s972 + $0x198] sm:$0xf]
    %v1253 = vsel %vm975, %v706, %v1252
    %1254 = vst [vmem:[%s972 + $0x198] sm:$0xf] %v1253
    %v1255 = vld [vmem:[%s972 + $0x19c] sm:$0x1]
    %v1256 = vsel %vm20, %v707, %v1255
    %1257 = vst [vmem:[%s972 + $0x19c] sm:$0x1] %v1256
    %v1258 = vld [vmem:[%s972 + $0x1a0] sm:$0xf]
    %v1259 = vsel %vm975, %v714, %v1258
    %1260 = vst [vmem:[%s972 + $0x1a0] sm:$0xf] %v1259
    %v1261 = vld [vmem:[%s972 + $0x1a4] sm:$0x1]
    %v1262 = vsel %vm20, %v715, %v1261
    %1263 = vst [vmem:[%s972 + $0x1a4] sm:$0x1] %v1262
    %v1264 = vld [vmem:[%s972 + $0x1b0] sm:$0xf]
    %v1265 = vsel %vm975, %v722, %v1264
    %1266 = vst [vmem:[%s972 + $0x1b0] sm:$0xf] %v1265
    %v1267 = vld [vmem:[%s972 + $0x1b4] sm:$0x1]
    %v1268 = vsel %vm20, %v723, %v1267
    %1269 = vst [vmem:[%s972 + $0x1b4] sm:$0x1] %v1268
    %v1270 = vld [vmem:[%s972 + $0x1b8] sm:$0xf]
    %v1271 = vsel %vm975, %v730, %v1270
    %1272 = vst [vmem:[%s972 + $0x1b8] sm:$0xf] %v1271
    %v1273 = vld [vmem:[%s972 + $0x1bc] sm:$0x1]
    %v1274 = vsel %vm20, %v731, %v1273
    %1275 = vst [vmem:[%s972 + $0x1bc] sm:$0x1] %v1274
    %v1276 = vld [vmem:[%s972 + $0x1c0] sm:$0xf]
    %v1277 = vsel %vm975, %v738, %v1276
    %1278 = vst [vmem:[%s972 + $0x1c0] sm:$0xf] %v1277
    %v1279 = vld [vmem:[%s972 + $0x1c4] sm:$0x1]
    %v1280 = vsel %vm20, %v739, %v1279
    %1281 = vst [vmem:[%s972 + $0x1c4] sm:$0x1] %v1280
    %v1282 = vld [vmem:[%s972 + $0x1c8] sm:$0xf]
    %v1283 = vsel %vm975, %v746, %v1282
    %1284 = vst [vmem:[%s972 + $0x1c8] sm:$0xf] %v1283
    %v1285 = vld [vmem:[%s972 + $0x1cc] sm:$0x1]
    %v1286 = vsel %vm20, %v747, %v1285
    %1287 = vst [vmem:[%s972 + $0x1cc] sm:$0x1] %v1286
    %v1288 = vld [vmem:[%s972 + $0x1d0] sm:$0xf]
    %v1289 = vsel %vm975, %v754, %v1288
    %1290 = vst [vmem:[%s972 + $0x1d0] sm:$0xf] %v1289
    %v1291 = vld [vmem:[%s972 + $0x1d4] sm:$0x1]
    %v1292 = vsel %vm20, %v755, %v1291
    %1293 = vst [vmem:[%s972 + $0x1d4] sm:$0x1] %v1292
    %v1294 = vld [vmem:[%s972 + $0x1d8] sm:$0xf]
    %v1295 = vsel %vm975, %v762, %v1294
    %1296 = vst [vmem:[%s972 + $0x1d8] sm:$0xf] %v1295
    %v1297 = vld [vmem:[%s972 + $0x1dc] sm:$0x1]
    %v1298 = vsel %vm20, %v763, %v1297
    %1299 = vst [vmem:[%s972 + $0x1dc] sm:$0x1] %v1298
    %v1300 = vld [vmem:[%s972 + $0x1e0] sm:$0xf]
    %v1301 = vsel %vm975, %v770, %v1300
    %1302 = vst [vmem:[%s972 + $0x1e0] sm:$0xf] %v1301
    %v1303 = vld [vmem:[%s972 + $0x1e4] sm:$0x1]
    %v1304 = vsel %vm20, %v771, %v1303
    %1305 = vst [vmem:[%s972 + $0x1e4] sm:$0x1] %v1304
    %v1306 = vld [vmem:[%s972 + $0x1e8] sm:$0xf]
    %v1307 = vsel %vm975, %v778, %v1306
    %1308 = vst [vmem:[%s972 + $0x1e8] sm:$0xf] %v1307
    %v1309 = vld [vmem:[%s972 + $0x1ec] sm:$0x1]
    %v1310 = vsel %vm20, %v779, %v1309
    %1311 = vst [vmem:[%s972 + $0x1ec] sm:$0x1] %v1310
    %v1312 = vld [vmem:[%s972 + $0x1f8] sm:$0xf]
    %v1313 = vsel %vm975, %v786, %v1312
    %1314 = vst [vmem:[%s972 + $0x1f8] sm:$0xf] %v1313
    %v1315 = vld [vmem:[%s972 + $0x1fc] sm:$0x1]
    %v1316 = vsel %vm20, %v787, %v1315
    %1317 = vst [vmem:[%s972 + $0x1fc] sm:$0x1] %v1316
    %v1318 = vld [vmem:[%s972 + $0x200] sm:$0xf]
    %v1319 = vsel %vm975, %v794, %v1318
    %1320 = vst [vmem:[%s972 + $0x200] sm:$0xf] %v1319
    %v1321 = vld [vmem:[%s972 + $0x204] sm:$0x1]
    %v1322 = vsel %vm20, %v795, %v1321
    %1323 = vst [vmem:[%s972 + $0x204] sm:$0x1] %v1322
    %v1324 = vld [vmem:[%s972 + $0x208] sm:$0xf]
    %v1325 = vsel %vm975, %v802, %v1324
    %1326 = vst [vmem:[%s972 + $0x208] sm:$0xf] %v1325
    %v1327 = vld [vmem:[%s972 + $0x20c] sm:$0x1]
    %v1328 = vsel %vm20, %v803, %v1327
    %1329 = vst [vmem:[%s972 + $0x20c] sm:$0x1] %v1328
    %v1330 = vld [vmem:[%s972 + $0x210] sm:$0xf]
    %v1331 = vsel %vm975, %v810, %v1330
    %1332 = vst [vmem:[%s972 + $0x210] sm:$0xf] %v1331
    %v1333 = vld [vmem:[%s972 + $0x214] sm:$0x1]
    %v1334 = vsel %vm20, %v811, %v1333
    %1335 = vst [vmem:[%s972 + $0x214] sm:$0x1] %v1334
    %v1336 = vld [vmem:[%s972 + $0x218] sm:$0xf]
    %v1337 = vsel %vm975, %v818, %v1336
    %1338 = vst [vmem:[%s972 + $0x218] sm:$0xf] %v1337
    %v1339 = vld [vmem:[%s972 + $0x21c] sm:$0x1]
    %v1340 = vsel %vm20, %v819, %v1339
    %1341 = vst [vmem:[%s972 + $0x21c] sm:$0x1] %v1340
    %v1342 = vld [vmem:[%s972 + $0x220] sm:$0xf]
    %v1343 = vsel %vm975, %v826, %v1342
    %1344 = vst [vmem:[%s972 + $0x220] sm:$0xf] %v1343
    %v1345 = vld [vmem:[%s972 + $0x224] sm:$0x1]
    %v1346 = vsel %vm20, %v827, %v1345
    %1347 = vst [vmem:[%s972 + $0x224] sm:$0x1] %v1346
    %v1348 = vld [vmem:[%s972 + $0x228] sm:$0xf]
    %v1349 = vsel %vm975, %v834, %v1348
    %1350 = vst [vmem:[%s972 + $0x228] sm:$0xf] %v1349
    %v1351 = vld [vmem:[%s972 + $0x22c] sm:$0x1]
    %v1352 = vsel %vm20, %v835, %v1351
    %1353 = vst [vmem:[%s972 + $0x22c] sm:$0x1] %v1352
    %v1354 = vld [vmem:[%s972 + $0x230] sm:$0xf]
    %v1355 = vsel %vm975, %v842, %v1354
    %1356 = vst [vmem:[%s972 + $0x230] sm:$0xf] %v1355
    %v1357 = vld [vmem:[%s972 + $0x234] sm:$0x1]
    %v1358 = vsel %vm20, %v843, %v1357
    %1359 = vst [vmem:[%s972 + $0x234] sm:$0x1] %v1358
    %v1360 = vld [vmem:[%s1] sm:$0x3]
    %v1361 = vld [vmem:[%s1 + $0x2] sm:$0x3]
    %v1362 = vld [vmem:[%s1 + $0x4] sm:$0x3]
    %v1363 = vld [vmem:[%s1 + $0x6] sm:$0x3]
    %v1364 = vld [vmem:[%s1 + $0x8] sm:$0x3]
    %v1365 = vld [vmem:[%s1 + $0xa] sm:$0x3]
    %v1366 = vld [vmem:[%s1 + $0xc] sm:$0x3]
    %v1367 = vld [vmem:[%s1 + $0xe] sm:$0x3]
    %v1368 = vld [vmem:[%s1 + $0x10] sm:$0x3]
    %s1369 = scalar_lea.vmem [#allocation2], 216
    %v1370 = vld [vmem:[%s1369] sm:$0xf]
    %v1371 = vld [vmem:[%s1369 + $0x8] sm:$0xf]
    %v1372 = vld [vmem:[%s1369 + $0x10] sm:$0xf]
    %v1373 = vld [vmem:[%s1369 + $0x18] sm:$0xf]
    %v1374 = vld [vmem:[%s1369 + $0x20] sm:$0xf]
    %v1375 = vld [vmem:[%s1369 + $0x28] sm:$0xf]
    %v1376 = vld [vmem:[%s1369 + $0x30] sm:$0xf]
    %v1377 = vld [vmem:[%s1369 + $0x38] sm:$0xf]
    %v1378 = vld [vmem:[%s1369 + $0x120] sm:$0xf]
    %v1379 = vld [vmem:[%s1369 + $0x128] sm:$0xf]
    %v1380 = vld [vmem:[%s1369 + $0x130] sm:$0xf]
    %v1381 = vld [vmem:[%s1369 + $0x138] sm:$0xf]
    %v1382 = vld [vmem:[%s1369 + $0x140] sm:$0xf]
    %v1383 = vld [vmem:[%s1369 + $0x148] sm:$0xf]
    %v1384 = vld [vmem:[%s1369 + $0x150] sm:$0xf]
    %v1385 = vld [vmem:[%s1369 + $0x158] sm:$0xf]
    %s1386 = scalar_lea.vmem [#allocation2], 144
    %v1387 = vld [vmem:[%s1386] sm:$0xf]
    %v1388 = vld [vmem:[%s1386 + $0x4] sm:$0x1]
    %v1389 = vld [vmem:[%s1386 + $0x8] sm:$0xf]
    %v1390 = vld [vmem:[%s1386 + $0xc] sm:$0x1]
    %v1391 = vld [vmem:[%s1386 + $0x10] sm:$0xf]
    %v1392 = vld [vmem:[%s1386 + $0x14] sm:$0x1]
    %v1393 = vld [vmem:[%s1386 + $0x18] sm:$0xf]
    %v1394 = vld [vmem:[%s1386 + $0x1c] sm:$0x1]
    %v1395 = vld [vmem:[%s1386 + $0x20] sm:$0xf]
    %v1396 = vld [vmem:[%s1386 + $0x24] sm:$0x1]
    %v1397 = vld [vmem:[%s1386 + $0x28] sm:$0xf]
    %v1398 = vld [vmem:[%s1386 + $0x2c] sm:$0x1]
    %v1399 = vld [vmem:[%s1386 + $0x30] sm:$0xf]
    %v1400 = vld [vmem:[%s1386 + $0x34] sm:$0x1]
    %v1401 = vld [vmem:[%s1386 + $0x38] sm:$0xf]
    %v1402 = vld [vmem:[%s1386 + $0x3c] sm:$0x1]
    %v1403 = vld [vmem:[%s1386 + $0x120] sm:$0xf]
    %v1404 = vld [vmem:[%s1386 + $0x124] sm:$0x1]
    %v1405 = vld [vmem:[%s1386 + $0x128] sm:$0xf]
    %v1406 = vld [vmem:[%s1386 + $0x12c] sm:$0x1]
    %v1407 = vld [vmem:[%s1386 + $0x130] sm:$0xf]
    %v1408 = vld [vmem:[%s1386 + $0x134] sm:$0x1]
    %v1409 = vld [vmem:[%s1386 + $0x138] sm:$0xf]
    %v1410 = vld [vmem:[%s1386 + $0x13c] sm:$0x1]
    %v1411 = vld [vmem:[%s1386 + $0x140] sm:$0xf]
    %v1412 = vld [vmem:[%s1386 + $0x144] sm:$0x1]
    %v1413 = vld [vmem:[%s1386 + $0x148] sm:$0xf]
    %v1414 = vld [vmem:[%s1386 + $0x14c] sm:$0x1]
    %v1415 = vld [vmem:[%s1386 + $0x150] sm:$0xf]
    %v1416 = vld [vmem:[%s1386 + $0x154] sm:$0x1]
    %v1417 = vld [vmem:[%s1386 + $0x158] sm:$0xf]
    %v1418 = vld [vmem:[%s1386 + $0x15c] sm:$0x1]
    %vm1419 = vsmask.f32 3328
    %vm1420 = vsmask.f32 7440
    %vm1421 = vmor %vm1419, %vm1420
    %v1423 = vshrl.u32 %v1387, 16
    %v1425 = vrot.slane %v1423, 4
    %v1426 = vshll.u32 %v1387, 16
    %v1428 = vrot.slane %v1426, 5
    %v1429 = vor.u32 %v1425, %v1428
    %v1430 = vrot.slane %v1429, 4
    %v1432 = vshll.u32 %v1388, 16
    %v1434 = vrot.slane %v1432, 5
    %v1435 = vsel %vm1421, %v1430, %v1434
    %v1437 = vshrl.u32 %v1389, 16
    %v1439 = vrot.slane %v1437, 4
    %v1440 = vshll.u32 %v1389, 16
    %v1442 = vrot.slane %v1440, 5
    %v1443 = vor.u32 %v1439, %v1442
    %v1444 = vrot.slane %v1443, 4
    %v1446 = vshll.u32 %v1390, 16
    %v1448 = vrot.slane %v1446, 5
    %v1449 = vsel %vm1421, %v1444, %v1448
    %v1451 = vshrl.u32 %v1391, 16
    %v1453 = vrot.slane %v1451, 4
    %v1454 = vshll.u32 %v1391, 16
    %v1456 = vrot.slane %v1454, 5
    %v1457 = vor.u32 %v1453, %v1456
    %v1458 = vrot.slane %v1457, 4
    %v1460 = vshll.u32 %v1392, 16
    %v1462 = vrot.slane %v1460, 5
    %v1463 = vsel %vm1421, %v1458, %v1462
    %v1465 = vshrl.u32 %v1393, 16
    %v1467 = vrot.slane %v1465, 4
    %v1468 = vshll.u32 %v1393, 16
    %v1470 = vrot.slane %v1468, 5
    %v1471 = vor.u32 %v1467, %v1470
    %v1472 = vrot.slane %v1471, 4
    %v1474 = vshll.u32 %v1394, 16
    %v1476 = vrot.slane %v1474, 5
    %v1477 = vsel %vm1421, %v1472, %v1476
    %v1479 = vshrl.u32 %v1395, 16
    %v1481 = vrot.slane %v1479, 4
    %v1482 = vshll.u32 %v1395, 16
    %v1484 = vrot.slane %v1482, 5
    %v1485 = vor.u32 %v1481, %v1484
    %v1486 = vrot.slane %v1485, 4
    %v1488 = vshll.u32 %v1396, 16
    %v1490 = vrot.slane %v1488, 5
    %v1491 = vsel %vm1421, %v1486, %v1490
    %v1493 = vshrl.u32 %v1397, 16
    %v1495 = vrot.slane %v1493, 4
    %v1496 = vshll.u32 %v1397, 16
    %v1498 = vrot.slane %v1496, 5
    %v1499 = vor.u32 %v1495, %v1498
    %v1500 = vrot.slane %v1499, 4
    %v1502 = vshll.u32 %v1398, 16
    %v1504 = vrot.slane %v1502, 5
    %v1505 = vsel %vm1421, %v1500, %v1504
    %v1507 = vshrl.u32 %v1399, 16
    %v1509 = vrot.slane %v1507, 4
    %v1510 = vshll.u32 %v1399, 16
    %v1512 = vrot.slane %v1510, 5
    %v1513 = vor.u32 %v1509, %v1512
    %v1514 = vrot.slane %v1513, 4
    %v1516 = vshll.u32 %v1400, 16
    %v1518 = vrot.slane %v1516, 5
    %v1519 = vsel %vm1421, %v1514, %v1518
    %v1521 = vshrl.u32 %v1401, 16
    %v1523 = vrot.slane %v1521, 4
    %v1524 = vshll.u32 %v1401, 16
    %v1526 = vrot.slane %v1524, 5
    %v1527 = vor.u32 %v1523, %v1526
    %v1528 = vrot.slane %v1527, 4
    %v1530 = vshll.u32 %v1402, 16
    %v1532 = vrot.slane %v1530, 5
    %v1533 = vsel %vm1421, %v1528, %v1532
    %v1535 = vshrl.u32 %v1403, 16
    %v1537 = vrot.slane %v1535, 4
    %v1538 = vshll.u32 %v1403, 16
    %v1540 = vrot.slane %v1538, 5
    %v1541 = vor.u32 %v1537, %v1540
    %v1542 = vrot.slane %v1541, 4
    %v1544 = vshll.u32 %v1404, 16
    %v1546 = vrot.slane %v1544, 5
    %v1547 = vsel %vm1421, %v1542, %v1546
    %v1549 = vshrl.u32 %v1405, 16
    %v1551 = vrot.slane %v1549, 4
    %v1552 = vshll.u32 %v1405, 16
    %v1554 = vrot.slane %v1552, 5
    %v1555 = vor.u32 %v1551, %v1554
    %v1556 = vrot.slane %v1555, 4
    %v1558 = vshll.u32 %v1406, 16
    %v1560 = vrot.slane %v1558, 5
    %v1561 = vsel %vm1421, %v1556, %v1560
    %v1563 = vshrl.u32 %v1407, 16
    %v1565 = vrot.slane %v1563, 4
    %v1566 = vshll.u32 %v1407, 16
    %v1568 = vrot.slane %v1566, 5
    %v1569 = vor.u32 %v1565, %v1568
    %v1570 = vrot.slane %v1569, 4
    %v1572 = vshll.u32 %v1408, 16
    %v1574 = vrot.slane %v1572, 5
    %v1575 = vsel %vm1421, %v1570, %v1574
    %v1577 = vshrl.u32 %v1409, 16
    %v1579 = vrot.slane %v1577, 4
    %v1580 = vshll.u32 %v1409, 16
    %v1582 = vrot.slane %v1580, 5
    %v1583 = vor.u32 %v1579, %v1582
    %v1584 = vrot.slane %v1583, 4
    %v1586 = vshll.u32 %v1410, 16
    %v1588 = vrot.slane %v1586, 5
    %v1589 = vsel %vm1421, %v1584, %v1588
    %v1591 = vshrl.u32 %v1411, 16
    %v1593 = vrot.slane %v1591, 4
    %v1594 = vshll.u32 %v1411, 16
    %v1596 = vrot.slane %v1594, 5
    %v1597 = vor.u32 %v1593, %v1596
    %v1598 = vrot.slane %v1597, 4
    %v1600 = vshll.u32 %v1412, 16
    %v1602 = vrot.slane %v1600, 5
    %v1603 = vsel %vm1421, %v1598, %v1602
    %v1605 = vshrl.u32 %v1413, 16
    %v1607 = vrot.slane %v1605, 4
    %v1608 = vshll.u32 %v1413, 16
    %v1610 = vrot.slane %v1608, 5
    %v1611 = vor.u32 %v1607, %v1610
    %v1612 = vrot.slane %v1611, 4
    %v1614 = vshll.u32 %v1414, 16
    %v1616 = vrot.slane %v1614, 5
    %v1617 = vsel %vm1421, %v1612, %v1616
    %v1619 = vshrl.u32 %v1415, 16
    %v1621 = vrot.slane %v1619, 4
    %v1622 = vshll.u32 %v1415, 16
    %v1624 = vrot.slane %v1622, 5
    %v1625 = vor.u32 %v1621, %v1624
    %v1626 = vrot.slane %v1625, 4
    %v1628 = vshll.u32 %v1416, 16
    %v1630 = vrot.slane %v1628, 5
    %v1631 = vsel %vm1421, %v1626, %v1630
    %v1633 = vshrl.u32 %v1417, 16
    %v1635 = vrot.slane %v1633, 4
    %v1636 = vshll.u32 %v1417, 16
    %v1638 = vrot.slane %v1636, 5
    %v1639 = vor.u32 %v1635, %v1638
    %v1640 = vrot.slane %v1639, 4
    %v1642 = vshll.u32 %v1418, 16
    %v1644 = vrot.slane %v1642, 5
    %v1645 = vsel %vm1421, %v1640, %v1644
    %v1646 = vunpack.c.l.b16 %v1435
    %v1647 = vunpack.c.l.b16 %v1449
    %v1648 = vunpack.c.l.b16 %v1463
    %v1649 = vunpack.c.l.b16 %v1477
    %v1650 = vunpack.c.l.b16 %v1491
    %v1651 = vunpack.c.l.b16 %v1505
    %v1652 = vunpack.c.l.b16 %v1519
    %v1653 = vunpack.c.l.b16 %v1533
    %v1654 = vunpack.c.l.b16 %v1547
    %v1655 = vunpack.c.l.b16 %v1561
    %v1656 = vunpack.c.l.b16 %v1575
    %v1657 = vunpack.c.l.b16 %v1589
    %v1658 = vunpack.c.l.b16 %v1603
    %v1659 = vunpack.c.l.b16 %v1617
    %v1660 = vunpack.c.l.b16 %v1631
    %v1661 = vunpack.c.l.b16 %v1645
    %v1662 = vpack.c.b16 %v1647, %v1646
    %v1663 = vpack.c.b16 %v1649, %v1648
    %v1664 = vpack.c.b16 %v1651, %v1650
    %v1665 = vpack.c.b16 %v1653, %v1652
    %v1666 = vpack.c.b16 %v1655, %v1654
    %v1667 = vpack.c.b16 %v1657, %v1656
    %v1668 = vpack.c.b16 %v1659, %v1658
    %v1669 = vpack.c.b16 %v1661, %v1660
    %vm1670 = vcmask 31744
    %v1672 = vsel %vm1670, %v1662, 0
    %v1675 = vsel %vm1670, %v1663, 0
    %v1678 = vsel %vm1670, %v1664, 0
    %v1681 = vsel %vm1670, %v1665, 0
    %v1684 = vsel %vm1670, %v1666, 0
    %v1687 = vsel %vm1670, %v1667, 0
    %v1690 = vsel %vm1670, %v1668, 0
    %v1693 = vsel %vm1670, %v1669, 0
    %vm1695 = vcmask 1041408
    %v1697 = vsel %vm1695, %v1361, 0
    %1699 = vmatpush.bf16.msra.mxu0 0
    %1700 = vmatpush.bf16.msra.mxu0 0
    %1701 = vmatpush.bf16.msra.mxu0 0
    %1702 = vmatpush.bf16.msra.mxu0 0
    %1703 = vmatpush.bf16.msra.mxu0 0
    %1704 = vmatpush.bf16.msra.mxu0 0
    %1705 = vmatpush.bf16.msra.mxu0 0
    %1706 = vmatpush.bf16.msra.mxu0 %v1697
    %1707 = vmatmul.bf16.gmra.mxu0 %v1672
    %v1708 = vpop.f32.mrf.mxu0
    %v1709 = vadd.f32 0.0, %v1708
    %v1710 = vpop.f32.mrf.mxu0
    %v1711 = vadd.f32 0.0, %v1710
    %1712 = vmatmul.bf16.gmra.mxu0 %v1675
    %v1713 = vpop.f32.mrf.mxu0
    %v1714 = vadd.f32 0.0, %v1713
    %v1715 = vpop.f32.mrf.mxu0
    %v1716 = vadd.f32 0.0, %v1715
    %1717 = vmatmul.bf16.gmra.mxu0 %v1678
    %v1718 = vpop.f32.mrf.mxu0
    %v1719 = vadd.f32 0.0, %v1718
    %v1720 = vpop.f32.mrf.mxu0
    %v1721 = vadd.f32 0.0, %v1720
    %1722 = vmatmul.bf16.gmra.mxu0 %v1681
    %v1723 = vpop.f32.mrf.mxu0
    %v1724 = vadd.f32 0.0, %v1723
    %v1725 = vpop.f32.mrf.mxu0
    %v1726 = vadd.f32 0.0, %v1725
    %1727 = vmatmul.bf16.gmra.mxu0 %v1684
    %v1728 = vpop.f32.mrf.mxu0
    %v1729 = vadd.f32 0.0, %v1728
    %v1730 = vpop.f32.mrf.mxu0
    %v1731 = vadd.f32 0.0, %v1730
    %1732 = vmatmul.bf16.gmra.mxu0 %v1687
    %v1733 = vpop.f32.mrf.mxu0
    %v1734 = vadd.f32 0.0, %v1733
    %v1735 = vpop.f32.mrf.mxu0
    %v1736 = vadd.f32 0.0, %v1735
    %1737 = vmatmul.bf16.gmra.mxu0 %v1690
    %v1738 = vpop.f32.mrf.mxu0
    %v1739 = vadd.f32 0.0, %v1738
    %v1740 = vpop.f32.mrf.mxu0
    %v1741 = vadd.f32 0.0, %v1740
    %1742 = vmatmul.bf16.gmra.mxu0 %v1693
    %v1743 = vpop.f32.mrf.mxu0
    %v1744 = vadd.f32 0.0, %v1743
    %v1745 = vpop.f32.mrf.mxu0
    %v1746 = vadd.f32 0.0, %v1745
    %1747 = vdwg.mxu0
    %v1764 = vunpack.c.l.b16 %v1370
    %v1765 = vunpack.c.l.b16 %v1371
    %v1766 = vunpack.c.l.b16 %v1372
    %v1767 = vunpack.c.l.b16 %v1373
    %v1768 = vunpack.c.l.b16 %v1374
    %v1769 = vunpack.c.l.b16 %v1375
    %v1770 = vunpack.c.l.b16 %v1376
    %v1771 = vunpack.c.l.b16 %v1377
    %v1772 = vunpack.c.l.b16 %v1378
    %v1773 = vunpack.c.l.b16 %v1379
    %v1774 = vunpack.c.l.b16 %v1380
    %v1775 = vunpack.c.l.b16 %v1381
    %v1776 = vunpack.c.l.b16 %v1382
    %v1777 = vunpack.c.l.b16 %v1383
    %v1778 = vunpack.c.l.b16 %v1384
    %v1779 = vunpack.c.l.b16 %v1385
    %v1780 = vpack.c.b16 %v1765, %v1764
    %v1781 = vpack.c.b16 %v1767, %v1766
    %v1782 = vpack.c.b16 %v1769, %v1768
    %v1783 = vpack.c.b16 %v1771, %v1770
    %v1784 = vpack.c.b16 %v1773, %v1772
    %v1785 = vpack.c.b16 %v1775, %v1774
    %v1786 = vpack.c.b16 %v1777, %v1776
    %v1787 = vpack.c.b16 %v1779, %v1778
    %v1789 = vsel %vm1670, %v1780, 0
    %v1792 = vsel %vm1670, %v1781, 0
    %v1795 = vsel %vm1670, %v1782, 0
    %v1798 = vsel %vm1670, %v1783, 0
    %v1801 = vsel %vm1670, %v1784, 0
    %v1804 = vsel %vm1670, %v1785, 0
    %v1807 = vsel %vm1670, %v1786, 0
    %v1810 = vsel %vm1670, %v1787, 0
    %v1813 = vsel %vm1695, %v1360, 0
    %1815 = vmatpush.bf16.msra.mxu0 0
    %1816 = vmatpush.bf16.msra.mxu0 0
    %1817 = vmatpush.bf16.msra.mxu0 0
    %1818 = vmatpush.bf16.msra.mxu0 0
    %1819 = vmatpush.bf16.msra.mxu0 0
    %1820 = vmatpush.bf16.msra.mxu0 0
    %1821 = vmatpush.bf16.msra.mxu0 0
    %1822 = vmatpush.bf16.msra.mxu0 %v1813
    %1823 = vmatmul.bf16.gmra.mxu0 %v1789
    %v1824 = vpop.f32.mrf.mxu0
    %v1825 = vadd.f32 %v1709, %v1824
    %v1826 = vpop.f32.mrf.mxu0
    %v1827 = vadd.f32 %v1711, %v1826
    %1828 = vmatmul.bf16.gmra.mxu0 %v1792
    %v1829 = vpop.f32.mrf.mxu0
    %v1830 = vadd.f32 %v1714, %v1829
    %v1831 = vpop.f32.mrf.mxu0
    %v1832 = vadd.f32 %v1716, %v1831
    %1833 = vmatmul.bf16.gmra.mxu0 %v1795
    %v1834 = vpop.f32.mrf.mxu0
    %v1835 = vadd.f32 %v1719, %v1834
    %v1836 = vpop.f32.mrf.mxu0
    %v1837 = vadd.f32 %v1721, %v1836
    %1838 = vmatmul.bf16.gmra.mxu0 %v1798
    %v1839 = vpop.f32.mrf.mxu0
    %v1840 = vadd.f32 %v1724, %v1839
    %v1841 = vpop.f32.mrf.mxu0
    %v1842 = vadd.f32 %v1726, %v1841
    %1843 = vmatmul.bf16.gmra.mxu0 %v1801
    %v1844 = vpop.f32.mrf.mxu0
    %v1845 = vadd.f32 %v1729, %v1844
    %v1846 = vpop.f32.mrf.mxu0
    %v1847 = vadd.f32 %v1731, %v1846
    %1848 = vmatmul.bf16.gmra.mxu0 %v1804
    %v1849 = vpop.f32.mrf.mxu0
    %v1850 = vadd.f32 %v1734, %v1849
    %v1851 = vpop.f32.mrf.mxu0
    %v1852 = vadd.f32 %v1736, %v1851
    %1853 = vmatmul.bf16.gmra.mxu0 %v1807
    %v1854 = vpop.f32.mrf.mxu0
    %v1855 = vadd.f32 %v1739, %v1854
    %v1856 = vpop.f32.mrf.mxu0
    %v1857 = vadd.f32 %v1741, %v1856
    %1858 = vmatmul.bf16.gmra.mxu0 %v1810
    %v1859 = vpop.f32.mrf.mxu0
    %v1860 = vadd.f32 %v1744, %v1859
    %v1861 = vpop.f32.mrf.mxu0
    %v1862 = vadd.f32 %v1746, %v1861
    %1863 = vdwg.mxu0
    %v1864 = vld [vmem:[%s1369] sm:$0xf]
    %v1865 = vld [vmem:[%s1369 + $0x4] sm:$0x1]
    %v1866 = vld [vmem:[%s1369 + $0x8] sm:$0xf]
    %v1867 = vld [vmem:[%s1369 + $0xc] sm:$0x1]
    %v1868 = vld [vmem:[%s1369 + $0x10] sm:$0xf]
    %v1869 = vld [vmem:[%s1369 + $0x14] sm:$0x1]
    %v1870 = vld [vmem:[%s1369 + $0x18] sm:$0xf]
    %v1871 = vld [vmem:[%s1369 + $0x1c] sm:$0x1]
    %v1872 = vld [vmem:[%s1369 + $0x20] sm:$0xf]
    %v1873 = vld [vmem:[%s1369 + $0x24] sm:$0x1]
    %v1874 = vld [vmem:[%s1369 + $0x28] sm:$0xf]
    %v1875 = vld [vmem:[%s1369 + $0x2c] sm:$0x1]
    %v1876 = vld [vmem:[%s1369 + $0x30] sm:$0xf]
    %v1877 = vld [vmem:[%s1369 + $0x34] sm:$0x1]
    %v1878 = vld [vmem:[%s1369 + $0x38] sm:$0xf]
    %v1879 = vld [vmem:[%s1369 + $0x3c] sm:$0x1]
    %v1880 = vld [vmem:[%s1369 + $0x120] sm:$0xf]
    %v1881 = vld [vmem:[%s1369 + $0x124] sm:$0x1]
    %v1882 = vld [vmem:[%s1369 + $0x128] sm:$0xf]
    %v1883 = vld [vmem:[%s1369 + $0x12c] sm:$0x1]
    %v1884 = vld [vmem:[%s1369 + $0x130] sm:$0xf]
    %v1885 = vld [vmem:[%s1369 + $0x134] sm:$0x1]
    %v1886 = vld [vmem:[%s1369 + $0x138] sm:$0xf]
    %v1887 = vld [vmem:[%s1369 + $0x13c] sm:$0x1]
    %v1888 = vld [vmem:[%s1369 + $0x140] sm:$0xf]
    %v1889 = vld [vmem:[%s1369 + $0x144] sm:$0x1]
    %v1890 = vld [vmem:[%s1369 + $0x148] sm:$0xf]
    %v1891 = vld [vmem:[%s1369 + $0x14c] sm:$0x1]
    %v1892 = vld [vmem:[%s1369 + $0x150] sm:$0xf]
    %v1893 = vld [vmem:[%s1369 + $0x154] sm:$0x1]
    %v1894 = vld [vmem:[%s1369 + $0x158] sm:$0xf]
    %v1895 = vld [vmem:[%s1369 + $0x15c] sm:$0x1]
    %v1897 = vshrl.u32 %v1864, 16
    %v1899 = vrot.slane %v1897, 4
    %v1900 = vshll.u32 %v1864, 16
    %v1902 = vrot.slane %v1900, 5
    %v1903 = vor.u32 %v1899, %v1902
    %v1904 = vrot.slane %v1903, 4
    %v1906 = vshll.u32 %v1865, 16
    %v1908 = vrot.slane %v1906, 5
    %v1909 = vsel %vm1421, %v1904, %v1908
    %v1911 = vshrl.u32 %v1866, 16
    %v1913 = vrot.slane %v1911, 4
    %v1914 = vshll.u32 %v1866, 16
    %v1916 = vrot.slane %v1914, 5
    %v1917 = vor.u32 %v1913, %v1916
    %v1918 = vrot.slane %v1917, 4
    %v1920 = vshll.u32 %v1867, 16
    %v1922 = vrot.slane %v1920, 5
    %v1923 = vsel %vm1421, %v1918, %v1922
    %v1925 = vshrl.u32 %v1868, 16
    %v1927 = vrot.slane %v1925, 4
    %v1928 = vshll.u32 %v1868, 16
    %v1930 = vrot.slane %v1928, 5
    %v1931 = vor.u32 %v1927, %v1930
    %v1932 = vrot.slane %v1931, 4
    %v1934 = vshll.u32 %v1869, 16
    %v1936 = vrot.slane %v1934, 5
    %v1937 = vsel %vm1421, %v1932, %v1936
    %v1939 = vshrl.u32 %v1870, 16
    %v1941 = vrot.slane %v1939, 4
    %v1942 = vshll.u32 %v1870, 16
    %v1944 = vrot.slane %v1942, 5
    %v1945 = vor.u32 %v1941, %v1944
    %v1946 = vrot.slane %v1945, 4
    %v1948 = vshll.u32 %v1871, 16
    %v1950 = vrot.slane %v1948, 5
    %v1951 = vsel %vm1421, %v1946, %v1950
    %v1953 = vshrl.u32 %v1872, 16
    %v1955 = vrot.slane %v1953, 4
    %v1956 = vshll.u32 %v1872, 16
    %v1958 = vrot.slane %v1956, 5
    %v1959 = vor.u32 %v1955, %v1958
    %v1960 = vrot.slane %v1959, 4
    %v1962 = vshll.u32 %v1873, 16
    %v1964 = vrot.slane %v1962, 5
    %v1965 = vsel %vm1421, %v1960, %v1964
    %v1967 = vshrl.u32 %v1874, 16
    %v1969 = vrot.slane %v1967, 4
    %v1970 = vshll.u32 %v1874, 16
    %v1972 = vrot.slane %v1970, 5
    %v1973 = vor.u32 %v1969, %v1972
    %v1974 = vrot.slane %v1973, 4
    %v1976 = vshll.u32 %v1875, 16
    %v1978 = vrot.slane %v1976, 5
    %v1979 = vsel %vm1421, %v1974, %v1978
    %v1981 = vshrl.u32 %v1876, 16
    %v1983 = vrot.slane %v1981, 4
    %v1984 = vshll.u32 %v1876, 16
    %v1986 = vrot.slane %v1984, 5
    %v1987 = vor.u32 %v1983, %v1986
    %v1988 = vrot.slane %v1987, 4
    %v1990 = vshll.u32 %v1877, 16
    %v1992 = vrot.slane %v1990, 5
    %v1993 = vsel %vm1421, %v1988, %v1992
    %v1995 = vshrl.u32 %v1878, 16
    %v1997 = vrot.slane %v1995, 4
    %v1998 = vshll.u32 %v1878, 16
    %v2000 = vrot.slane %v1998, 5
    %v2001 = vor.u32 %v1997, %v2000
    %v2002 = vrot.slane %v2001, 4
    %v2004 = vshll.u32 %v1879, 16
    %v2006 = vrot.slane %v2004, 5
    %v2007 = vsel %vm1421, %v2002, %v2006
    %v2009 = vshrl.u32 %v1880, 16
    %v2011 = vrot.slane %v2009, 4
    %v2012 = vshll.u32 %v1880, 16
    %v2014 = vrot.slane %v2012, 5
    %v2015 = vor.u32 %v2011, %v2014
    %v2016 = vrot.slane %v2015, 4
    %v2018 = vshll.u32 %v1881, 16
    %v2020 = vrot.slane %v2018, 5
    %v2021 = vsel %vm1421, %v2016, %v2020
    %v2023 = vshrl.u32 %v1882, 16
    %v2025 = vrot.slane %v2023, 4
    %v2026 = vshll.u32 %v1882, 16
    %v2028 = vrot.slane %v2026, 5
    %v2029 = vor.u32 %v2025, %v2028
    %v2030 = vrot.slane %v2029, 4
    %v2032 = vshll.u32 %v1883, 16
    %v2034 = vrot.slane %v2032, 5
    %v2035 = vsel %vm1421, %v2030, %v2034
    %v2037 = vshrl.u32 %v1884, 16
    %v2039 = vrot.slane %v2037, 4
    %v2040 = vshll.u32 %v1884, 16
    %v2042 = vrot.slane %v2040, 5
    %v2043 = vor.u32 %v2039, %v2042
    %v2044 = vrot.slane %v2043, 4
    %v2046 = vshll.u32 %v1885, 16
    %v2048 = vrot.slane %v2046, 5
    %v2049 = vsel %vm1421, %v2044, %v2048
    %v2051 = vshrl.u32 %v1886, 16
    %v2053 = vrot.slane %v2051, 4
    %v2054 = vshll.u32 %v1886, 16
    %v2056 = vrot.slane %v2054, 5
    %v2057 = vor.u32 %v2053, %v2056
    %v2058 = vrot.slane %v2057, 4
    %v2060 = vshll.u32 %v1887, 16
    %v2062 = vrot.slane %v2060, 5
    %v2063 = vsel %vm1421, %v2058, %v2062
    %v2065 = vshrl.u32 %v1888, 16
    %v2067 = vrot.slane %v2065, 4
    %v2068 = vshll.u32 %v1888, 16
    %v2070 = vrot.slane %v2068, 5
    %v2071 = vor.u32 %v2067, %v2070
    %v2072 = vrot.slane %v2071, 4
    %v2074 = vshll.u32 %v1889, 16
    %v2076 = vrot.slane %v2074, 5
    %v2077 = vsel %vm1421, %v2072, %v2076
    %v2079 = vshrl.u32 %v1890, 16
    %v2081 = vrot.slane %v2079, 4
    %v2082 = vshll.u32 %v1890, 16
    %v2084 = vrot.slane %v2082, 5
    %v2085 = vor.u32 %v2081, %v2084
    %v2086 = vrot.slane %v2085, 4
    %v2088 = vshll.u32 %v1891, 16
    %v2090 = vrot.slane %v2088, 5
    %v2091 = vsel %vm1421, %v2086, %v2090
    %v2093 = vshrl.u32 %v1892, 16
    %v2095 = vrot.slane %v2093, 4
    %v2096 = vshll.u32 %v1892, 16
    %v2098 = vrot.slane %v2096, 5
    %v2099 = vor.u32 %v2095, %v2098
    %v2100 = vrot.slane %v2099, 4
    %v2102 = vshll.u32 %v1893, 16
    %v2104 = vrot.slane %v2102, 5
    %v2105 = vsel %vm1421, %v2100, %v2104
    %v2107 = vshrl.u32 %v1894, 16
    %v2109 = vrot.slane %v2107, 4
    %v2110 = vshll.u32 %v1894, 16
    %v2112 = vrot.slane %v2110, 5
    %v2113 = vor.u32 %v2109, %v2112
    %v2114 = vrot.slane %v2113, 4
    %v2116 = vshll.u32 %v1895, 16
    %v2118 = vrot.slane %v2116, 5
    %v2119 = vsel %vm1421, %v2114, %v2118
    %v2120 = vunpack.c.l.b16 %v1909
    %v2121 = vunpack.c.l.b16 %v1923
    %v2122 = vunpack.c.l.b16 %v1937
    %v2123 = vunpack.c.l.b16 %v1951
    %v2124 = vunpack.c.l.b16 %v1965
    %v2125 = vunpack.c.l.b16 %v1979
    %v2126 = vunpack.c.l.b16 %v1993
    %v2127 = vunpack.c.l.b16 %v2007
    %v2128 = vunpack.c.l.b16 %v2021
    %v2129 = vunpack.c.l.b16 %v2035
    %v2130 = vunpack.c.l.b16 %v2049
    %v2131 = vunpack.c.l.b16 %v2063
    %v2132 = vunpack.c.l.b16 %v2077
    %v2133 = vunpack.c.l.b16 %v2091
    %v2134 = vunpack.c.l.b16 %v2105
    %v2135 = vunpack.c.l.b16 %v2119
    %v2136 = vpack.c.b16 %v2121, %v2120
    %v2137 = vpack.c.b16 %v2123, %v2122
    %v2138 = vpack.c.b16 %v2125, %v2124
    %v2139 = vpack.c.b16 %v2127, %v2126
    %v2140 = vpack.c.b16 %v2129, %v2128
    %v2141 = vpack.c.b16 %v2131, %v2130
    %v2142 = vpack.c.b16 %v2133, %v2132
    %v2143 = vpack.c.b16 %v2135, %v2134
    %v2145 = vsel %vm1670, %v2136, 0
    %v2148 = vsel %vm1670, %v2137, 0
    %v2151 = vsel %vm1670, %v2138, 0
    %v2154 = vsel %vm1670, %v2139, 0
    %v2157 = vsel %vm1670, %v2140, 0
    %v2160 = vsel %vm1670, %v2141, 0
    %v2163 = vsel %vm1670, %v2142, 0
    %v2166 = vsel %vm1670, %v2143, 0
    %v2169 = vsel %vm1695, %v1362, 0
    %2171 = vmatpush.bf16.msra.mxu0 0
    %2172 = vmatpush.bf16.msra.mxu0 0
    %2173 = vmatpush.bf16.msra.mxu0 0
    %2174 = vmatpush.bf16.msra.mxu0 0
    %2175 = vmatpush.bf16.msra.mxu0 0
    %2176 = vmatpush.bf16.msra.mxu0 0
    %2177 = vmatpush.bf16.msra.mxu0 0
    %2178 = vmatpush.bf16.msra.mxu0 %v2169
    %2179 = vmatmul.bf16.gmra.mxu0 %v2145
    %v2180 = vpop.f32.mrf.mxu0
    %v2181 = vadd.f32 0.0, %v2180
    %v2182 = vpop.f32.mrf.mxu0
    %v2183 = vadd.f32 0.0, %v2182
    %2184 = vmatmul.bf16.gmra.mxu0 %v2148
    %v2185 = vpop.f32.mrf.mxu0
    %v2186 = vadd.f32 0.0, %v2185
    %v2187 = vpop.f32.mrf.mxu0
    %v2188 = vadd.f32 0.0, %v2187
    %2189 = vmatmul.bf16.gmra.mxu0 %v2151
    %v2190 = vpop.f32.mrf.mxu0
    %v2191 = vadd.f32 0.0, %v2190
    %v2192 = vpop.f32.mrf.mxu0
    %v2193 = vadd.f32 0.0, %v2192
    %2194 = vmatmul.bf16.gmra.mxu0 %v2154
    %v2195 = vpop.f32.mrf.mxu0
    %v2196 = vadd.f32 0.0, %v2195
    %v2197 = vpop.f32.mrf.mxu0
    %v2198 = vadd.f32 0.0, %v2197
    %2199 = vmatmul.bf16.gmra.mxu0 %v2157
    %v2200 = vpop.f32.mrf.mxu0
    %v2201 = vadd.f32 0.0, %v2200
    %v2202 = vpop.f32.mrf.mxu0
    %v2203 = vadd.f32 0.0, %v2202
    %2204 = vmatmul.bf16.gmra.mxu0 %v2160
    %v2205 = vpop.f32.mrf.mxu0
    %v2206 = vadd.f32 0.0, %v2205
    %v2207 = vpop.f32.mrf.mxu0
    %v2208 = vadd.f32 0.0, %v2207
    %2209 = vmatmul.bf16.gmra.mxu0 %v2163
    %v2210 = vpop.f32.mrf.mxu0
    %v2211 = vadd.f32 0.0, %v2210
    %v2212 = vpop.f32.mrf.mxu0
    %v2213 = vadd.f32 0.0, %v2212
    %2214 = vmatmul.bf16.gmra.mxu0 %v2166
    %v2215 = vpop.f32.mrf.mxu0
    %v2216 = vadd.f32 0.0, %v2215
    %v2217 = vpop.f32.mrf.mxu0
    %v2218 = vadd.f32 0.0, %v2217
    %2219 = vdwg.mxu0
    %v2220 = vadd.f32 %v1825, %v2181
    %v2221 = vadd.f32 %v1827, %v2183
    %v2222 = vadd.f32 %v1830, %v2186
    %v2223 = vadd.f32 %v1832, %v2188
    %v2224 = vadd.f32 %v1835, %v2191
    %v2225 = vadd.f32 %v1837, %v2193
    %v2226 = vadd.f32 %v1840, %v2196
    %v2227 = vadd.f32 %v1842, %v2198
    %v2228 = vadd.f32 %v1845, %v2201
    %v2229 = vadd.f32 %v1847, %v2203
    %v2230 = vadd.f32 %v1850, %v2206
    %v2231 = vadd.f32 %v1852, %v2208
    %v2232 = vadd.f32 %v1855, %v2211
    %v2233 = vadd.f32 %v1857, %v2213
    %v2234 = vadd.f32 %v1860, %v2216
    %v2235 = vadd.f32 %v1862, %v2218
    %s2236 = scalar_lea.vmem [#allocation2], 80
    %v2237 = vld [vmem:[%s2236] sm:$0xf]
    %v2238 = vld [vmem:[%s2236 + $0x8] sm:$0xf]
    %v2239 = vld [vmem:[%s2236 + $0x10] sm:$0xf]
    %v2240 = vld [vmem:[%s2236 + $0x18] sm:$0xf]
    %v2241 = vld [vmem:[%s2236 + $0x20] sm:$0xf]
    %v2242 = vld [vmem:[%s2236 + $0x28] sm:$0xf]
    %v2243 = vld [vmem:[%s2236 + $0x30] sm:$0xf]
    %v2244 = vld [vmem:[%s2236 + $0x38] sm:$0xf]
    %v2245 = vld [vmem:[%s2236 + $0x120] sm:$0xf]
    %v2246 = vld [vmem:[%s2236 + $0x128] sm:$0xf]
    %v2247 = vld [vmem:[%s2236 + $0x130] sm:$0xf]
    %v2248 = vld [vmem:[%s2236 + $0x138] sm:$0xf]
    %v2249 = vld [vmem:[%s2236 + $0x140] sm:$0xf]
    %v2250 = vld [vmem:[%s2236 + $0x148] sm:$0xf]
    %v2251 = vld [vmem:[%s2236 + $0x150] sm:$0xf]
    %v2252 = vld [vmem:[%s2236 + $0x158] sm:$0xf]
    %v2269 = vunpack.c.l.b16 %v2237
    %v2270 = vunpack.c.l.b16 %v2238
    %v2271 = vunpack.c.l.b16 %v2239
    %v2272 = vunpack.c.l.b16 %v2240
    %v2273 = vunpack.c.l.b16 %v2241
    %v2274 = vunpack.c.l.b16 %v2242
    %v2275 = vunpack.c.l.b16 %v2243
    %v2276 = vunpack.c.l.b16 %v2244
    %v2277 = vunpack.c.l.b16 %v2245
    %v2278 = vunpack.c.l.b16 %v2246
    %v2279 = vunpack.c.l.b16 %v2247
    %v2280 = vunpack.c.l.b16 %v2248
    %v2281 = vunpack.c.l.b16 %v2249
    %v2282 = vunpack.c.l.b16 %v2250
    %v2283 = vunpack.c.l.b16 %v2251
    %v2284 = vunpack.c.l.b16 %v2252
    %v2285 = vpack.c.b16 %v2270, %v2269
    %v2286 = vpack.c.b16 %v2272, %v2271
    %v2287 = vpack.c.b16 %v2274, %v2273
    %v2288 = vpack.c.b16 %v2276, %v2275
    %v2289 = vpack.c.b16 %v2278, %v2277
    %v2290 = vpack.c.b16 %v2280, %v2279
    %v2291 = vpack.c.b16 %v2282, %v2281
    %v2292 = vpack.c.b16 %v2284, %v2283
    %v2294 = vsel %vm1670, %v2285, 0
    %v2297 = vsel %vm1670, %v2286, 0
    %v2300 = vsel %vm1670, %v2287, 0
    %v2303 = vsel %vm1670, %v2288, 0
    %v2306 = vsel %vm1670, %v2289, 0
    %v2309 = vsel %vm1670, %v2290, 0
    %v2312 = vsel %vm1670, %v2291, 0
    %v2315 = vsel %vm1670, %v2292, 0
    %v2318 = vsel %vm1695, %v1363, 0
    %2320 = vmatpush.bf16.msra.mxu0 0
    %2321 = vmatpush.bf16.msra.mxu0 0
    %2322 = vmatpush.bf16.msra.mxu0 0
    %2323 = vmatpush.bf16.msra.mxu0 0
    %2324 = vmatpush.bf16.msra.mxu0 0
    %2325 = vmatpush.bf16.msra.mxu0 0
    %2326 = vmatpush.bf16.msra.mxu0 0
    %2327 = vmatpush.bf16.msra.mxu0 %v2318
    %2328 = vmatmul.bf16.gmra.mxu0 %v2294
    %v2329 = vpop.f32.mrf.mxu0
    %v2330 = vadd.f32 0.0, %v2329
    %v2331 = vpop.f32.mrf.mxu0
    %v2332 = vadd.f32 0.0, %v2331
    %2333 = vmatmul.bf16.gmra.mxu0 %v2297
    %v2334 = vpop.f32.mrf.mxu0
    %v2335 = vadd.f32 0.0, %v2334
    %v2336 = vpop.f32.mrf.mxu0
    %v2337 = vadd.f32 0.0, %v2336
    %2338 = vmatmul.bf16.gmra.mxu0 %v2300
    %v2339 = vpop.f32.mrf.mxu0
    %v2340 = vadd.f32 0.0, %v2339
    %v2341 = vpop.f32.mrf.mxu0
    %v2342 = vadd.f32 0.0, %v2341
    %2343 = vmatmul.bf16.gmra.mxu0 %v2303
    %v2344 = vpop.f32.mrf.mxu0
    %v2345 = vadd.f32 0.0, %v2344
    %v2346 = vpop.f32.mrf.mxu0
    %v2347 = vadd.f32 0.0, %v2346
    %2348 = vmatmul.bf16.gmra.mxu0 %v2306
    %v2349 = vpop.f32.mrf.mxu0
    %v2350 = vadd.f32 0.0, %v2349
    %v2351 = vpop.f32.mrf.mxu0
    %v2352 = vadd.f32 0.0, %v2351
    %2353 = vmatmul.bf16.gmra.mxu0 %v2309
    %v2354 = vpop.f32.mrf.mxu0
    %v2355 = vadd.f32 0.0, %v2354
    %v2356 = vpop.f32.mrf.mxu0
    %v2357 = vadd.f32 0.0, %v2356
    %2358 = vmatmul.bf16.gmra.mxu0 %v2312
    %v2359 = vpop.f32.mrf.mxu0
    %v2360 = vadd.f32 0.0, %v2359
    %v2361 = vpop.f32.mrf.mxu0
    %v2362 = vadd.f32 0.0, %v2361
    %2363 = vmatmul.bf16.gmra.mxu0 %v2315
    %v2364 = vpop.f32.mrf.mxu0
    %v2365 = vadd.f32 0.0, %v2364
    %v2366 = vpop.f32.mrf.mxu0
    %v2367 = vadd.f32 0.0, %v2366
    %2368 = vdwg.mxu0
    %v2369 = vadd.f32 %v2220, %v2330
    %v2370 = vadd.f32 %v2221, %v2332
    %v2371 = vadd.f32 %v2222, %v2335
    %v2372 = vadd.f32 %v2223, %v2337
    %v2373 = vadd.f32 %v2224, %v2340
    %v2374 = vadd.f32 %v2225, %v2342
    %v2375 = vadd.f32 %v2226, %v2345
    %v2376 = vadd.f32 %v2227, %v2347
    %v2377 = vadd.f32 %v2228, %v2350
    %v2378 = vadd.f32 %v2229, %v2352
    %v2379 = vadd.f32 %v2230, %v2355
    %v2380 = vadd.f32 %v2231, %v2357
    %v2381 = vadd.f32 %v2232, %v2360
    %v2382 = vadd.f32 %v2233, %v2362
    %v2383 = vadd.f32 %v2234, %v2365
    %v2384 = vadd.f32 %v2235, %v2367
    %v2385 = vld [vmem:[%s972] sm:$0xf]
    %v2386 = vld [vmem:[%s972 + $0x4] sm:$0x1]
    %v2387 = vld [vmem:[%s972 + $0x8] sm:$0xf]
    %v2388 = vld [vmem:[%s972 + $0xc] sm:$0x1]
    %v2389 = vld [vmem:[%s972 + $0x10] sm:$0xf]
    %v2390 = vld [vmem:[%s972 + $0x14] sm:$0x1]
    %v2391 = vld [vmem:[%s972 + $0x18] sm:$0xf]
    %v2392 = vld [vmem:[%s972 + $0x1c] sm:$0x1]
    %v2393 = vld [vmem:[%s972 + $0x20] sm:$0xf]
    %v2394 = vld [vmem:[%s972 + $0x24] sm:$0x1]
    %v2395 = vld [vmem:[%s972 + $0x28] sm:$0xf]
    %v2396 = vld [vmem:[%s972 + $0x2c] sm:$0x1]
    %v2397 = vld [vmem:[%s972 + $0x30] sm:$0xf]
    %v2398 = vld [vmem:[%s972 + $0x34] sm:$0x1]
    %v2399 = vld [vmem:[%s972 + $0x38] sm:$0xf]
    %v2400 = vld [vmem:[%s972 + $0x3c] sm:$0x1]
    %v2401 = vld [vmem:[%s972 + $0x120] sm:$0xf]
    %v2402 = vld [vmem:[%s972 + $0x124] sm:$0x1]
    %v2403 = vld [vmem:[%s972 + $0x128] sm:$0xf]
    %v2404 = vld [vmem:[%s972 + $0x12c] sm:$0x1]
    %v2405 = vld [vmem:[%s972 + $0x130] sm:$0xf]
    %v2406 = vld [vmem:[%s972 + $0x134] sm:$0x1]
    %v2407 = vld [vmem:[%s972 + $0x138] sm:$0xf]
    %v2408 = vld [vmem:[%s972 + $0x13c] sm:$0x1]
    %v2409 = vld [vmem:[%s972 + $0x140] sm:$0xf]
    %v2410 = vld [vmem:[%s972 + $0x144] sm:$0x1]
    %v2411 = vld [vmem:[%s972 + $0x148] sm:$0xf]
    %v2412 = vld [vmem:[%s972 + $0x14c] sm:$0x1]
    %v2413 = vld [vmem:[%s972 + $0x150] sm:$0xf]
    %v2414 = vld [vmem:[%s972 + $0x154] sm:$0x1]
    %v2415 = vld [vmem:[%s972 + $0x158] sm:$0xf]
    %v2416 = vld [vmem:[%s972 + $0x15c] sm:$0x1]
    %v2418 = vshrl.u32 %v2385, 16
    %v2420 = vrot.slane %v2418, 4
    %v2421 = vshll.u32 %v2385, 16
    %v2423 = vrot.slane %v2421, 5
    %v2424 = vor.u32 %v2420, %v2423
    %v2425 = vrot.slane %v2424, 4
    %v2427 = vshll.u32 %v2386, 16
    %v2429 = vrot.slane %v2427, 5
    %v2430 = vsel %vm1421, %v2425, %v2429
    %v2432 = vshrl.u32 %v2387, 16
    %v2434 = vrot.slane %v2432, 4
    %v2435 = vshll.u32 %v2387, 16
    %v2437 = vrot.slane %v2435, 5
    %v2438 = vor.u32 %v2434, %v2437
    %v2439 = vrot.slane %v2438, 4
    %v2441 = vshll.u32 %v2388, 16
    %v2443 = vrot.slane %v2441, 5
    %v2444 = vsel %vm1421, %v2439, %v2443
    %v2446 = vshrl.u32 %v2389, 16
    %v2448 = vrot.slane %v2446, 4
    %v2449 = vshll.u32 %v2389, 16
    %v2451 = vrot.slane %v2449, 5
    %v2452 = vor.u32 %v2448, %v2451
    %v2453 = vrot.slane %v2452, 4
    %v2455 = vshll.u32 %v2390, 16
    %v2457 = vrot.slane %v2455, 5
    %v2458 = vsel %vm1421, %v2453, %v2457
    %v2460 = vshrl.u32 %v2391, 16
    %v2462 = vrot.slane %v2460, 4
    %v2463 = vshll.u32 %v2391, 16
    %v2465 = vrot.slane %v2463, 5
    %v2466 = vor.u32 %v2462, %v2465
    %v2467 = vrot.slane %v2466, 4
    %v2469 = vshll.u32 %v2392, 16
    %v2471 = vrot.slane %v2469, 5
    %v2472 = vsel %vm1421, %v2467, %v2471
    %v2474 = vshrl.u32 %v2393, 16
    %v2476 = vrot.slane %v2474, 4
    %v2477 = vshll.u32 %v2393, 16
    %v2479 = vrot.slane %v2477, 5
    %v2480 = vor.u32 %v2476, %v2479
    %v2481 = vrot.slane %v2480, 4
    %v2483 = vshll.u32 %v2394, 16
    %v2485 = vrot.slane %v2483, 5
    %v2486 = vsel %vm1421, %v2481, %v2485
    %v2488 = vshrl.u32 %v2395, 16
    %v2490 = vrot.slane %v2488, 4
    %v2491 = vshll.u32 %v2395, 16
    %v2493 = vrot.slane %v2491, 5
    %v2494 = vor.u32 %v2490, %v2493
    %v2495 = vrot.slane %v2494, 4
    %v2497 = vshll.u32 %v2396, 16
    %v2499 = vrot.slane %v2497, 5
    %v2500 = vsel %vm1421, %v2495, %v2499
    %v2502 = vshrl.u32 %v2397, 16
    %v2504 = vrot.slane %v2502, 4
    %v2505 = vshll.u32 %v2397, 16
    %v2507 = vrot.slane %v2505, 5
    %v2508 = vor.u32 %v2504, %v2507
    %v2509 = vrot.slane %v2508, 4
    %v2511 = vshll.u32 %v2398, 16
    %v2513 = vrot.slane %v2511, 5
    %v2514 = vsel %vm1421, %v2509, %v2513
    %v2516 = vshrl.u32 %v2399, 16
    %v2518 = vrot.slane %v2516, 4
    %v2519 = vshll.u32 %v2399, 16
    %v2521 = vrot.slane %v2519, 5
    %v2522 = vor.u32 %v2518, %v2521
    %v2523 = vrot.slane %v2522, 4
    %v2525 = vshll.u32 %v2400, 16
    %v2527 = vrot.slane %v2525, 5
    %v2528 = vsel %vm1421, %v2523, %v2527
    %v2530 = vshrl.u32 %v2401, 16
    %v2532 = vrot.slane %v2530, 4
    %v2533 = vshll.u32 %v2401, 16
    %v2535 = vrot.slane %v2533, 5
    %v2536 = vor.u32 %v2532, %v2535
    %v2537 = vrot.slane %v2536, 4
    %v2539 = vshll.u32 %v2402, 16
    %v2541 = vrot.slane %v2539, 5
    %v2542 = vsel %vm1421, %v2537, %v2541
    %v2544 = vshrl.u32 %v2403, 16
    %v2546 = vrot.slane %v2544, 4
    %v2547 = vshll.u32 %v2403, 16
    %v2549 = vrot.slane %v2547, 5
    %v2550 = vor.u32 %v2546, %v2549
    %v2551 = vrot.slane %v2550, 4
    %v2553 = vshll.u32 %v2404, 16
    %v2555 = vrot.slane %v2553, 5
    %v2556 = vsel %vm1421, %v2551, %v2555
    %v2558 = vshrl.u32 %v2405, 16
    %v2560 = vrot.slane %v2558, 4
    %v2561 = vshll.u32 %v2405, 16
    %v2563 = vrot.slane %v2561, 5
    %v2564 = vor.u32 %v2560, %v2563
    %v2565 = vrot.slane %v2564, 4
    %v2567 = vshll.u32 %v2406, 16
    %v2569 = vrot.slane %v2567, 5
    %v2570 = vsel %vm1421, %v2565, %v2569
    %v2572 = vshrl.u32 %v2407, 16
    %v2574 = vrot.slane %v2572, 4
    %v2575 = vshll.u32 %v2407, 16
    %v2577 = vrot.slane %v2575, 5
    %v2578 = vor.u32 %v2574, %v2577
    %v2579 = vrot.slane %v2578, 4
    %v2581 = vshll.u32 %v2408, 16
    %v2583 = vrot.slane %v2581, 5
    %v2584 = vsel %vm1421, %v2579, %v2583
    %v2586 = vshrl.u32 %v2409, 16
    %v2588 = vrot.slane %v2586, 4
    %v2589 = vshll.u32 %v2409, 16
    %v2591 = vrot.slane %v2589, 5
    %v2592 = vor.u32 %v2588, %v2591
    %v2593 = vrot.slane %v2592, 4
    %v2595 = vshll.u32 %v2410, 16
    %v2597 = vrot.slane %v2595, 5
    %v2598 = vsel %vm1421, %v2593, %v2597
    %v2600 = vshrl.u32 %v2411, 16
    %v2602 = vrot.slane %v2600, 4
    %v2603 = vshll.u32 %v2411, 16
    %v2605 = vrot.slane %v2603, 5
    %v2606 = vor.u32 %v2602, %v2605
    %v2607 = vrot.slane %v2606, 4
    %v2609 = vshll.u32 %v2412, 16
    %v2611 = vrot.slane %v2609, 5
    %v2612 = vsel %vm1421, %v2607, %v2611
    %v2614 = vshrl.u32 %v2413, 16
    %v2616 = vrot.slane %v2614, 4
    %v2617 = vshll.u32 %v2413, 16
    %v2619 = vrot.slane %v2617, 5
    %v2620 = vor.u32 %v2616, %v2619
    %v2621 = vrot.slane %v2620, 4
    %v2623 = vshll.u32 %v2414, 16
    %v2625 = vrot.slane %v2623, 5
    %v2626 = vsel %vm1421, %v2621, %v2625
    %v2628 = vshrl.u32 %v2415, 16
    %v2630 = vrot.slane %v2628, 4
    %v2631 = vshll.u32 %v2415, 16
    %v2633 = vrot.slane %v2631, 5
    %v2634 = vor.u32 %v2630, %v2633
    %v2635 = vrot.slane %v2634, 4
    %v2637 = vshll.u32 %v2416, 16
    %v2639 = vrot.slane %v2637, 5
    %v2640 = vsel %vm1421, %v2635, %v2639
    %v2641 = vunpack.c.l.b16 %v2430
    %v2642 = vunpack.c.l.b16 %v2444
    %v2643 = vunpack.c.l.b16 %v2458
    %v2644 = vunpack.c.l.b16 %v2472
    %v2645 = vunpack.c.l.b16 %v2486
    %v2646 = vunpack.c.l.b16 %v2500
    %v2647 = vunpack.c.l.b16 %v2514
    %v2648 = vunpack.c.l.b16 %v2528
    %v2649 = vunpack.c.l.b16 %v2542
    %v2650 = vunpack.c.l.b16 %v2556
    %v2651 = vunpack.c.l.b16 %v2570
    %v2652 = vunpack.c.l.b16 %v2584
    %v2653 = vunpack.c.l.b16 %v2598
    %v2654 = vunpack.c.l.b16 %v2612
    %v2655 = vunpack.c.l.b16 %v2626
    %v2656 = vunpack.c.l.b16 %v2640
    %v2657 = vpack.c.b16 %v2642, %v2641
    %v2658 = vpack.c.b16 %v2644, %v2643
    %v2659 = vpack.c.b16 %v2646, %v2645
    %v2660 = vpack.c.b16 %v2648, %v2647
    %v2661 = vpack.c.b16 %v2650, %v2649
    %v2662 = vpack.c.b16 %v2652, %v2651
    %v2663 = vpack.c.b16 %v2654, %v2653
    %v2664 = vpack.c.b16 %v2656, %v2655
    %v2666 = vsel %vm1670, %v2657, 0
    %v2669 = vsel %vm1670, %v2658, 0
    %v2672 = vsel %vm1670, %v2659, 0
    %v2675 = vsel %vm1670, %v2660, 0
    %v2678 = vsel %vm1670, %v2661, 0
    %v2681 = vsel %vm1670, %v2662, 0
    %v2684 = vsel %vm1670, %v2663, 0
    %v2687 = vsel %vm1670, %v2664, 0
    %v2690 = vsel %vm1695, %v1364, 0
    %2692 = vmatpush.bf16.msra.mxu0 0
    %2693 = vmatpush.bf16.msra.mxu0 0
    %2694 = vmatpush.bf16.msra.mxu0 0
    %2695 = vmatpush.bf16.msra.mxu0 0
    %2696 = vmatpush.bf16.msra.mxu0 0
    %2697 = vmatpush.bf16.msra.mxu0 0
    %2698 = vmatpush.bf16.msra.mxu0 0
    %2699 = vmatpush.bf16.msra.mxu0 %v2690
    %2700 = vmatmul.bf16.gmra.mxu0 %v2666
    %v2701 = vpop.f32.mrf.mxu0
    %v2702 = vadd.f32 0.0, %v2701
    %v2703 = vpop.f32.mrf.mxu0
    %v2704 = vadd.f32 0.0, %v2703
    %2705 = vmatmul.bf16.gmra.mxu0 %v2669
    %v2706 = vpop.f32.mrf.mxu0
    %v2707 = vadd.f32 0.0, %v2706
    %v2708 = vpop.f32.mrf.mxu0
    %v2709 = vadd.f32 0.0, %v2708
    %2710 = vmatmul.bf16.gmra.mxu0 %v2672
    %v2711 = vpop.f32.mrf.mxu0
    %v2712 = vadd.f32 0.0, %v2711
    %v2713 = vpop.f32.mrf.mxu0
    %v2714 = vadd.f32 0.0, %v2713
    %2715 = vmatmul.bf16.gmra.mxu0 %v2675
    %v2716 = vpop.f32.mrf.mxu0
    %v2717 = vadd.f32 0.0, %v2716
    %v2718 = vpop.f32.mrf.mxu0
    %v2719 = vadd.f32 0.0, %v2718
    %2720 = vmatmul.bf16.gmra.mxu0 %v2678
    %v2721 = vpop.f32.mrf.mxu0
    %v2722 = vadd.f32 0.0, %v2721
    %v2723 = vpop.f32.mrf.mxu0
    %v2724 = vadd.f32 0.0, %v2723
    %2725 = vmatmul.bf16.gmra.mxu0 %v2681
    %v2726 = vpop.f32.mrf.mxu0
    %v2727 = vadd.f32 0.0, %v2726
    %v2728 = vpop.f32.mrf.mxu0
    %v2729 = vadd.f32 0.0, %v2728
    %2730 = vmatmul.bf16.gmra.mxu0 %v2684
    %v2731 = vpop.f32.mrf.mxu0
    %v2732 = vadd.f32 0.0, %v2731
    %v2733 = vpop.f32.mrf.mxu0
    %v2734 = vadd.f32 0.0, %v2733
    %2735 = vmatmul.bf16.gmra.mxu0 %v2687
    %v2736 = vpop.f32.mrf.mxu0
    %v2737 = vadd.f32 0.0, %v2736
    %v2738 = vpop.f32.mrf.mxu0
    %v2739 = vadd.f32 0.0, %v2738
    %2740 = vdwg.mxu0
    %v2741 = vadd.f32 %v2369, %v2702
    %v2742 = vadd.f32 %v2370, %v2704
    %v2743 = vadd.f32 %v2371, %v2707
    %v2744 = vadd.f32 %v2372, %v2709
    %v2745 = vadd.f32 %v2373, %v2712
    %v2746 = vadd.f32 %v2374, %v2714
    %v2747 = vadd.f32 %v2375, %v2717
    %v2748 = vadd.f32 %v2376, %v2719
    %v2749 = vadd.f32 %v2377, %v2722
    %v2750 = vadd.f32 %v2378, %v2724
    %v2751 = vadd.f32 %v2379, %v2727
    %v2752 = vadd.f32 %v2380, %v2729
    %v2753 = vadd.f32 %v2381, %v2732
    %v2754 = vadd.f32 %v2382, %v2734
    %v2755 = vadd.f32 %v2383, %v2737
    %v2756 = vadd.f32 %v2384, %v2739
    %v2757 = vld [vmem:[%s2236] sm:$0xf]
    %v2758 = vld [vmem:[%s2236 + $0x4] sm:$0x1]
    %v2759 = vld [vmem:[%s2236 + $0x8] sm:$0xf]
    %v2760 = vld [vmem:[%s2236 + $0xc] sm:$0x1]
    %v2761 = vld [vmem:[%s2236 + $0x10] sm:$0xf]
    %v2762 = vld [vmem:[%s2236 + $0x14] sm:$0x1]
    %v2763 = vld [vmem:[%s2236 + $0x18] sm:$0xf]
    %v2764 = vld [vmem:[%s2236 + $0x1c] sm:$0x1]
    %v2765 = vld [vmem:[%s2236 + $0x20] sm:$0xf]
    %v2766 = vld [vmem:[%s2236 + $0x24] sm:$0x1]
    %v2767 = vld [vmem:[%s2236 + $0x28] sm:$0xf]
    %v2768 = vld [vmem:[%s2236 + $0x2c] sm:$0x1]
    %v2769 = vld [vmem:[%s2236 + $0x30] sm:$0xf]
    %v2770 = vld [vmem:[%s2236 + $0x34] sm:$0x1]
    %v2771 = vld [vmem:[%s2236 + $0x38] sm:$0xf]
    %v2772 = vld [vmem:[%s2236 + $0x3c] sm:$0x1]
    %v2773 = vld [vmem:[%s2236 + $0x120] sm:$0xf]
    %v2774 = vld [vmem:[%s2236 + $0x124] sm:$0x1]
    %v2775 = vld [vmem:[%s2236 + $0x128] sm:$0xf]
    %v2776 = vld [vmem:[%s2236 + $0x12c] sm:$0x1]
    %v2777 = vld [vmem:[%s2236 + $0x130] sm:$0xf]
    %v2778 = vld [vmem:[%s2236 + $0x134] sm:$0x1]
    %v2779 = vld [vmem:[%s2236 + $0x138] sm:$0xf]
    %v2780 = vld [vmem:[%s2236 + $0x13c] sm:$0x1]
    %v2781 = vld [vmem:[%s2236 + $0x140] sm:$0xf]
    %v2782 = vld [vmem:[%s2236 + $0x144] sm:$0x1]
    %v2783 = vld [vmem:[%s2236 + $0x148] sm:$0xf]
    %v2784 = vld [vmem:[%s2236 + $0x14c] sm:$0x1]
    %v2785 = vld [vmem:[%s2236 + $0x150] sm:$0xf]
    %v2786 = vld [vmem:[%s2236 + $0x154] sm:$0x1]
    %v2787 = vld [vmem:[%s2236 + $0x158] sm:$0xf]
    %v2788 = vld [vmem:[%s2236 + $0x15c] sm:$0x1]
    %v2790 = vshrl.u32 %v2757, 16
    %v2792 = vrot.slane %v2790, 4
    %v2793 = vshll.u32 %v2757, 16
    %v2795 = vrot.slane %v2793, 5
    %v2796 = vor.u32 %v2792, %v2795
    %v2797 = vrot.slane %v2796, 4
    %v2799 = vshll.u32 %v2758, 16
    %v2801 = vrot.slane %v2799, 5
    %v2802 = vsel %vm1421, %v2797, %v2801
    %v2804 = vshrl.u32 %v2759, 16
    %v2806 = vrot.slane %v2804, 4
    %v2807 = vshll.u32 %v2759, 16
    %v2809 = vrot.slane %v2807, 5
    %v2810 = vor.u32 %v2806, %v2809
    %v2811 = vrot.slane %v2810, 4
    %v2813 = vshll.u32 %v2760, 16
    %v2815 = vrot.slane %v2813, 5
    %v2816 = vsel %vm1421, %v2811, %v2815
    %v2818 = vshrl.u32 %v2761, 16
    %v2820 = vrot.slane %v2818, 4
    %v2821 = vshll.u32 %v2761, 16
    %v2823 = vrot.slane %v2821, 5
    %v2824 = vor.u32 %v2820, %v2823
    %v2825 = vrot.slane %v2824, 4
    %v2827 = vshll.u32 %v2762, 16
    %v2829 = vrot.slane %v2827, 5
    %v2830 = vsel %vm1421, %v2825, %v2829
    %v2832 = vshrl.u32 %v2763, 16
    %v2834 = vrot.slane %v2832, 4
    %v2835 = vshll.u32 %v2763, 16
    %v2837 = vrot.slane %v2835, 5
    %v2838 = vor.u32 %v2834, %v2837
    %v2839 = vrot.slane %v2838, 4
    %v2841 = vshll.u32 %v2764, 16
    %v2843 = vrot.slane %v2841, 5
    %v2844 = vsel %vm1421, %v2839, %v2843
    %v2846 = vshrl.u32 %v2765, 16
    %v2848 = vrot.slane %v2846, 4
    %v2849 = vshll.u32 %v2765, 16
    %v2851 = vrot.slane %v2849, 5
    %v2852 = vor.u32 %v2848, %v2851
    %v2853 = vrot.slane %v2852, 4
    %v2855 = vshll.u32 %v2766, 16
    %v2857 = vrot.slane %v2855, 5
    %v2858 = vsel %vm1421, %v2853, %v2857
    %v2860 = vshrl.u32 %v2767, 16
    %v2862 = vrot.slane %v2860, 4
    %v2863 = vshll.u32 %v2767, 16
    %v2865 = vrot.slane %v2863, 5
    %v2866 = vor.u32 %v2862, %v2865
    %v2867 = vrot.slane %v2866, 4
    %v2869 = vshll.u32 %v2768, 16
    %v2871 = vrot.slane %v2869, 5
    %v2872 = vsel %vm1421, %v2867, %v2871
    %v2874 = vshrl.u32 %v2769, 16
    %v2876 = vrot.slane %v2874, 4
    %v2877 = vshll.u32 %v2769, 16
    %v2879 = vrot.slane %v2877, 5
    %v2880 = vor.u32 %v2876, %v2879
    %v2881 = vrot.slane %v2880, 4
    %v2883 = vshll.u32 %v2770, 16
    %v2885 = vrot.slane %v2883, 5
    %v2886 = vsel %vm1421, %v2881, %v2885
    %v2888 = vshrl.u32 %v2771, 16
    %v2890 = vrot.slane %v2888, 4
    %v2891 = vshll.u32 %v2771, 16
    %v2893 = vrot.slane %v2891, 5
    %v2894 = vor.u32 %v2890, %v2893
    %v2895 = vrot.slane %v2894, 4
    %v2897 = vshll.u32 %v2772, 16
    %v2899 = vrot.slane %v2897, 5
    %v2900 = vsel %vm1421, %v2895, %v2899
    %v2902 = vshrl.u32 %v2773, 16
    %v2904 = vrot.slane %v2902, 4
    %v2905 = vshll.u32 %v2773, 16
    %v2907 = vrot.slane %v2905, 5
    %v2908 = vor.u32 %v2904, %v2907
    %v2909 = vrot.slane %v2908, 4
    %v2911 = vshll.u32 %v2774, 16
    %v2913 = vrot.slane %v2911, 5
    %v2914 = vsel %vm1421, %v2909, %v2913
    %v2916 = vshrl.u32 %v2775, 16
    %v2918 = vrot.slane %v2916, 4
    %v2919 = vshll.u32 %v2775, 16
    %v2921 = vrot.slane %v2919, 5
    %v2922 = vor.u32 %v2918, %v2921
    %v2923 = vrot.slane %v2922, 4
    %v2925 = vshll.u32 %v2776, 16
    %v2927 = vrot.slane %v2925, 5
    %v2928 = vsel %vm1421, %v2923, %v2927
    %v2930 = vshrl.u32 %v2777, 16
    %v2932 = vrot.slane %v2930, 4
    %v2933 = vshll.u32 %v2777, 16
    %v2935 = vrot.slane %v2933, 5
    %v2936 = vor.u32 %v2932, %v2935
    %v2937 = vrot.slane %v2936, 4
    %v2939 = vshll.u32 %v2778, 16
    %v2941 = vrot.slane %v2939, 5
    %v2942 = vsel %vm1421, %v2937, %v2941
    %v2944 = vshrl.u32 %v2779, 16
    %v2946 = vrot.slane %v2944, 4
    %v2947 = vshll.u32 %v2779, 16
    %v2949 = vrot.slane %v2947, 5
    %v2950 = vor.u32 %v2946, %v2949
    %v2951 = vrot.slane %v2950, 4
    %v2953 = vshll.u32 %v2780, 16
    %v2955 = vrot.slane %v2953, 5
    %v2956 = vsel %vm1421, %v2951, %v2955
    %v2958 = vshrl.u32 %v2781, 16
    %v2960 = vrot.slane %v2958, 4
    %v2961 = vshll.u32 %v2781, 16
    %v2963 = vrot.slane %v2961, 5
    %v2964 = vor.u32 %v2960, %v2963
    %v2965 = vrot.slane %v2964, 4
    %v2967 = vshll.u32 %v2782, 16
    %v2969 = vrot.slane %v2967, 5
    %v2970 = vsel %vm1421, %v2965, %v2969
    %v2972 = vshrl.u32 %v2783, 16
    %v2974 = vrot.slane %v2972, 4
    %v2975 = vshll.u32 %v2783, 16
    %v2977 = vrot.slane %v2975, 5
    %v2978 = vor.u32 %v2974, %v2977
    %v2979 = vrot.slane %v2978, 4
    %v2981 = vshll.u32 %v2784, 16
    %v2983 = vrot.slane %v2981, 5
    %v2984 = vsel %vm1421, %v2979, %v2983
    %v2986 = vshrl.u32 %v2785, 16
    %v2988 = vrot.slane %v2986, 4
    %v2989 = vshll.u32 %v2785, 16
    %v2991 = vrot.slane %v2989, 5
    %v2992 = vor.u32 %v2988, %v2991
    %v2993 = vrot.slane %v2992, 4
    %v2995 = vshll.u32 %v2786, 16
    %v2997 = vrot.slane %v2995, 5
    %v2998 = vsel %vm1421, %v2993, %v2997
    %v3000 = vshrl.u32 %v2787, 16
    %v3002 = vrot.slane %v3000, 4
    %v3003 = vshll.u32 %v2787, 16
    %v3005 = vrot.slane %v3003, 5
    %v3006 = vor.u32 %v3002, %v3005
    %v3007 = vrot.slane %v3006, 4
    %v3009 = vshll.u32 %v2788, 16
    %v3011 = vrot.slane %v3009, 5
    %v3012 = vsel %vm1421, %v3007, %v3011
    %v3013 = vunpack.c.l.b16 %v2802
    %v3014 = vunpack.c.l.b16 %v2816
    %v3015 = vunpack.c.l.b16 %v2830
    %v3016 = vunpack.c.l.b16 %v2844
    %v3017 = vunpack.c.l.b16 %v2858
    %v3018 = vunpack.c.l.b16 %v2872
    %v3019 = vunpack.c.l.b16 %v2886
    %v3020 = vunpack.c.l.b16 %v2900
    %v3021 = vunpack.c.l.b16 %v2914
    %v3022 = vunpack.c.l.b16 %v2928
    %v3023 = vunpack.c.l.b16 %v2942
    %v3024 = vunpack.c.l.b16 %v2956
    %v3025 = vunpack.c.l.b16 %v2970
    %v3026 = vunpack.c.l.b16 %v2984
    %v3027 = vunpack.c.l.b16 %v2998
    %v3028 = vunpack.c.l.b16 %v3012
    %v3029 = vpack.c.b16 %v3014, %v3013
    %v3030 = vpack.c.b16 %v3016, %v3015
    %v3031 = vpack.c.b16 %v3018, %v3017
    %v3032 = vpack.c.b16 %v3020, %v3019
    %v3033 = vpack.c.b16 %v3022, %v3021
    %v3034 = vpack.c.b16 %v3024, %v3023
    %v3035 = vpack.c.b16 %v3026, %v3025
    %v3036 = vpack.c.b16 %v3028, %v3027
    %v3038 = vsel %vm1670, %v3029, 0
    %v3041 = vsel %vm1670, %v3030, 0
    %v3044 = vsel %vm1670, %v3031, 0
    %v3047 = vsel %vm1670, %v3032, 0
    %v3050 = vsel %vm1670, %v3033, 0
    %v3053 = vsel %vm1670, %v3034, 0
    %v3056 = vsel %vm1670, %v3035, 0
    %v3059 = vsel %vm1670, %v3036, 0
    %v3062 = vsel %vm1695, %v1365, 0
    %3064 = vmatpush.bf16.msra.mxu0 0
    %3065 = vmatpush.bf16.msra.mxu0 0
    %3066 = vmatpush.bf16.msra.mxu0 0
    %3067 = vmatpush.bf16.msra.mxu0 0
    %3068 = vmatpush.bf16.msra.mxu0 0
    %3069 = vmatpush.bf16.msra.mxu0 0
    %3070 = vmatpush.bf16.msra.mxu0 0
    %3071 = vmatpush.bf16.msra.mxu0 %v3062
    %3072 = vmatmul.bf16.gmra.mxu0 %v3038
    %v3073 = vpop.f32.mrf.mxu0
    %v3074 = vadd.f32 0.0, %v3073
    %v3075 = vpop.f32.mrf.mxu0
    %v3076 = vadd.f32 0.0, %v3075
    %3077 = vmatmul.bf16.gmra.mxu0 %v3041
    %v3078 = vpop.f32.mrf.mxu0
    %v3079 = vadd.f32 0.0, %v3078
    %v3080 = vpop.f32.mrf.mxu0
    %v3081 = vadd.f32 0.0, %v3080
    %3082 = vmatmul.bf16.gmra.mxu0 %v3044
    %v3083 = vpop.f32.mrf.mxu0
    %v3084 = vadd.f32 0.0, %v3083
    %v3085 = vpop.f32.mrf.mxu0
    %v3086 = vadd.f32 0.0, %v3085
    %3087 = vmatmul.bf16.gmra.mxu0 %v3047
    %v3088 = vpop.f32.mrf.mxu0
    %v3089 = vadd.f32 0.0, %v3088
    %v3090 = vpop.f32.mrf.mxu0
    %v3091 = vadd.f32 0.0, %v3090
    %3092 = vmatmul.bf16.gmra.mxu0 %v3050
    %v3093 = vpop.f32.mrf.mxu0
    %v3094 = vadd.f32 0.0, %v3093
    %v3095 = vpop.f32.mrf.mxu0
    %v3096 = vadd.f32 0.0, %v3095
    %3097 = vmatmul.bf16.gmra.mxu0 %v3053
    %v3098 = vpop.f32.mrf.mxu0
    %v3099 = vadd.f32 0.0, %v3098
    %v3100 = vpop.f32.mrf.mxu0
    %v3101 = vadd.f32 0.0, %v3100
    %3102 = vmatmul.bf16.gmra.mxu0 %v3056
    %v3103 = vpop.f32.mrf.mxu0
    %v3104 = vadd.f32 0.0, %v3103
    %v3105 = vpop.f32.mrf.mxu0
    %v3106 = vadd.f32 0.0, %v3105
    %3107 = vmatmul.bf16.gmra.mxu0 %v3059
    %v3108 = vpop.f32.mrf.mxu0
    %v3109 = vadd.f32 0.0, %v3108
    %v3110 = vpop.f32.mrf.mxu0
    %v3111 = vadd.f32 0.0, %v3110
    %3112 = vdwg.mxu0
    %v3113 = vadd.f32 %v2741, %v3074
    %v3114 = vadd.f32 %v2742, %v3076
    %v3115 = vadd.f32 %v2743, %v3079
    %v3116 = vadd.f32 %v2744, %v3081
    %v3117 = vadd.f32 %v2745, %v3084
    %v3118 = vadd.f32 %v2746, %v3086
    %v3119 = vadd.f32 %v2747, %v3089
    %v3120 = vadd.f32 %v2748, %v3091
    %v3121 = vadd.f32 %v2749, %v3094
    %v3122 = vadd.f32 %v2750, %v3096
    %v3123 = vadd.f32 %v2751, %v3099
    %v3124 = vadd.f32 %v2752, %v3101
    %v3125 = vadd.f32 %v2753, %v3104
    %v3126 = vadd.f32 %v2754, %v3106
    %v3127 = vadd.f32 %v2755, %v3109
    %v3128 = vadd.f32 %v2756, %v3111
    %s3129 = scalar_lea.vmem [#allocation2], 224
    %v3130 = vld [vmem:[%s3129] sm:$0xf]
    %v3131 = vld [vmem:[%s3129 + $0x8] sm:$0xf]
    %v3132 = vld [vmem:[%s3129 + $0x10] sm:$0xf]
    %v3133 = vld [vmem:[%s3129 + $0x18] sm:$0xf]
    %v3134 = vld [vmem:[%s3129 + $0x20] sm:$0xf]
    %v3135 = vld [vmem:[%s3129 + $0x28] sm:$0xf]
    %v3136 = vld [vmem:[%s3129 + $0x30] sm:$0xf]
    %v3137 = vld [vmem:[%s3129 + $0x38] sm:$0xf]
    %v3138 = vld [vmem:[%s3129 + $0x120] sm:$0xf]
    %v3139 = vld [vmem:[%s3129 + $0x128] sm:$0xf]
    %v3140 = vld [vmem:[%s3129 + $0x130] sm:$0xf]
    %v3141 = vld [vmem:[%s3129 + $0x138] sm:$0xf]
    %v3142 = vld [vmem:[%s3129 + $0x140] sm:$0xf]
    %v3143 = vld [vmem:[%s3129 + $0x148] sm:$0xf]
    %v3144 = vld [vmem:[%s3129 + $0x150] sm:$0xf]
    %v3145 = vld [vmem:[%s3129 + $0x158] sm:$0xf]
    %v3162 = vunpack.c.l.b16 %v3130
    %v3163 = vunpack.c.l.b16 %v3131
    %v3164 = vunpack.c.l.b16 %v3132
    %v3165 = vunpack.c.l.b16 %v3133
    %v3166 = vunpack.c.l.b16 %v3134
    %v3167 = vunpack.c.l.b16 %v3135
    %v3168 = vunpack.c.l.b16 %v3136
    %v3169 = vunpack.c.l.b16 %v3137
    %v3170 = vunpack.c.l.b16 %v3138
    %v3171 = vunpack.c.l.b16 %v3139
    %v3172 = vunpack.c.l.b16 %v3140
    %v3173 = vunpack.c.l.b16 %v3141
    %v3174 = vunpack.c.l.b16 %v3142
    %v3175 = vunpack.c.l.b16 %v3143
    %v3176 = vunpack.c.l.b16 %v3144
    %v3177 = vunpack.c.l.b16 %v3145
    %v3178 = vpack.c.b16 %v3163, %v3162
    %v3179 = vpack.c.b16 %v3165, %v3164
    %v3180 = vpack.c.b16 %v3167, %v3166
    %v3181 = vpack.c.b16 %v3169, %v3168
    %v3182 = vpack.c.b16 %v3171, %v3170
    %v3183 = vpack.c.b16 %v3173, %v3172
    %v3184 = vpack.c.b16 %v3175, %v3174
    %v3185 = vpack.c.b16 %v3177, %v3176
    %v3187 = vsel %vm1670, %v3178, 0
    %v3190 = vsel %vm1670, %v3179, 0
    %v3193 = vsel %vm1670, %v3180, 0
    %v3196 = vsel %vm1670, %v3181, 0
    %v3199 = vsel %vm1670, %v3182, 0
    %v3202 = vsel %vm1670, %v3183, 0
    %v3205 = vsel %vm1670, %v3184, 0
    %v3208 = vsel %vm1670, %v3185, 0
    %v3211 = vsel %vm1695, %v1366, 0
    %3213 = vmatpush.bf16.msra.mxu0 0
    %3214 = vmatpush.bf16.msra.mxu0 0
    %3215 = vmatpush.bf16.msra.mxu0 0
    %3216 = vmatpush.bf16.msra.mxu0 0
    %3217 = vmatpush.bf16.msra.mxu0 0
    %3218 = vmatpush.bf16.msra.mxu0 0
    %3219 = vmatpush.bf16.msra.mxu0 0
    %3220 = vmatpush.bf16.msra.mxu0 %v3211
    %3221 = vmatmul.bf16.gmra.mxu0 %v3187
    %v3222 = vpop.f32.mrf.mxu0
    %v3223 = vadd.f32 0.0, %v3222
    %v3224 = vpop.f32.mrf.mxu0
    %v3225 = vadd.f32 0.0, %v3224
    %3226 = vmatmul.bf16.gmra.mxu0 %v3190
    %v3227 = vpop.f32.mrf.mxu0
    %v3228 = vadd.f32 0.0, %v3227
    %v3229 = vpop.f32.mrf.mxu0
    %v3230 = vadd.f32 0.0, %v3229
    %3231 = vmatmul.bf16.gmra.mxu0 %v3193
    %v3232 = vpop.f32.mrf.mxu0
    %v3233 = vadd.f32 0.0, %v3232
    %v3234 = vpop.f32.mrf.mxu0
    %v3235 = vadd.f32 0.0, %v3234
    %3236 = vmatmul.bf16.gmra.mxu0 %v3196
    %v3237 = vpop.f32.mrf.mxu0
    %v3238 = vadd.f32 0.0, %v3237
    %v3239 = vpop.f32.mrf.mxu0
    %v3240 = vadd.f32 0.0, %v3239
    %3241 = vmatmul.bf16.gmra.mxu0 %v3199
    %v3242 = vpop.f32.mrf.mxu0
    %v3243 = vadd.f32 0.0, %v3242
    %v3244 = vpop.f32.mrf.mxu0
    %v3245 = vadd.f32 0.0, %v3244
    %3246 = vmatmul.bf16.gmra.mxu0 %v3202
    %v3247 = vpop.f32.mrf.mxu0
    %v3248 = vadd.f32 0.0, %v3247
    %v3249 = vpop.f32.mrf.mxu0
    %v3250 = vadd.f32 0.0, %v3249
    %3251 = vmatmul.bf16.gmra.mxu0 %v3205
    %v3252 = vpop.f32.mrf.mxu0
    %v3253 = vadd.f32 0.0, %v3252
    %v3254 = vpop.f32.mrf.mxu0
    %v3255 = vadd.f32 0.0, %v3254
    %3256 = vmatmul.bf16.gmra.mxu0 %v3208
    %v3257 = vpop.f32.mrf.mxu0
    %v3258 = vadd.f32 0.0, %v3257
    %v3259 = vpop.f32.mrf.mxu0
    %v3260 = vadd.f32 0.0, %v3259
    %3261 = vdwg.mxu0
    %v3262 = vadd.f32 %v3113, %v3223
    %v3263 = vadd.f32 %v3114, %v3225
    %v3264 = vadd.f32 %v3115, %v3228
    %v3265 = vadd.f32 %v3116, %v3230
    %v3266 = vadd.f32 %v3117, %v3233
    %v3267 = vadd.f32 %v3118, %v3235
    %v3268 = vadd.f32 %v3119, %v3238
    %v3269 = vadd.f32 %v3120, %v3240
    %v3270 = vadd.f32 %v3121, %v3243
    %v3271 = vadd.f32 %v3122, %v3245
    %v3272 = vadd.f32 %v3123, %v3248
    %v3273 = vadd.f32 %v3124, %v3250
    %v3274 = vadd.f32 %v3125, %v3253
    %v3275 = vadd.f32 %v3126, %v3255
    %v3276 = vadd.f32 %v3127, %v3258
    %v3277 = vadd.f32 %v3128, %v3260
    %s3278 = scalar_lea.vmem [#allocation2], 152
    %v3279 = vld [vmem:[%s3278] sm:$0xf]
    %v3280 = vld [vmem:[%s3278 + $0x4] sm:$0x1]
    %v3281 = vld [vmem:[%s3278 + $0x8] sm:$0xf]
    %v3282 = vld [vmem:[%s3278 + $0xc] sm:$0x1]
    %v3283 = vld [vmem:[%s3278 + $0x10] sm:$0xf]
    %v3284 = vld [vmem:[%s3278 + $0x14] sm:$0x1]
    %v3285 = vld [vmem:[%s3278 + $0x18] sm:$0xf]
    %v3286 = vld [vmem:[%s3278 + $0x1c] sm:$0x1]
    %v3287 = vld [vmem:[%s3278 + $0x20] sm:$0xf]
    %v3288 = vld [vmem:[%s3278 + $0x24] sm:$0x1]
    %v3289 = vld [vmem:[%s3278 + $0x28] sm:$0xf]
    %v3290 = vld [vmem:[%s3278 + $0x2c] sm:$0x1]
    %v3291 = vld [vmem:[%s3278 + $0x30] sm:$0xf]
    %v3292 = vld [vmem:[%s3278 + $0x34] sm:$0x1]
    %v3293 = vld [vmem:[%s3278 + $0x38] sm:$0xf]
    %v3294 = vld [vmem:[%s3278 + $0x3c] sm:$0x1]
    %v3295 = vld [vmem:[%s3278 + $0x120] sm:$0xf]
    %v3296 = vld [vmem:[%s3278 + $0x124] sm:$0x1]
    %v3297 = vld [vmem:[%s3278 + $0x128] sm:$0xf]
    %v3298 = vld [vmem:[%s3278 + $0x12c] sm:$0x1]
    %v3299 = vld [vmem:[%s3278 + $0x130] sm:$0xf]
    %v3300 = vld [vmem:[%s3278 + $0x134] sm:$0x1]
    %v3301 = vld [vmem:[%s3278 + $0x138] sm:$0xf]
    %v3302 = vld [vmem:[%s3278 + $0x13c] sm:$0x1]
    %v3303 = vld [vmem:[%s3278 + $0x140] sm:$0xf]
    %v3304 = vld [vmem:[%s3278 + $0x144] sm:$0x1]
    %v3305 = vld [vmem:[%s3278 + $0x148] sm:$0xf]
    %v3306 = vld [vmem:[%s3278 + $0x14c] sm:$0x1]
    %v3307 = vld [vmem:[%s3278 + $0x150] sm:$0xf]
    %v3308 = vld [vmem:[%s3278 + $0x154] sm:$0x1]
    %v3309 = vld [vmem:[%s3278 + $0x158] sm:$0xf]
    %v3310 = vld [vmem:[%s3278 + $0x15c] sm:$0x1]
    %v3312 = vshrl.u32 %v3279, 16
    %v3314 = vrot.slane %v3312, 4
    %v3315 = vshll.u32 %v3279, 16
    %v3317 = vrot.slane %v3315, 5
    %v3318 = vor.u32 %v3314, %v3317
    %v3319 = vrot.slane %v3318, 4
    %v3321 = vshll.u32 %v3280, 16
    %v3323 = vrot.slane %v3321, 5
    %v3324 = vsel %vm1421, %v3319, %v3323
    %v3326 = vshrl.u32 %v3281, 16
    %v3328 = vrot.slane %v3326, 4
    %v3329 = vshll.u32 %v3281, 16
    %v3331 = vrot.slane %v3329, 5
    %v3332 = vor.u32 %v3328, %v3331
    %v3333 = vrot.slane %v3332, 4
    %v3335 = vshll.u32 %v3282, 16
    %v3337 = vrot.slane %v3335, 5
    %v3338 = vsel %vm1421, %v3333, %v3337
    %v3340 = vshrl.u32 %v3283, 16
    %v3342 = vrot.slane %v3340, 4
    %v3343 = vshll.u32 %v3283, 16
    %v3345 = vrot.slane %v3343, 5
    %v3346 = vor.u32 %v3342, %v3345
    %v3347 = vrot.slane %v3346, 4
    %v3349 = vshll.u32 %v3284, 16
    %v3351 = vrot.slane %v3349, 5
    %v3352 = vsel %vm1421, %v3347, %v3351
    %v3354 = vshrl.u32 %v3285, 16
    %v3356 = vrot.slane %v3354, 4
    %v3357 = vshll.u32 %v3285, 16
    %v3359 = vrot.slane %v3357, 5
    %v3360 = vor.u32 %v3356, %v3359
    %v3361 = vrot.slane %v3360, 4
    %v3363 = vshll.u32 %v3286, 16
    %v3365 = vrot.slane %v3363, 5
    %v3366 = vsel %vm1421, %v3361, %v3365
    %v3368 = vshrl.u32 %v3287, 16
    %v3370 = vrot.slane %v3368, 4
    %v3371 = vshll.u32 %v3287, 16
    %v3373 = vrot.slane %v3371, 5
    %v3374 = vor.u32 %v3370, %v3373
    %v3375 = vrot.slane %v3374, 4
    %v3377 = vshll.u32 %v3288, 16
    %v3379 = vrot.slane %v3377, 5
    %v3380 = vsel %vm1421, %v3375, %v3379
    %v3382 = vshrl.u32 %v3289, 16
    %v3384 = vrot.slane %v3382, 4
    %v3385 = vshll.u32 %v3289, 16
    %v3387 = vrot.slane %v3385, 5
    %v3388 = vor.u32 %v3384, %v3387
    %v3389 = vrot.slane %v3388, 4
    %v3391 = vshll.u32 %v3290, 16
    %v3393 = vrot.slane %v3391, 5
    %v3394 = vsel %vm1421, %v3389, %v3393
    %v3396 = vshrl.u32 %v3291, 16
    %v3398 = vrot.slane %v3396, 4
    %v3399 = vshll.u32 %v3291, 16
    %v3401 = vrot.slane %v3399, 5
    %v3402 = vor.u32 %v3398, %v3401
    %v3403 = vrot.slane %v3402, 4
    %v3405 = vshll.u32 %v3292, 16
    %v3407 = vrot.slane %v3405, 5
    %v3408 = vsel %vm1421, %v3403, %v3407
    %v3410 = vshrl.u32 %v3293, 16
    %v3412 = vrot.slane %v3410, 4
    %v3413 = vshll.u32 %v3293, 16
    %v3415 = vrot.slane %v3413, 5
    %v3416 = vor.u32 %v3412, %v3415
    %v3417 = vrot.slane %v3416, 4
    %v3419 = vshll.u32 %v3294, 16
    %v3421 = vrot.slane %v3419, 5
    %v3422 = vsel %vm1421, %v3417, %v3421
    %v3424 = vshrl.u32 %v3295, 16
    %v3426 = vrot.slane %v3424, 4
    %v3427 = vshll.u32 %v3295, 16
    %v3429 = vrot.slane %v3427, 5
    %v3430 = vor.u32 %v3426, %v3429
    %v3431 = vrot.slane %v3430, 4
    %v3433 = vshll.u32 %v3296, 16
    %v3435 = vrot.slane %v3433, 5
    %v3436 = vsel %vm1421, %v3431, %v3435
    %v3438 = vshrl.u32 %v3297, 16
    %v3440 = vrot.slane %v3438, 4
    %v3441 = vshll.u32 %v3297, 16
    %v3443 = vrot.slane %v3441, 5
    %v3444 = vor.u32 %v3440, %v3443
    %v3445 = vrot.slane %v3444, 4
    %v3447 = vshll.u32 %v3298, 16
    %v3449 = vrot.slane %v3447, 5
    %v3450 = vsel %vm1421, %v3445, %v3449
    %v3452 = vshrl.u32 %v3299, 16
    %v3454 = vrot.slane %v3452, 4
    %v3455 = vshll.u32 %v3299, 16
    %v3457 = vrot.slane %v3455, 5
    %v3458 = vor.u32 %v3454, %v3457
    %v3459 = vrot.slane %v3458, 4
    %v3461 = vshll.u32 %v3300, 16
    %v3463 = vrot.slane %v3461, 5
    %v3464 = vsel %vm1421, %v3459, %v3463
    %v3466 = vshrl.u32 %v3301, 16
    %v3468 = vrot.slane %v3466, 4
    %v3469 = vshll.u32 %v3301, 16
    %v3471 = vrot.slane %v3469, 5
    %v3472 = vor.u32 %v3468, %v3471
    %v3473 = vrot.slane %v3472, 4
    %v3475 = vshll.u32 %v3302, 16
    %v3477 = vrot.slane %v3475, 5
    %v3478 = vsel %vm1421, %v3473, %v3477
    %v3480 = vshrl.u32 %v3303, 16
    %v3482 = vrot.slane %v3480, 4
    %v3483 = vshll.u32 %v3303, 16
    %v3485 = vrot.slane %v3483, 5
    %v3486 = vor.u32 %v3482, %v3485
    %v3487 = vrot.slane %v3486, 4
    %v3489 = vshll.u32 %v3304, 16
    %v3491 = vrot.slane %v3489, 5
    %v3492 = vsel %vm1421, %v3487, %v3491
    %v3494 = vshrl.u32 %v3305, 16
    %v3496 = vrot.slane %v3494, 4
    %v3497 = vshll.u32 %v3305, 16
    %v3499 = vrot.slane %v3497, 5
    %v3500 = vor.u32 %v3496, %v3499
    %v3501 = vrot.slane %v3500, 4
    %v3503 = vshll.u32 %v3306, 16
    %v3505 = vrot.slane %v3503, 5
    %v3506 = vsel %vm1421, %v3501, %v3505
    %v3508 = vshrl.u32 %v3307, 16
    %v3510 = vrot.slane %v3508, 4
    %v3511 = vshll.u32 %v3307, 16
    %v3513 = vrot.slane %v3511, 5
    %v3514 = vor.u32 %v3510, %v3513
    %v3515 = vrot.slane %v3514, 4
    %v3517 = vshll.u32 %v3308, 16
    %v3519 = vrot.slane %v3517, 5
    %v3520 = vsel %vm1421, %v3515, %v3519
    %v3522 = vshrl.u32 %v3309, 16
    %v3524 = vrot.slane %v3522, 4
    %v3525 = vshll.u32 %v3309, 16
    %v3527 = vrot.slane %v3525, 5
    %v3528 = vor.u32 %v3524, %v3527
    %v3529 = vrot.slane %v3528, 4
    %v3531 = vshll.u32 %v3310, 16
    %v3533 = vrot.slane %v3531, 5
    %v3534 = vsel %vm1421, %v3529, %v3533
    %v3535 = vunpack.c.l.b16 %v3324
    %v3536 = vunpack.c.l.b16 %v3338
    %v3537 = vunpack.c.l.b16 %v3352
    %v3538 = vunpack.c.l.b16 %v3366
    %v3539 = vunpack.c.l.b16 %v3380
    %v3540 = vunpack.c.l.b16 %v3394
    %v3541 = vunpack.c.l.b16 %v3408
    %v3542 = vunpack.c.l.b16 %v3422
    %v3543 = vunpack.c.l.b16 %v3436
    %v3544 = vunpack.c.l.b16 %v3450
    %v3545 = vunpack.c.l.b16 %v3464
    %v3546 = vunpack.c.l.b16 %v3478
    %v3547 = vunpack.c.l.b16 %v3492
    %v3548 = vunpack.c.l.b16 %v3506
    %v3549 = vunpack.c.l.b16 %v3520
    %v3550 = vunpack.c.l.b16 %v3534
    %v3551 = vpack.c.b16 %v3536, %v3535
    %v3552 = vpack.c.b16 %v3538, %v3537
    %v3553 = vpack.c.b16 %v3540, %v3539
    %v3554 = vpack.c.b16 %v3542, %v3541
    %v3555 = vpack.c.b16 %v3544, %v3543
    %v3556 = vpack.c.b16 %v3546, %v3545
    %v3557 = vpack.c.b16 %v3548, %v3547
    %v3558 = vpack.c.b16 %v3550, %v3549
    %v3560 = vsel %vm1670, %v3551, 0
    %v3563 = vsel %vm1670, %v3552, 0
    %v3566 = vsel %vm1670, %v3553, 0
    %v3569 = vsel %vm1670, %v3554, 0
    %v3572 = vsel %vm1670, %v3555, 0
    %v3575 = vsel %vm1670, %v3556, 0
    %v3578 = vsel %vm1670, %v3557, 0
    %v3581 = vsel %vm1670, %v3558, 0
    %v3584 = vsel %vm1695, %v1367, 0
    %3586 = vmatpush.bf16.msra.mxu0 0
    %3587 = vmatpush.bf16.msra.mxu0 0
    %3588 = vmatpush.bf16.msra.mxu0 0
    %3589 = vmatpush.bf16.msra.mxu0 0
    %3590 = vmatpush.bf16.msra.mxu0 0
    %3591 = vmatpush.bf16.msra.mxu0 0
    %3592 = vmatpush.bf16.msra.mxu0 0
    %3593 = vmatpush.bf16.msra.mxu0 %v3584
    %3594 = vmatmul.bf16.gmra.mxu0 %v3560
    %v3595 = vpop.f32.mrf.mxu0
    %v3596 = vadd.f32 0.0, %v3595
    %v3597 = vpop.f32.mrf.mxu0
    %v3598 = vadd.f32 0.0, %v3597
    %3599 = vmatmul.bf16.gmra.mxu0 %v3563
    %v3600 = vpop.f32.mrf.mxu0
    %v3601 = vadd.f32 0.0, %v3600
    %v3602 = vpop.f32.mrf.mxu0
    %v3603 = vadd.f32 0.0, %v3602
    %3604 = vmatmul.bf16.gmra.mxu0 %v3566
    %v3605 = vpop.f32.mrf.mxu0
    %v3606 = vadd.f32 0.0, %v3605
    %v3607 = vpop.f32.mrf.mxu0
    %v3608 = vadd.f32 0.0, %v3607
    %3609 = vmatmul.bf16.gmra.mxu0 %v3569
    %v3610 = vpop.f32.mrf.mxu0
    %v3611 = vadd.f32 0.0, %v3610
    %v3612 = vpop.f32.mrf.mxu0
    %v3613 = vadd.f32 0.0, %v3612
    %3614 = vmatmul.bf16.gmra.mxu0 %v3572
    %v3615 = vpop.f32.mrf.mxu0
    %v3616 = vadd.f32 0.0, %v3615
    %v3617 = vpop.f32.mrf.mxu0
    %v3618 = vadd.f32 0.0, %v3617
    %3619 = vmatmul.bf16.gmra.mxu0 %v3575
    %v3620 = vpop.f32.mrf.mxu0
    %v3621 = vadd.f32 0.0, %v3620
    %v3622 = vpop.f32.mrf.mxu0
    %v3623 = vadd.f32 0.0, %v3622
    %3624 = vmatmul.bf16.gmra.mxu0 %v3578
    %v3625 = vpop.f32.mrf.mxu0
    %v3626 = vadd.f32 0.0, %v3625
    %v3627 = vpop.f32.mrf.mxu0
    %v3628 = vadd.f32 0.0, %v3627
    %3629 = vmatmul.bf16.gmra.mxu0 %v3581
    %v3630 = vpop.f32.mrf.mxu0
    %v3631 = vadd.f32 0.0, %v3630
    %v3632 = vpop.f32.mrf.mxu0
    %v3633 = vadd.f32 0.0, %v3632
    %3634 = vdwg.mxu0
    %v3635 = vadd.f32 %v3262, %v3596
    %v3636 = vadd.f32 %v3263, %v3598
    %v3637 = vadd.f32 %v3264, %v3601
    %v3638 = vadd.f32 %v3265, %v3603
    %v3639 = vadd.f32 %v3266, %v3606
    %v3640 = vadd.f32 %v3267, %v3608
    %v3641 = vadd.f32 %v3268, %v3611
    %v3642 = vadd.f32 %v3269, %v3613
    %v3643 = vadd.f32 %v3270, %v3616
    %v3644 = vadd.f32 %v3271, %v3618
    %v3645 = vadd.f32 %v3272, %v3621
    %v3646 = vadd.f32 %v3273, %v3623
    %v3647 = vadd.f32 %v3274, %v3626
    %v3648 = vadd.f32 %v3275, %v3628
    %v3649 = vadd.f32 %v3276, %v3631
    %v3650 = vadd.f32 %v3277, %v3633
    %v3651 = vld [vmem:[%s3129] sm:$0xf]
    %v3652 = vld [vmem:[%s3129 + $0x4] sm:$0x1]
    %v3653 = vld [vmem:[%s3129 + $0x8] sm:$0xf]
    %v3654 = vld [vmem:[%s3129 + $0xc] sm:$0x1]
    %v3655 = vld [vmem:[%s3129 + $0x10] sm:$0xf]
    %v3656 = vld [vmem:[%s3129 + $0x14] sm:$0x1]
    %v3657 = vld [vmem:[%s3129 + $0x18] sm:$0xf]
    %v3658 = vld [vmem:[%s3129 + $0x1c] sm:$0x1]
    %v3659 = vld [vmem:[%s3129 + $0x20] sm:$0xf]
    %v3660 = vld [vmem:[%s3129 + $0x24] sm:$0x1]
    %v3661 = vld [vmem:[%s3129 + $0x28] sm:$0xf]
    %v3662 = vld [vmem:[%s3129 + $0x2c] sm:$0x1]
    %v3663 = vld [vmem:[%s3129 + $0x30] sm:$0xf]
    %v3664 = vld [vmem:[%s3129 + $0x34] sm:$0x1]
    %v3665 = vld [vmem:[%s3129 + $0x38] sm:$0xf]
    %v3666 = vld [vmem:[%s3129 + $0x3c] sm:$0x1]
    %v3667 = vld [vmem:[%s3129 + $0x120] sm:$0xf]
    %v3668 = vld [vmem:[%s3129 + $0x124] sm:$0x1]
    %v3669 = vld [vmem:[%s3129 + $0x128] sm:$0xf]
    %v3670 = vld [vmem:[%s3129 + $0x12c] sm:$0x1]
    %v3671 = vld [vmem:[%s3129 + $0x130] sm:$0xf]
    %v3672 = vld [vmem:[%s3129 + $0x134] sm:$0x1]
    %v3673 = vld [vmem:[%s3129 + $0x138] sm:$0xf]
    %v3674 = vld [vmem:[%s3129 + $0x13c] sm:$0x1]
    %v3675 = vld [vmem:[%s3129 + $0x140] sm:$0xf]
    %v3676 = vld [vmem:[%s3129 + $0x144] sm:$0x1]
    %v3677 = vld [vmem:[%s3129 + $0x148] sm:$0xf]
    %v3678 = vld [vmem:[%s3129 + $0x14c] sm:$0x1]
    %v3679 = vld [vmem:[%s3129 + $0x150] sm:$0xf]
    %v3680 = vld [vmem:[%s3129 + $0x154] sm:$0x1]
    %v3681 = vld [vmem:[%s3129 + $0x158] sm:$0xf]
    %v3682 = vld [vmem:[%s3129 + $0x15c] sm:$0x1]
    %v3684 = vshrl.u32 %v3651, 16
    %v3686 = vrot.slane %v3684, 4
    %v3687 = vshll.u32 %v3651, 16
    %v3689 = vrot.slane %v3687, 5
    %v3690 = vor.u32 %v3686, %v3689
    %v3691 = vrot.slane %v3690, 4
    %v3693 = vshll.u32 %v3652, 16
    %v3695 = vrot.slane %v3693, 5
    %v3696 = vsel %vm1421, %v3691, %v3695
    %v3698 = vshrl.u32 %v3653, 16
    %v3700 = vrot.slane %v3698, 4
    %v3701 = vshll.u32 %v3653, 16
    %v3703 = vrot.slane %v3701, 5
    %v3704 = vor.u32 %v3700, %v3703
    %v3705 = vrot.slane %v3704, 4
    %v3707 = vshll.u32 %v3654, 16
    %v3709 = vrot.slane %v3707, 5
    %v3710 = vsel %vm1421, %v3705, %v3709
    %v3712 = vshrl.u32 %v3655, 16
    %v3714 = vrot.slane %v3712, 4
    %v3715 = vshll.u32 %v3655, 16
    %v3717 = vrot.slane %v3715, 5
    %v3718 = vor.u32 %v3714, %v3717
    %v3719 = vrot.slane %v3718, 4
    %v3721 = vshll.u32 %v3656, 16
    %v3723 = vrot.slane %v3721, 5
    %v3724 = vsel %vm1421, %v3719, %v3723
    %v3726 = vshrl.u32 %v3657, 16
    %v3728 = vrot.slane %v3726, 4
    %v3729 = vshll.u32 %v3657, 16
    %v3731 = vrot.slane %v3729, 5
    %v3732 = vor.u32 %v3728, %v3731
    %v3733 = vrot.slane %v3732, 4
    %v3735 = vshll.u32 %v3658, 16
    %v3737 = vrot.slane %v3735, 5
    %v3738 = vsel %vm1421, %v3733, %v3737
    %v3740 = vshrl.u32 %v3659, 16
    %v3742 = vrot.slane %v3740, 4
    %v3743 = vshll.u32 %v3659, 16
    %v3745 = vrot.slane %v3743, 5
    %v3746 = vor.u32 %v3742, %v3745
    %v3747 = vrot.slane %v3746, 4
    %v3749 = vshll.u32 %v3660, 16
    %v3751 = vrot.slane %v3749, 5
    %v3752 = vsel %vm1421, %v3747, %v3751
    %v3754 = vshrl.u32 %v3661, 16
    %v3756 = vrot.slane %v3754, 4
    %v3757 = vshll.u32 %v3661, 16
    %v3759 = vrot.slane %v3757, 5
    %v3760 = vor.u32 %v3756, %v3759
    %v3761 = vrot.slane %v3760, 4
    %v3763 = vshll.u32 %v3662, 16
    %v3765 = vrot.slane %v3763, 5
    %v3766 = vsel %vm1421, %v3761, %v3765
    %v3768 = vshrl.u32 %v3663, 16
    %v3770 = vrot.slane %v3768, 4
    %v3771 = vshll.u32 %v3663, 16
    %v3773 = vrot.slane %v3771, 5
    %v3774 = vor.u32 %v3770, %v3773
    %v3775 = vrot.slane %v3774, 4
    %v3777 = vshll.u32 %v3664, 16
    %v3779 = vrot.slane %v3777, 5
    %v3780 = vsel %vm1421, %v3775, %v3779
    %v3782 = vshrl.u32 %v3665, 16
    %v3784 = vrot.slane %v3782, 4
    %v3785 = vshll.u32 %v3665, 16
    %v3787 = vrot.slane %v3785, 5
    %v3788 = vor.u32 %v3784, %v3787
    %v3789 = vrot.slane %v3788, 4
    %v3791 = vshll.u32 %v3666, 16
    %v3793 = vrot.slane %v3791, 5
    %v3794 = vsel %vm1421, %v3789, %v3793
    %v3796 = vshrl.u32 %v3667, 16
    %v3798 = vrot.slane %v3796, 4
    %v3799 = vshll.u32 %v3667, 16
    %v3801 = vrot.slane %v3799, 5
    %v3802 = vor.u32 %v3798, %v3801
    %v3803 = vrot.slane %v3802, 4
    %v3805 = vshll.u32 %v3668, 16
    %v3807 = vrot.slane %v3805, 5
    %v3808 = vsel %vm1421, %v3803, %v3807
    %v3810 = vshrl.u32 %v3669, 16
    %v3812 = vrot.slane %v3810, 4
    %v3813 = vshll.u32 %v3669, 16
    %v3815 = vrot.slane %v3813, 5
    %v3816 = vor.u32 %v3812, %v3815
    %v3817 = vrot.slane %v3816, 4
    %v3819 = vshll.u32 %v3670, 16
    %v3821 = vrot.slane %v3819, 5
    %v3822 = vsel %vm1421, %v3817, %v3821
    %v3824 = vshrl.u32 %v3671, 16
    %v3826 = vrot.slane %v3824, 4
    %v3827 = vshll.u32 %v3671, 16
    %v3829 = vrot.slane %v3827, 5
    %v3830 = vor.u32 %v3826, %v3829
    %v3831 = vrot.slane %v3830, 4
    %v3833 = vshll.u32 %v3672, 16
    %v3835 = vrot.slane %v3833, 5
    %v3836 = vsel %vm1421, %v3831, %v3835
    %v3838 = vshrl.u32 %v3673, 16
    %v3840 = vrot.slane %v3838, 4
    %v3841 = vshll.u32 %v3673, 16
    %v3843 = vrot.slane %v3841, 5
    %v3844 = vor.u32 %v3840, %v3843
    %v3845 = vrot.slane %v3844, 4
    %v3847 = vshll.u32 %v3674, 16
    %v3849 = vrot.slane %v3847, 5
    %v3850 = vsel %vm1421, %v3845, %v3849
    %v3852 = vshrl.u32 %v3675, 16
    %v3854 = vrot.slane %v3852, 4
    %v3855 = vshll.u32 %v3675, 16
    %v3857 = vrot.slane %v3855, 5
    %v3858 = vor.u32 %v3854, %v3857
    %v3859 = vrot.slane %v3858, 4
    %v3861 = vshll.u32 %v3676, 16
    %v3863 = vrot.slane %v3861, 5
    %v3864 = vsel %vm1421, %v3859, %v3863
    %v3866 = vshrl.u32 %v3677, 16
    %v3868 = vrot.slane %v3866, 4
    %v3869 = vshll.u32 %v3677, 16
    %v3871 = vrot.slane %v3869, 5
    %v3872 = vor.u32 %v3868, %v3871
    %v3873 = vrot.slane %v3872, 4
    %v3875 = vshll.u32 %v3678, 16
    %v3877 = vrot.slane %v3875, 5
    %v3878 = vsel %vm1421, %v3873, %v3877
    %v3880 = vshrl.u32 %v3679, 16
    %v3882 = vrot.slane %v3880, 4
    %v3883 = vshll.u32 %v3679, 16
    %v3885 = vrot.slane %v3883, 5
    %v3886 = vor.u32 %v3882, %v3885
    %v3887 = vrot.slane %v3886, 4
    %v3889 = vshll.u32 %v3680, 16
    %v3891 = vrot.slane %v3889, 5
    %v3892 = vsel %vm1421, %v3887, %v3891
    %v3894 = vshrl.u32 %v3681, 16
    %v3896 = vrot.slane %v3894, 4
    %v3897 = vshll.u32 %v3681, 16
    %v3899 = vrot.slane %v3897, 5
    %v3900 = vor.u32 %v3896, %v3899
    %v3901 = vrot.slane %v3900, 4
    %v3903 = vshll.u32 %v3682, 16
    %v3905 = vrot.slane %v3903, 5
    %v3906 = vsel %vm1421, %v3901, %v3905
    %v3907 = vunpack.c.l.b16 %v3696
    %v3908 = vunpack.c.l.b16 %v3710
    %v3909 = vunpack.c.l.b16 %v3724
    %v3910 = vunpack.c.l.b16 %v3738
    %v3911 = vunpack.c.l.b16 %v3752
    %v3912 = vunpack.c.l.b16 %v3766
    %v3913 = vunpack.c.l.b16 %v3780
    %v3914 = vunpack.c.l.b16 %v3794
    %v3915 = vunpack.c.l.b16 %v3808
    %v3916 = vunpack.c.l.b16 %v3822
    %v3917 = vunpack.c.l.b16 %v3836
    %v3918 = vunpack.c.l.b16 %v3850
    %v3919 = vunpack.c.l.b16 %v3864
    %v3920 = vunpack.c.l.b16 %v3878
    %v3921 = vunpack.c.l.b16 %v3892
    %v3922 = vunpack.c.l.b16 %v3906
    %v3923 = vpack.c.b16 %v3908, %v3907
    %v3924 = vpack.c.b16 %v3910, %v3909
    %v3925 = vpack.c.b16 %v3912, %v3911
    %v3926 = vpack.c.b16 %v3914, %v3913
    %v3927 = vpack.c.b16 %v3916, %v3915
    %v3928 = vpack.c.b16 %v3918, %v3917
    %v3929 = vpack.c.b16 %v3920, %v3919
    %v3930 = vpack.c.b16 %v3922, %v3921
    %v3932 = vsel %vm1670, %v3923, 0
    %v3935 = vsel %vm1670, %v3924, 0
    %v3938 = vsel %vm1670, %v3925, 0
    %v3941 = vsel %vm1670, %v3926, 0
    %v3944 = vsel %vm1670, %v3927, 0
    %v3947 = vsel %vm1670, %v3928, 0
    %v3950 = vsel %vm1670, %v3929, 0
    %v3953 = vsel %vm1670, %v3930, 0
    %v3956 = vsel %vm1695, %v1368, 0
    %3958 = vmatpush.bf16.msra.mxu0 0
    %3959 = vmatpush.bf16.msra.mxu0 0
    %3960 = vmatpush.bf16.msra.mxu0 0
    %3961 = vmatpush.bf16.msra.mxu0 0
    %3962 = vmatpush.bf16.msra.mxu0 0
    %3963 = vmatpush.bf16.msra.mxu0 0
    %3964 = vmatpush.bf16.msra.mxu0 0
    %3965 = vmatpush.bf16.msra.mxu0 %v3956
    %3966 = vmatmul.bf16.gmra.mxu0 %v3932
    %v3967 = vpop.f32.mrf.mxu0
    %v3968 = vadd.f32 0.0, %v3967
    %v3969 = vpop.f32.mrf.mxu0
    %v3970 = vadd.f32 0.0, %v3969
    %3971 = vmatmul.bf16.gmra.mxu0 %v3935
    %v3972 = vpop.f32.mrf.mxu0
    %v3973 = vadd.f32 0.0, %v3972
    %v3974 = vpop.f32.mrf.mxu0
    %v3975 = vadd.f32 0.0, %v3974
    %3976 = vmatmul.bf16.gmra.mxu0 %v3938
    %v3977 = vpop.f32.mrf.mxu0
    %v3978 = vadd.f32 0.0, %v3977
    %v3979 = vpop.f32.mrf.mxu0
    %v3980 = vadd.f32 0.0, %v3979
    %3981 = vmatmul.bf16.gmra.mxu0 %v3941
    %v3982 = vpop.f32.mrf.mxu0
    %v3983 = vadd.f32 0.0, %v3982
    %v3984 = vpop.f32.mrf.mxu0
    %v3985 = vadd.f32 0.0, %v3984
    %3986 = vmatmul.bf16.gmra.mxu0 %v3944
    %v3987 = vpop.f32.mrf.mxu0
    %v3988 = vadd.f32 0.0, %v3987
    %v3989 = vpop.f32.mrf.mxu0
    %v3990 = vadd.f32 0.0, %v3989
    %3991 = vmatmul.bf16.gmra.mxu0 %v3947
    %v3992 = vpop.f32.mrf.mxu0
    %v3993 = vadd.f32 0.0, %v3992
    %v3994 = vpop.f32.mrf.mxu0
    %v3995 = vadd.f32 0.0, %v3994
    %3996 = vmatmul.bf16.gmra.mxu0 %v3950
    %v3997 = vpop.f32.mrf.mxu0
    %v3998 = vadd.f32 0.0, %v3997
    %v3999 = vpop.f32.mrf.mxu0
    %v4000 = vadd.f32 0.0, %v3999
    %4001 = vmatmul.bf16.gmra.mxu0 %v3953
    %v4002 = vpop.f32.mrf.mxu0
    %v4003 = vadd.f32 0.0, %v4002
    %v4004 = vpop.f32.mrf.mxu0
    %v4005 = vadd.f32 0.0, %v4004
    %4006 = vdwg.mxu0
    %v4007 = vadd.f32 %v3635, %v3968
    %v4008 = vadd.f32 %v3636, %v3970
    %v4009 = vadd.f32 %v3637, %v3973
    %v4010 = vadd.f32 %v3638, %v3975
    %v4011 = vadd.f32 %v3639, %v3978
    %v4012 = vadd.f32 %v3640, %v3980
    %v4013 = vadd.f32 %v3641, %v3983
    %v4014 = vadd.f32 %v3642, %v3985
    %v4015 = vadd.f32 %v3643, %v3988
    %v4016 = vadd.f32 %v3644, %v3990
    %v4017 = vadd.f32 %v3645, %v3993
    %v4018 = vadd.f32 %v3646, %v3995
    %v4019 = vadd.f32 %v3647, %v3998
    %v4020 = vadd.f32 %v3648, %v4000
    %v4021 = vadd.f32 %v3649, %v4003
    %v4022 = vadd.f32 %v3650, %v4005
    %v4023 = vld [vmem:[%s2] sm:$0x1]
    %v4025 = vperm.slane %v4023, 0
    %v4027 = vadd.f32 %v4007, %v4025
    %v4028 = vadd.f32 %v4008, %v4025
    %v4029 = vadd.f32 %v4009, %v4025
    %v4030 = vadd.f32 %v4010, %v4025
    %v4031 = vadd.f32 %v4011, %v4025
    %v4032 = vadd.f32 %v4012, %v4025
    %v4033 = vadd.f32 %v4013, %v4025
    %v4034 = vadd.f32 %v4014, %v4025
    %v4035 = vadd.f32 %v4015, %v4025
    %v4036 = vadd.f32 %v4016, %v4025
    %v4037 = vadd.f32 %v4017, %v4025
    %v4038 = vadd.f32 %v4018, %v4025
    %v4039 = vadd.f32 %v4019, %v4025
    %v4040 = vadd.f32 %v4020, %v4025
    %v4041 = vadd.f32 %v4021, %v4025
    %v4042 = vadd.f32 %v4022, %v4025
    %v4043 = vmax.f32 %v4027, 0.0
    %v4044 = vmax.f32 %v4028, 0.0
    %v4045 = vmax.f32 %v4029, 0.0
    %v4046 = vmax.f32 %v4030, 0.0
    %v4047 = vmax.f32 %v4031, 0.0
    %v4048 = vmax.f32 %v4032, 0.0
    %v4049 = vmax.f32 %v4033, 0.0
    %v4050 = vmax.f32 %v4034, 0.0
    %v4051 = vmax.f32 %v4035, 0.0
    %v4052 = vmax.f32 %v4036, 0.0
    %v4053 = vmax.f32 %v4037, 0.0
    %v4054 = vmax.f32 %v4038, 0.0
    %v4055 = vmax.f32 %v4039, 0.0
    %v4056 = vmax.f32 %v4040, 0.0
    %v4057 = vmax.f32 %v4041, 0.0
    %v4058 = vmax.f32 %v4042, 0.0
    %v4059 = vpack.c.bf16 %v4043, %v4043
    %v4060 = vpack.c.bf16 %v4044, %v4044
    %v4061 = vpack.c.bf16 %v4045, %v4045
    %v4062 = vpack.c.bf16 %v4046, %v4046
    %v4063 = vpack.c.bf16 %v4047, %v4047
    %v4064 = vpack.c.bf16 %v4048, %v4048
    %v4065 = vpack.c.bf16 %v4049, %v4049
    %v4066 = vpack.c.bf16 %v4050, %v4050
    %v4067 = vpack.c.bf16 %v4051, %v4051
    %v4068 = vpack.c.bf16 %v4052, %v4052
    %v4069 = vpack.c.bf16 %v4053, %v4053
    %v4070 = vpack.c.bf16 %v4054, %v4054
    %v4071 = vpack.c.bf16 %v4055, %v4055
    %v4072 = vpack.c.bf16 %v4056, %v4056
    %v4073 = vpack.c.bf16 %v4057, %v4057
    %v4074 = vpack.c.bf16 %v4058, %v4058
    %vm4075 = vcmask 60416
    %4076 = vst.msk [vmem:[#allocation3] sm:$0xf] %vm4075, %v4059
    %4077 = vst.msk [vmem:[#allocation3 + $0x4] sm:$0xf] %vm4075, %v4060
    %4078 = vst.msk [vmem:[#allocation3 + $0x8] sm:$0xf] %vm4075, %v4061
    %4079 = vst.msk [vmem:[#allocation3 + $0xc] sm:$0xf] %vm4075, %v4062
    %4080 = vst.msk [vmem:[#allocation3 + $0x10] sm:$0xf] %vm4075, %v4063
    %4081 = vst.msk [vmem:[#allocation3 + $0x14] sm:$0xf] %vm4075, %v4064
    %4082 = vst.msk [vmem:[#allocation3 + $0x18] sm:$0xf] %vm4075, %v4065
    %4083 = vst.msk [vmem:[#allocation3 + $0x1c] sm:$0xf] %vm4075, %v4066
    %4084 = vst.msk [vmem:[#allocation3 + $0x20] sm:$0xf] %vm4075, %v4067
    %4085 = vst.msk [vmem:[#allocation3 + $0x24] sm:$0xf] %vm4075, %v4068
    %4086 = vst.msk [vmem:[#allocation3 + $0x28] sm:$0xf] %vm4075, %v4069
    %4087 = vst.msk [vmem:[#allocation3 + $0x2c] sm:$0xf] %vm4075, %v4070
    %4088 = vst.msk [vmem:[#allocation3 + $0x30] sm:$0xf] %vm4075, %v4071
    %4089 = vst.msk [vmem:[#allocation3 + $0x34] sm:$0xf] %vm4075, %v4072
    %4090 = vst.msk [vmem:[#allocation3 + $0x38] sm:$0xf] %vm4075, %v4073
    %4091 = vst.msk [vmem:[#allocation3 + $0x3c] sm:$0xf] %vm4075, %v4074
    // Predicated region
    $region14: #{tpu_custom_call.1} parent=1 // pred_check
      _
    $region15: #{tpu_custom_call.1} parent=1 // pred_check_branch
      %4093 = sbr.rel (0) target = $region17
    $region16: #{tpu_custom_call.1} parent=1 // pred_region
      %4095 = vsyncadd [#allocation4], 0
      %s4096 = sshll.u32 [#allocation3], 4
      %s4097 = int_to_ptr.vmem [resolvable:$true] %s4096
      %s4098 = sshll.u32 %s3, 4
      %s4099 = int_to_ptr.hbm [resolvable:$true] %s4098
      %4104 = dma.vmem_to_hbm [thread:$0]  %s4097, 1024, %s4099, [#allocation4], 64, 64, 4
    $region17: #{tpu_custom_call.1} parent=1 // pred_fallthru
      _
    // Predicated region
    $region18: #{tpu_custom_call.1} parent=1 // pred_check
      _
    $region19: #{tpu_custom_call.1} parent=1 // pred_check_branch
      %4106 = sbr.rel (0) target = $region21
    $region20: #{tpu_custom_call.1} parent=1 // pred_region
      %4108 = dma.done [#allocation4], 1024
    $region21: #{tpu_custom_call.1} parent=1 // pred_fallthru
      _
    %4109 = vsyncpa [#allocation4], 1

</llo_original>
